<compile_context>
chip_gen: v7x
topology: tpu7x:2x2x1
jax: 0.10.0
libtpu: 0.0.40
codegen_flags: <defaults>
</compile_context>

<pallas_src>
import jax
import jax.numpy as jnp
from jax.experimental import pallas as pl
from jax.experimental.pallas import tpu as pltpu

NUM_JOINTS = 17
D_IN = NUM_JOINTS * 3      # 51
D_HID = 1024
D_OUT = NUM_JOINTS * 2     # 34


def _mlp_kernel(x_ref, w1_ref, b1_ref, w2_ref, b2_ref, w3_ref, b3_ref, o_ref):
    # x_ref:  (tm, 51)     f32
    # w1_ref: (51, 1024)   bf16   b1_ref: (1, 1024) f32
    # w2_ref: (1024, 1024) bf16   b2_ref: (1, 1024) f32
    # w3_ref: (1024, 34)   bf16   b3_ref: (1, 34)   f32
    # o_ref:  (tm, 34)     f32
    x = x_ref[...].astype(jnp.bfloat16)
    h1 = jnp.dot(x, w1_ref[...], preferred_element_type=jnp.float32) + b1_ref[...]
    h1 = jnp.maximum(h1, 0.0).astype(jnp.bfloat16)
    h2 = jnp.dot(h1, w2_ref[...], preferred_element_type=jnp.float32) + b2_ref[...]
    h2 = jnp.maximum(h2, 0.0).astype(jnp.bfloat16)
    out = jnp.dot(h2, w3_ref[...], preferred_element_type=jnp.float32) + b3_ref[...]
    o_ref[...] = out


def _round_up(v, m):
    return (v + m - 1) // m * m


def prepare_params(params):
    """Cast f32 (in, out)/(1, out) params to kernel dtypes.

    Weights -> bf16 (halves VMEM, much faster MXU rate than emulated f32);
    biases stay f32 and are added to the f32 accumulators.
    """
    w1, b1, w2, b2, w3, b3 = params
    return (
        w1.astype(jnp.bfloat16), b1.astype(jnp.float32),
        w2.astype(jnp.bfloat16), b2.astype(jnp.float32),
        w3.astype(jnp.bfloat16), b3.astype(jnp.float32),
    )


def projection_forward(x, params, *, tile_m=512):
    """x: (B, F, 17, 3) or (B, F, 51) float32 -> (B, F, 17, 2) float32."""
    w1, b1, w2, b2, w3, b3 = prepare_params(params)

    B, F = x.shape[0], x.shape[1]
    N = B * F
    x2 = x.reshape(N, D_IN).astype(jnp.float32)

    # Tile sizing:
    #  * tile_m is forced to a multiple of 256 (also a multiple of 128 for
    #    v5e's narrower MXU) so every grid step runs full MXU passes.
    #  * If the whole problem fits in one tile, use a single grid step of
    #    round_up(N, 8) rows instead of splitting (avoids paying an extra
    #    ~600-cycle grid-step overhead for a TC split that only helps v7x).
    tile_m = max(256, _round_up(int(tile_m), 256))
    if N <= tile_m:
        tm = _round_up(N, 8)
    else:
        tm = tile_m

    n_pad = (-N) % tm
    if n_pad:
        x2 = jnp.pad(x2, ((0, n_pad), (0, 0)))
    Np = x2.shape[0]
    grid = (Np // tm,)

    out = pl.pallas_call(
        _mlp_kernel,
        out_shape=jax.ShapeDtypeStruct((Np, D_OUT), jnp.float32),
        grid_spec=pltpu.PrefetchScalarGridSpec(
            num_scalar_prefetch=0,
            grid=grid,
            in_specs=[
                pl.BlockSpec((tm, D_IN), lambda i: (i, 0)),        # x rows
                pl.BlockSpec((D_IN, D_HID), lambda i: (0, 0)),     # W1 (grid-invariant)
                pl.BlockSpec((1, D_HID), lambda i: (0, 0)),        # b1
                pl.BlockSpec((D_HID, D_HID), lambda i: (0, 0)),    # W2 (grid-invariant)
                pl.BlockSpec((1, D_HID), lambda i: (0, 0)),        # b2
                pl.BlockSpec((D_HID, D_OUT), lambda i: (0, 0)),    # W3 (grid-invariant)
                pl.BlockSpec((1, D_OUT), lambda i: (0, 0)),        # b3
            ],
            out_specs=pl.BlockSpec((tm, D_OUT), lambda i: (i, 0)),
        ),
        compiler_params=pltpu.CompilerParams(
            dimension_semantics=("parallel",),
            # ~15 MiB actual footprint at tm=512; 32 MiB keeps headroom for
            # compiler scratch and stays well under v7x's 64 MiB physical VMEM
            # (and avoids v5e's 16 MiB default scoped limit).
            vmem_limit_bytes=32 << 20,
        ),
    )(x2, w1, b1, w2, b2, w3, b3)

    # Only a (cheap) row slice remains when N was padded; no lane slice.
    if n_pad:
        out = out[:N]
    return out.reshape(B, F, NUM_JOINTS, 2)


def init_params(key):
    """Deterministic synthetic init matching nn.Linear shapes (stored transposed)."""
    k1, k2, k3, k4, k5, k6 = jax.random.split(key, 6)

    def lin(kw, kb, fan_in, fan_out):
        bound = 1.0 / jnp.sqrt(fan_in)
        w = jax.random.uniform(kw, (fan_in, fan_out), jnp.float32, -bound, bound)
        b = jax.random.uniform(kb, (1, fan_out), jnp.float32, -bound, bound)
        return w, b

    w1, b1 = lin(k1, k2, D_IN, D_HID)
    w2, b2 = lin(k3, k4, D_HID, D_HID)
    w3, b3 = lin(k5, k6, D_HID, D_OUT)
    return (w1, b1, w2, b2, w3, b3)


def _reference_forward(x, params):
    w1, b1, w2, b2, w3, b3 = params
    B, F = x.shape[0], x.shape[1]
    h = x.reshape(B * F, D_IN).astype(jnp.float32)
    h = jnp.maximum(h @ w1 + b1, 0.0)
    h = jnp.maximum(h @ w2 + b2, 0.0)
    h = h @ w3 + b3
    return h.reshape(B, F, NUM_JOINTS, 2)


if __name__ == "__main__":
    key = jax.random.PRNGKey(0)
    k_param, k_x = jax.random.split(key)

    params = init_params(k_param)

    # Small example input: batch=2, frames=8, 17 joints, 3D coords.
    x = jax.random.normal(k_x, (2, 8, NUM_JOINTS, 3), dtype=jnp.float32)

    out = projection_forward(x, params)
    out = jax.block_until_ready(out)

    ref = _reference_forward(x, params)
    assert out.shape == (2, 8, NUM_JOINTS, 2), out.shape
    # bf16 matmul inputs with f32 accumulation -> tolerance loosened vs pure f32.
    max_err = float(jnp.max(jnp.abs(out - ref)))
    assert jnp.allclose(out, ref, atol=5e-2, rtol=5e-2), f"mismatch vs reference (max err {max_err})"

    print("KERNEL_OK")
</pallas_src>

<mosaic_0001>
module attributes {stable_mosaic.version = 11 : i64} {
  func.func @_mlp_kernel(%arg0: i32, %arg1: memref<16x51xf32, #tpu.memory_space<vmem>>, %arg2: memref<51x1024xbf16, #tpu.memory_space<vmem>>, %arg3: memref<1x1024xf32, #tpu.memory_space<vmem>>, %arg4: memref<1024x1024xbf16, #tpu.memory_space<vmem>>, %arg5: memref<1x1024xf32, #tpu.memory_space<vmem>>, %arg6: memref<1024x34xbf16, #tpu.memory_space<vmem>>, %arg7: memref<1x34xf32, #tpu.memory_space<vmem>>, %arg8: memref<16x34xf32, #tpu.memory_space<vmem>>) attributes {dimension_semantics = [#tpu.dimension_semantics<parallel>], iteration_bounds = array<i64: 1>, scalar_prefetch = 0 : i64, scratch_operands = 0 : i64, tpu.core_type = #tpu.core_type<tc>, window_params = [{transform_indices = @transform_0, window_bounds = array<i64: 16, 51>}, {pipeline_mode = #tpu.pipeline_mode<synchronous>, transform_indices = @transform_1, window_bounds = array<i64: 51, 1024>}, {pipeline_mode = #tpu.pipeline_mode<synchronous>, transform_indices = @transform_2, window_bounds = array<i64: 1, 1024>}, {pipeline_mode = #tpu.pipeline_mode<synchronous>, transform_indices = @transform_3, window_bounds = array<i64: 1024, 1024>}, {pipeline_mode = #tpu.pipeline_mode<synchronous>, transform_indices = @transform_4, window_bounds = array<i64: 1, 1024>}, {pipeline_mode = #tpu.pipeline_mode<synchronous>, transform_indices = @transform_5, window_bounds = array<i64: 1024, 34>}, {pipeline_mode = #tpu.pipeline_mode<synchronous>, transform_indices = @transform_6, window_bounds = array<i64: 1, 34>}, {transform_indices = @transform_7, window_bounds = array<i64: 16, 34>}]} {
    %c0 = arith.constant 0 : index
    %c0_0 = arith.constant 0 : index
    %0 = vector.load %arg1[%c0, %c0_0] : memref<16x51xf32, #tpu.memory_space<vmem>>, vector<16x51xf32>
    %1 = arith.truncf %0 : vector<16x51xf32> to vector<16x51xbf16>
    %c0_1 = arith.constant 0 : index
    %c0_2 = arith.constant 0 : index
    %2 = vector.load %arg2[%c0_1, %c0_2] : memref<51x1024xbf16, #tpu.memory_space<vmem>>, vector<51x1024xbf16>
    %cst = arith.constant dense<0.000000e+00> : vector<16x1024xf32>
    %3 = tpu.matmul %1, %2, %cst {dimension_numbers = #tpu.dot_dimension_numbers<[1], [0], [0], [1], [0, 0, 1, 1], [], []>} : vector<16x51xbf16>, vector<51x1024xbf16>, vector<16x1024xf32> -> vector<16x1024xf32>
    %c0_3 = arith.constant 0 : index
    %c0_4 = arith.constant 0 : index
    %4 = vector.load %arg3[%c0_3, %c0_4] : memref<1x1024xf32, #tpu.memory_space<vmem>>, vector<1x1024xf32>
    %5 = vector.broadcast %4 : vector<1x1024xf32> to vector<16x1024xf32>
    %6 = arith.addf %3, %5 : vector<16x1024xf32>
    %cst_5 = arith.constant 0.000000e+00 : f32
    %7 = vector.broadcast %cst_5 : f32 to vector<16x1024xf32>
    %8 = arith.maximumf %6, %7 : vector<16x1024xf32>
    %9 = arith.truncf %8 : vector<16x1024xf32> to vector<16x1024xbf16>
    %c0_6 = arith.constant 0 : index
    %c0_7 = arith.constant 0 : index
    %10 = vector.load %arg4[%c0_6, %c0_7] : memref<1024x1024xbf16, #tpu.memory_space<vmem>>, vector<1024x1024xbf16>
    %cst_8 = arith.constant dense<0.000000e+00> : vector<16x1024xf32>
    %11 = tpu.matmul %9, %10, %cst_8 {dimension_numbers = #tpu.dot_dimension_numbers<[1], [0], [0], [1], [0, 0, 1, 1], [], []>} : vector<16x1024xbf16>, vector<1024x1024xbf16>, vector<16x1024xf32> -> vector<16x1024xf32>
    %c0_9 = arith.constant 0 : index
    %c0_10 = arith.constant 0 : index
    %12 = vector.load %arg5[%c0_9, %c0_10] : memref<1x1024xf32, #tpu.memory_space<vmem>>, vector<1x1024xf32>
    %13 = vector.broadcast %12 : vector<1x1024xf32> to vector<16x1024xf32>
    %14 = arith.addf %11, %13 : vector<16x1024xf32>
    %cst_11 = arith.constant 0.000000e+00 : f32
    %15 = vector.broadcast %cst_11 : f32 to vector<16x1024xf32>
    %16 = arith.maximumf %14, %15 : vector<16x1024xf32>
    %17 = arith.truncf %16 : vector<16x1024xf32> to vector<16x1024xbf16>
    %c0_12 = arith.constant 0 : index
    %c0_13 = arith.constant 0 : index
    %18 = vector.load %arg6[%c0_12, %c0_13] : memref<1024x34xbf16, #tpu.memory_space<vmem>>, vector<1024x34xbf16>
    %cst_14 = arith.constant dense<0.000000e+00> : vector<16x34xf32>
    %19 = tpu.matmul %17, %18, %cst_14 {dimension_numbers = #tpu.dot_dimension_numbers<[1], [0], [0], [1], [0, 0, 1, 1], [], []>} : vector<16x1024xbf16>, vector<1024x34xbf16>, vector<16x34xf32> -> vector<16x34xf32>
    %c0_15 = arith.constant 0 : index
    %c0_16 = arith.constant 0 : index
    %20 = vector.load %arg7[%c0_15, %c0_16] : memref<1x34xf32, #tpu.memory_space<vmem>>, vector<1x34xf32>
    %21 = vector.broadcast %20 : vector<1x34xf32> to vector<16x34xf32>
    %22 = arith.addf %19, %21 : vector<16x34xf32>
    %c0_17 = arith.constant 0 : index
    %c0_18 = arith.constant 0 : index
    %23 = vector.load %arg8[%c0_17, %c0_18] : memref<16x34xf32, #tpu.memory_space<vmem>>, vector<16x34xf32>
    tpu.vector_store %arg8[%c0_17, %c0_18], %22 {strides = array<i32>} : memref<16x34xf32, #tpu.memory_space<vmem>>, vector<16x34xf32>,
    return
  }
  func.func @transform_0(%arg0: i32) -> (i32, i32) {
    %c0_i32 = arith.constant 0 : i32
    %c0_i32_0 = arith.constant 0 : i32
    return %arg0, %c0_i32 : i32, i32
  }
  func.func @transform_1(%arg0: i32) -> (i32, i32) {
    %c0_i32 = arith.constant 0 : i32
    %c0_i32_0 = arith.constant 0 : i32
    %c0_i32_1 = arith.constant 0 : i32
    return %c0_i32, %c0_i32_0 : i32, i32
  }
  func.func @transform_2(%arg0: i32) -> (i32, i32) {
    %c0_i32 = arith.constant 0 : i32
    %c0_i32_0 = arith.constant 0 : i32
    %c0_i32_1 = arith.constant 0 : i32
    return %c0_i32, %c0_i32_0 : i32, i32
  }
  func.func @transform_3(%arg0: i32) -> (i32, i32) {
    %c0_i32 = arith.constant 0 : i32
    %c0_i32_0 = arith.constant 0 : i32
    %c0_i32_1 = arith.constant 0 : i32
    return %c0_i32, %c0_i32_0 : i32, i32
  }
  func.func @transform_4(%arg0: i32) -> (i32, i32) {
    %c0_i32 = arith.constant 0 : i32
    %c0_i32_0 = arith.constant 0 : i32
    %c0_i32_1 = arith.constant 0 : i32
    return %c0_i32, %c0_i32_0 : i32, i32
  }
  func.func @transform_5(%arg0: i32) -> (i32, i32) {
    %c0_i32 = arith.constant 0 : i32
    %c0_i32_0 = arith.constant 0 : i32
    %c0_i32_1 = arith.constant 0 : i32
    return %c0_i32, %c0_i32_0 : i32, i32
  }
  func.func @transform_6(%arg0: i32) -> (i32, i32) {
    %c0_i32 = arith.constant 0 : i32
    %c0_i32_0 = arith.constant 0 : i32
    %c0_i32_1 = arith.constant 0 : i32
    return %c0_i32, %c0_i32_0 : i32, i32
  }
  func.func @transform_7(%arg0: i32) -> (i32, i32) {
    %c0_i32 = arith.constant 0 : i32
    %c0_i32_0 = arith.constant 0 : i32
    return %arg0, %c0_i32 : i32, i32
  }
}

</mosaic_0001>

<llo_original>
// kernel: tpu_custom_call.1
$region0: #{tpu_custom_call.1}
  #allocation0 [shape = 'u32[]', space=smem, size = 0x4, offset = 0x4, fixed_abs, tag = 'smem constant byte address 0x4 - core index']
  #allocation1 [shape = 'u32[144,128]{1,0:T(1,128)}', space=vmem, size = 0x12000, scoped, tag = 'internal scratch']
  %s0 = inlined_call_operand.hbm [shape: f32[16,51], index: 0, kind: input, shape index: {}]
  %s1 = inlined_call_operand.hbm [shape: bf16[51,1024], index: 1, kind: input, shape index: {}]
  %s2 = inlined_call_operand.hbm [shape: f32[1,1024], index: 2, kind: input, shape index: {}]
  %s3 = inlined_call_operand.hbm [shape: bf16[1024,1024], index: 3, kind: input, shape index: {}]
  %s4 = inlined_call_operand.hbm [shape: f32[1,1024], index: 4, kind: input, shape index: {}]
  %s5 = inlined_call_operand.vmem [shape: bf16[1024,34], index: 5, kind: input, shape index: {}]
  %s6 = inlined_call_operand.hbm [shape: f32[1,34], index: 6, kind: input, shape index: {}]
  %s7 = inlined_call_operand.hbm [shape: f32[16,34], index: 7, kind: output, shape index: {}]
  %s8 = sld [smem:[#allocation0]]
  $region62: #{tpu_custom_call.1} parent=0
    _
  %s10 = ssub.s32 1, %s8
  %s11 = scalar_select 0, %s10, %s8
  $region1: #{tpu_custom_call.1} parent=0
    #allocation2 [shape = 'u8[8192]{0}', space=vmem, size = 0x2000, scoped, tag = 'input window, operand 0, single buffered']
    #allocation3 [shape = 's32[1]{0}', space=sflag, size = 0x4, scoped, tag = 'scoped memory for tpu_custom_call.1']
    #allocation4 [shape = 's32[1]{0}', space=sflag, size = 0x4, scoped, tag = 'scoped memory for tpu_custom_call.1']
    #allocation5 [shape = 'u8[114688]{0}', space=vmem, size = 0x1c000, scoped, tag = 'input window, operand 1, single buffered']
    #allocation6 [shape = 's32[1]{0}', space=sflag, size = 0x4, scoped, tag = 'scoped memory for tpu_custom_call.1']
    #allocation7 [shape = 'u8[4096]{0}', space=vmem, size = 0x1000, scoped, tag = 'input window, operand 2, single buffered']
    #allocation8 [shape = 'u8[2097152]{0}', space=vmem, size = 0x200000, scoped, tag = 'input window, operand 3, single buffered']
    #allocation9 [shape = 's32[1]{0}', space=sflag, size = 0x4, scoped, tag = 'scoped memory for tpu_custom_call.1']
    #allocation10 [shape = 'u8[4096]{0}', space=vmem, size = 0x1000, scoped, tag = 'input window, operand 4, single buffered']
    #allocation11 [shape = 'u8[512]{0}', space=vmem, size = 0x400, scoped, tag = 'input window, operand 6, single buffered']
    #allocation12 [shape = 's32[1]{0}', space=sflag, size = 0x4, scoped, tag = 'scoped memory for tpu_custom_call.1']
    #allocation13 [shape = 'u8[8192]{0}', space=vmem, size = 0x2000, scoped, tag = 'output window, operand 0, single buffered']
    %12 = vsyncpa [#allocation3], 0
    %13 = vsyncpa [#allocation6], 0
    %14 = vsyncpa [#allocation9], 0
    %15 = vsyncpa [#allocation12], 0
    %16 = vsyncpa [#allocation4], 0
    // Predicated region
    $region2: #{tpu_custom_call.1} parent=1 // pred_check
      _
    $region3: #{tpu_custom_call.1} parent=1 // pred_check_branch
      %18 = sbr.rel (0) target = $region5
    $region4: #{tpu_custom_call.1} parent=1 // pred_region
      %s20 = ssub.s32 256, 256
      %21 = vsyncadd [#allocation3], %s20
      %s22 = sshll.u32 [#allocation2], 4
      %s23 = int_to_ptr.vmem [resolvable:$true] %s22
      %28 = dma.hbm_to_vmem [thread:$0]  %s0, 256, %s23, [#allocation3], 128, 128, 8
    $region5: #{tpu_custom_call.1} parent=1 // pred_fallthru
      _
    // Predicated region
    $region6: #{tpu_custom_call.1} parent=1 // pred_check
      _
    $region7: #{tpu_custom_call.1} parent=1 // pred_check_branch
      %30 = sbr.rel (0) target = $region9
    $region8: #{tpu_custom_call.1} parent=1 // pred_region
      %s32 = ssub.s32 3584, 3584
      %33 = vsyncadd [#allocation6], %s32
      %s34 = sshll.u32 [#allocation5], 4
      %s35 = int_to_ptr.vmem [resolvable:$true] %s34
      %40 = dma.hbm_to_vmem [thread:$0]  %s1, 3584, %s35, [#allocation6], 512, 512, 32
    $region9: #{tpu_custom_call.1} parent=1 // pred_fallthru
      _
    // Predicated region
    $region10: #{tpu_custom_call.1} parent=1 // pred_check
      _
    $region11: #{tpu_custom_call.1} parent=1 // pred_check_branch
      %42 = sbr.rel (0) target = $region13
    $region12: #{tpu_custom_call.1} parent=1 // pred_region
      %s44 = ssub.s32 128, 128
      %45 = vsyncadd [#allocation6], %s44
      %s47 = sshll.u32 [#allocation7], 4
      %s48 = int_to_ptr.vmem [resolvable:$true] %s47
      %50 = dma.hbm_to_vmem [thread:$0]  %s2, 128, %s48, [#allocation6]
    $region13: #{tpu_custom_call.1} parent=1 // pred_fallthru
      _
    // Predicated region
    $region14: #{tpu_custom_call.1} parent=1 // pred_check
      _
    $region15: #{tpu_custom_call.1} parent=1 // pred_check_branch
      %52 = sbr.rel (0) target = $region17
    $region16: #{tpu_custom_call.1} parent=1 // pred_region
      %s54 = ssub.s32 65536, 65536
      %55 = vsyncadd [#allocation9], %s54
      %s56 = sshll.u32 [#allocation8], 4
      %s57 = int_to_ptr.vmem [resolvable:$true] %s56
      %62 = dma.hbm_to_vmem [thread:$0]  %s3, 65536, %s57, [#allocation9], 512, 512, 32
    $region17: #{tpu_custom_call.1} parent=1 // pred_fallthru
      _
    // Predicated region
    $region18: #{tpu_custom_call.1} parent=1 // pred_check
      _
    $region19: #{tpu_custom_call.1} parent=1 // pred_check_branch
      %64 = sbr.rel (0) target = $region21
    $region20: #{tpu_custom_call.1} parent=1 // pred_region
      %s66 = ssub.s32 128, 128
      %67 = vsyncadd [#allocation9], %s66
      %s69 = sshll.u32 [#allocation10], 4
      %s70 = int_to_ptr.vmem [resolvable:$true] %s69
      %72 = dma.hbm_to_vmem [thread:$0]  %s4, 128, %s70, [#allocation9]
    $region21: #{tpu_custom_call.1} parent=1 // pred_fallthru
      _
    // Predicated region
    $region22: #{tpu_custom_call.1} parent=1 // pred_check
      _
    $region23: #{tpu_custom_call.1} parent=1 // pred_check_branch
      %74 = sbr.rel (0) target = $region25
    $region24: #{tpu_custom_call.1} parent=1 // pred_region
      _
    $region25: #{tpu_custom_call.1} parent=1 // pred_fallthru
      _
    // Predicated region
    $region26: #{tpu_custom_call.1} parent=1 // pred_check
      _
    $region27: #{tpu_custom_call.1} parent=1 // pred_check_branch
      %76 = sbr.rel (0) target = $region29
    $region28: #{tpu_custom_call.1} parent=1 // pred_region
      %s78 = ssub.s32 16, 16
      %79 = vsyncadd [#allocation12], %s78
      %s81 = sshll.u32 [#allocation11], 4
      %s82 = int_to_ptr.vmem [resolvable:$true] %s81
      %84 = dma.hbm_to_vmem [thread:$0]  %s6, 16, %s82, [#allocation12]
    $region29: #{tpu_custom_call.1} parent=1 // pred_fallthru
      _
    // Predicated region
    $region30: #{tpu_custom_call.1} parent=1 // pred_check
      _
    $region31: #{tpu_custom_call.1} parent=1 // pred_check_branch
      %86 = sbr.rel (0) target = $region33
    $region32: #{tpu_custom_call.1} parent=1 // pred_region
      %87 = dma.done [#allocation3], 256
    $region33: #{tpu_custom_call.1} parent=1 // pred_fallthru
      _
    // Predicated region
    $region34: #{tpu_custom_call.1} parent=1 // pred_check
      _
    $region35: #{tpu_custom_call.1} parent=1 // pred_check_branch
      %89 = sbr.rel (0) target = $region37
    $region36: #{tpu_custom_call.1} parent=1 // pred_region
      %90 = dma.done [#allocation6], 3584
    $region37: #{tpu_custom_call.1} parent=1 // pred_fallthru
      _
    // Predicated region
    $region38: #{tpu_custom_call.1} parent=1 // pred_check
      _
    $region39: #{tpu_custom_call.1} parent=1 // pred_check_branch
      %92 = sbr.rel (0) target = $region41
    $region40: #{tpu_custom_call.1} parent=1 // pred_region
      %93 = dma.done [#allocation6], 128
    $region41: #{tpu_custom_call.1} parent=1 // pred_fallthru
      _
    // Predicated region
    $region42: #{tpu_custom_call.1} parent=1 // pred_check
      _
    $region43: #{tpu_custom_call.1} parent=1 // pred_check_branch
      %95 = sbr.rel (0) target = $region45
    $region44: #{tpu_custom_call.1} parent=1 // pred_region
      %96 = dma.done [#allocation9], 65536
    $region45: #{tpu_custom_call.1} parent=1 // pred_fallthru
      _
    // Predicated region
    $region46: #{tpu_custom_call.1} parent=1 // pred_check
      _
    $region47: #{tpu_custom_call.1} parent=1 // pred_check_branch
      %98 = sbr.rel (0) target = $region49
    $region48: #{tpu_custom_call.1} parent=1 // pred_region
      %99 = dma.done [#allocation9], 128
    $region49: #{tpu_custom_call.1} parent=1 // pred_fallthru
      _
    // Predicated region
    $region50: #{tpu_custom_call.1} parent=1 // pred_check
      _
    $region51: #{tpu_custom_call.1} parent=1 // pred_check_branch
      %101 = sbr.rel (0) target = $region53
    $region52: #{tpu_custom_call.1} parent=1 // pred_region
      %102 = dma.done [#allocation12], 16
    $region53: #{tpu_custom_call.1} parent=1 // pred_fallthru
      _
    %v104 = vld [vmem:[#allocation2] sm:$0xff]
    %v105 = vld [vmem:[#allocation2 + $0x8] sm:$0xff]
    %v106 = vpack.c.bf16 %v105, %v104
    %v107 = vld [vmem:[#allocation5] sm:$0xff]
    %v108 = vld [vmem:[#allocation5 + $0x8] sm:$0xff]
    %v109 = vld [vmem:[#allocation5 + $0x10] sm:$0xff]
    %v110 = vld [vmem:[#allocation5 + $0x18] sm:$0xff]
    %v111 = vld [vmem:[#allocation5 + $0x20] sm:$0xff]
    %v112 = vld [vmem:[#allocation5 + $0x28] sm:$0xff]
    %v113 = vld [vmem:[#allocation5 + $0x30] sm:$0xff]
    %v114 = vld [vmem:[#allocation5 + $0x38] sm:$0xff]
    %v115 = vld [vmem:[#allocation5 + $0x40] sm:$0xff]
    %v116 = vld [vmem:[#allocation5 + $0x48] sm:$0xff]
    %v117 = vld [vmem:[#allocation5 + $0x50] sm:$0xff]
    %v118 = vld [vmem:[#allocation5 + $0x58] sm:$0xff]
    %v119 = vld [vmem:[#allocation5 + $0x60] sm:$0xff]
    %v120 = vld [vmem:[#allocation5 + $0x68] sm:$0xff]
    %v121 = vld [vmem:[#allocation5 + $0x70] sm:$0xff]
    %v122 = vld [vmem:[#allocation5 + $0x78] sm:$0xff]
    %v123 = vld [vmem:[#allocation5 + $0x80] sm:$0xff]
    %v124 = vld [vmem:[#allocation5 + $0x88] sm:$0xff]
    %v125 = vld [vmem:[#allocation5 + $0x90] sm:$0xff]
    %v126 = vld [vmem:[#allocation5 + $0x98] sm:$0xff]
    %v127 = vld [vmem:[#allocation5 + $0xa0] sm:$0xff]
    %v128 = vld [vmem:[#allocation5 + $0xa8] sm:$0xff]
    %v129 = vld [vmem:[#allocation5 + $0xb0] sm:$0xff]
    %v130 = vld [vmem:[#allocation5 + $0xb8] sm:$0xff]
    %v131 = vld [vmem:[#allocation5 + $0xc0] sm:$0x33]
    %v132 = vld [vmem:[#allocation5 + $0xc8] sm:$0x33]
    %v133 = vld [vmem:[#allocation5 + $0xd0] sm:$0x33]
    %v134 = vld [vmem:[#allocation5 + $0xd8] sm:$0x33]
    %v135 = vld [vmem:[#allocation7] sm:$0xff]
    %v137 = vlaneseq
    %v138 = vshrl.u32 %v137, 7
    %v139 = vsub.s32 0, %v138
    %v140 = vrot.slane %v135, %v139
    %v141 = vlaneseq
    %v142 = vshrl.u32 %v141, 7
    %v143 = vsub.s32 1, %v142
    %v144 = vrot.slane %v135, %v143
    %v145 = vlaneseq
    %v146 = vshrl.u32 %v145, 7
    %v147 = vsub.s32 2, %v146
    %v148 = vrot.slane %v135, %v147
    %v149 = vlaneseq
    %v150 = vshrl.u32 %v149, 7
    %v151 = vsub.s32 3, %v150
    %v152 = vrot.slane %v135, %v151
    %v153 = vlaneseq
    %v154 = vshrl.u32 %v153, 7
    %v155 = vsub.s32 4, %v154
    %v156 = vrot.slane %v135, %v155
    %v157 = vlaneseq
    %v158 = vshrl.u32 %v157, 7
    %v159 = vsub.s32 5, %v158
    %v160 = vrot.slane %v135, %v159
    %v161 = vlaneseq
    %v162 = vshrl.u32 %v161, 7
    %v163 = vsub.s32 6, %v162
    %v164 = vrot.slane %v135, %v163
    %v165 = vlaneseq
    %v166 = vshrl.u32 %v165, 7
    %v167 = vsub.s32 7, %v166
    %v168 = vrot.slane %v135, %v167
    %v205 = vunpack.c.l.b16 %v107
    %v206 = vunpack.c.h.b16 %v107
    %v207 = vunpack.c.l.b16 %v108
    %v208 = vunpack.c.h.b16 %v108
    %v209 = vunpack.c.l.b16 %v109
    %v210 = vunpack.c.h.b16 %v109
    %v211 = vunpack.c.l.b16 %v110
    %v212 = vunpack.c.h.b16 %v110
    %v213 = vunpack.c.l.b16 %v111
    %v214 = vunpack.c.h.b16 %v111
    %v215 = vunpack.c.l.b16 %v112
    %v216 = vunpack.c.h.b16 %v112
    %v217 = vunpack.c.l.b16 %v113
    %v218 = vunpack.c.h.b16 %v113
    %v219 = vunpack.c.l.b16 %v114
    %v220 = vunpack.c.h.b16 %v114
    %v221 = vunpack.c.l.b16 %v115
    %v222 = vunpack.c.h.b16 %v115
    %v223 = vunpack.c.l.b16 %v116
    %v224 = vunpack.c.h.b16 %v116
    %v225 = vunpack.c.l.b16 %v117
    %v226 = vunpack.c.h.b16 %v117
    %v227 = vunpack.c.l.b16 %v118
    %v228 = vunpack.c.h.b16 %v118
    %v229 = vunpack.c.l.b16 %v119
    %v230 = vunpack.c.h.b16 %v119
    %v231 = vunpack.c.l.b16 %v120
    %v232 = vunpack.c.h.b16 %v120
    %v233 = vunpack.c.l.b16 %v121
    %v234 = vunpack.c.h.b16 %v121
    %v235 = vunpack.c.l.b16 %v122
    %v236 = vunpack.c.h.b16 %v122
    %v237 = vunpack.c.l.b16 %v123
    %v238 = vunpack.c.h.b16 %v123
    %v239 = vunpack.c.l.b16 %v124
    %v240 = vunpack.c.h.b16 %v124
    %v241 = vunpack.c.l.b16 %v125
    %v242 = vunpack.c.h.b16 %v125
    %v243 = vunpack.c.l.b16 %v126
    %v244 = vunpack.c.h.b16 %v126
    %v245 = vunpack.c.l.b16 %v127
    %v246 = vunpack.c.h.b16 %v127
    %v247 = vunpack.c.l.b16 %v128
    %v248 = vunpack.c.h.b16 %v128
    %v249 = vunpack.c.l.b16 %v129
    %v250 = vunpack.c.h.b16 %v129
    %v251 = vunpack.c.l.b16 %v130
    %v252 = vunpack.c.h.b16 %v130
    %v253 = vunpack.c.l.b16 %v131
    %v254 = vunpack.c.h.b16 %v131
    %v255 = vunpack.c.l.b16 %v132
    %v256 = vunpack.c.h.b16 %v132
    %v257 = vunpack.c.l.b16 %v133
    %v258 = vunpack.c.h.b16 %v133
    %v259 = vunpack.c.l.b16 %v134
    %v260 = vunpack.c.h.b16 %v134
    %v261 = vpack.c.b16 %v213, %v205
    %v262 = vpack.c.b16 %v214, %v206
    %v263 = vpack.c.b16 %v215, %v207
    %v264 = vpack.c.b16 %v216, %v208
    %v265 = vpack.c.b16 %v217, %v209
    %v266 = vpack.c.b16 %v218, %v210
    %v267 = vpack.c.b16 %v219, %v211
    %v268 = vpack.c.b16 %v220, %v212
    %v269 = vpack.c.b16 %v229, %v221
    %v270 = vpack.c.b16 %v230, %v222
    %v271 = vpack.c.b16 %v231, %v223
    %v272 = vpack.c.b16 %v232, %v224
    %v273 = vpack.c.b16 %v233, %v225
    %v274 = vpack.c.b16 %v234, %v226
    %v275 = vpack.c.b16 %v235, %v227
    %v276 = vpack.c.b16 %v236, %v228
    %v277 = vpack.c.b16 %v245, %v237
    %v278 = vpack.c.b16 %v246, %v238
    %v279 = vpack.c.b16 %v247, %v239
    %v280 = vpack.c.b16 %v248, %v240
    %v281 = vpack.c.b16 %v249, %v241
    %v282 = vpack.c.b16 %v250, %v242
    %v283 = vpack.c.b16 %v251, %v243
    %v284 = vpack.c.b16 %v252, %v244
    %v285 = vpack.c.b16 %v253, %v253
    %v286 = vpack.c.b16 %v254, %v254
    %v287 = vpack.c.b16 %v255, %v255
    %v288 = vpack.c.b16 %v256, %v256
    %v289 = vpack.c.b16 %v257, %v257
    %v290 = vpack.c.b16 %v258, %v258
    %v291 = vpack.c.b16 %v259, %v259
    %v292 = vpack.c.b16 %v260, %v260
    %vm317 = vcmask 416768
    %v319 = vsel %vm317, %v106, 0
    %vm321 = vcmask 1040384
    %vm322 = vcmask 1041408
    %v323 = vsel %vm321, 4294967295, 65535
    %v324 = vsel %vm322, %v323, 0
    %v326 = vand.u32 %v285, %v324
    %v329 = vand.u32 %v286, %v324
    %v332 = vand.u32 %v287, %v324
    %v335 = vand.u32 %v288, %v324
    %v338 = vand.u32 %v289, %v324
    %v341 = vand.u32 %v290, %v324
    %v344 = vand.u32 %v291, %v324
    %v347 = vand.u32 %v292, %v324
    %349 = vmatprep.subr.bf16.mxu0 %v262
    %350 = vmatpush1.bf16.msra.mxu0 %v261
    %351 = vmatprep.subr.bf16.mxu0 %v270
    %352 = vmatpush1.bf16.msra.mxu0 %v269
    %353 = vmatprep.subr.bf16.mxu0 %v278
    %354 = vmatpush1.bf16.msra.mxu0 %v277
    %355 = vmatprep.subr.bf16.mxu0 %v329
    %356 = vmatpush1.bf16.msra.mxu0 %v326
    %357 = vmatprep.subr.bf16.mxu0 0
    %358 = vmatpush1.bf16.msra.mxu0 0
    %359 = vmatprep.subr.bf16.mxu0 0
    %360 = vmatpush1.bf16.msra.mxu0 0
    %361 = vmatprep.subr.bf16.mxu0 0
    %362 = vmatpush1.bf16.msra.mxu0 0
    %363 = vmatprep.subr.bf16.mxu0 0
    %364 = vmatpush1.bf16.msra.mxu0 0
    %365 = vmatprep.subr.bf16.mxu0 0
    %366 = vmatpush1.bf16.msra.mxu0 0
    %367 = vmatprep.subr.bf16.mxu0 0
    %368 = vmatpush1.bf16.msra.mxu0 0
    %369 = vmatprep.subr.bf16.mxu0 0
    %370 = vmatpush1.bf16.msra.mxu0 0
    %371 = vmatprep.subr.bf16.mxu0 0
    %372 = vmatpush1.bf16.msra.mxu0 0
    %373 = vmatprep.subr.bf16.mxu0 0
    %374 = vmatpush1.bf16.msra.mxu0 0
    %375 = vmatprep.subr.bf16.mxu0 0
    %376 = vmatpush1.bf16.msra.mxu0 0
    %377 = vmatprep.subr.bf16.mxu0 0
    %378 = vmatpush1.bf16.msra.mxu0 0
    %379 = vmatprep.subr.bf16.mxu0 0
    %380 = vmatpush1.bf16.msra.mxu0 0
    %381 = vmatprep.mubr.bf16.mxu0 0
    %382 = vmatmul.mubr.bf16.gmra.mrb[0].mxu0 %v319
    %v383 = vpop.f32.mrb[0].mxu0
    %v384 = vadd.f32 %v140, %v383
    %v385 = vpop.f32.mrb[0].mxu0
    %v386 = vadd.f32 %v144, %v385
    %v387 = vpop.f32.mrb[0].mxu0
    %v388 = vadd.f32 %v140, %v387
    %v389 = vpop.f32.mrb[0].mxu0
    %v390 = vadd.f32 %v144, %v389
    %391 = vdwg.mxu0
    %392 = vmatprep.subr.bf16.mxu0 %v264
    %393 = vmatpush1.bf16.msra.mxu0 %v263
    %394 = vmatprep.subr.bf16.mxu0 %v272
    %395 = vmatpush1.bf16.msra.mxu0 %v271
    %396 = vmatprep.subr.bf16.mxu0 %v280
    %397 = vmatpush1.bf16.msra.mxu0 %v279
    %398 = vmatprep.subr.bf16.mxu0 %v335
    %399 = vmatpush1.bf16.msra.mxu0 %v332
    %400 = vmatprep.subr.bf16.mxu0 0
    %401 = vmatpush1.bf16.msra.mxu0 0
    %402 = vmatprep.subr.bf16.mxu0 0
    %403 = vmatpush1.bf16.msra.mxu0 0
    %404 = vmatprep.subr.bf16.mxu0 0
    %405 = vmatpush1.bf16.msra.mxu0 0
    %406 = vmatprep.subr.bf16.mxu0 0
    %407 = vmatpush1.bf16.msra.mxu0 0
    %408 = vmatprep.subr.bf16.mxu0 0
    %409 = vmatpush1.bf16.msra.mxu0 0
    %410 = vmatprep.subr.bf16.mxu0 0
    %411 = vmatpush1.bf16.msra.mxu0 0
    %412 = vmatprep.subr.bf16.mxu0 0
    %413 = vmatpush1.bf16.msra.mxu0 0
    %414 = vmatprep.subr.bf16.mxu0 0
    %415 = vmatpush1.bf16.msra.mxu0 0
    %416 = vmatprep.subr.bf16.mxu0 0
    %417 = vmatpush1.bf16.msra.mxu0 0
    %418 = vmatprep.subr.bf16.mxu0 0
    %419 = vmatpush1.bf16.msra.mxu0 0
    %420 = vmatprep.subr.bf16.mxu0 0
    %421 = vmatpush1.bf16.msra.mxu0 0
    %422 = vmatprep.subr.bf16.mxu0 0
    %423 = vmatpush1.bf16.msra.mxu0 0
    %424 = vmatprep.mubr.bf16.mxu0 0
    %425 = vmatmul.mubr.bf16.gmra.mrb[0].mxu0 %v319
    %v426 = vpop.f32.mrb[0].mxu0
    %v427 = vadd.f32 %v148, %v426
    %v428 = vpop.f32.mrb[0].mxu0
    %v429 = vadd.f32 %v152, %v428
    %v430 = vpop.f32.mrb[0].mxu0
    %v431 = vadd.f32 %v148, %v430
    %v432 = vpop.f32.mrb[0].mxu0
    %v433 = vadd.f32 %v152, %v432
    %434 = vdwg.mxu0
    %435 = vmatprep.subr.bf16.mxu0 %v266
    %436 = vmatpush1.bf16.msra.mxu0 %v265
    %437 = vmatprep.subr.bf16.mxu0 %v274
    %438 = vmatpush1.bf16.msra.mxu0 %v273
    %439 = vmatprep.subr.bf16.mxu0 %v282
    %440 = vmatpush1.bf16.msra.mxu0 %v281
    %441 = vmatprep.subr.bf16.mxu0 %v341
    %442 = vmatpush1.bf16.msra.mxu0 %v338
    %443 = vmatprep.subr.bf16.mxu0 0
    %444 = vmatpush1.bf16.msra.mxu0 0
    %445 = vmatprep.subr.bf16.mxu0 0
    %446 = vmatpush1.bf16.msra.mxu0 0
    %447 = vmatprep.subr.bf16.mxu0 0
    %448 = vmatpush1.bf16.msra.mxu0 0
    %449 = vmatprep.subr.bf16.mxu0 0
    %450 = vmatpush1.bf16.msra.mxu0 0
    %451 = vmatprep.subr.bf16.mxu0 0
    %452 = vmatpush1.bf16.msra.mxu0 0
    %453 = vmatprep.subr.bf16.mxu0 0
    %454 = vmatpush1.bf16.msra.mxu0 0
    %455 = vmatprep.subr.bf16.mxu0 0
    %456 = vmatpush1.bf16.msra.mxu0 0
    %457 = vmatprep.subr.bf16.mxu0 0
    %458 = vmatpush1.bf16.msra.mxu0 0
    %459 = vmatprep.subr.bf16.mxu0 0
    %460 = vmatpush1.bf16.msra.mxu0 0
    %461 = vmatprep.subr.bf16.mxu0 0
    %462 = vmatpush1.bf16.msra.mxu0 0
    %463 = vmatprep.subr.bf16.mxu0 0
    %464 = vmatpush1.bf16.msra.mxu0 0
    %465 = vmatprep.subr.bf16.mxu0 0
    %466 = vmatpush1.bf16.msra.mxu0 0
    %467 = vmatprep.mubr.bf16.mxu0 0
    %468 = vmatmul.mubr.bf16.gmra.mrb[0].mxu0 %v319
    %v469 = vpop.f32.mrb[0].mxu0
    %v470 = vadd.f32 %v156, %v469
    %v471 = vpop.f32.mrb[0].mxu0
    %v472 = vadd.f32 %v160, %v471
    %v473 = vpop.f32.mrb[0].mxu0
    %v474 = vadd.f32 %v156, %v473
    %v475 = vpop.f32.mrb[0].mxu0
    %v476 = vadd.f32 %v160, %v475
    %477 = vdwg.mxu0
    %478 = vmatprep.subr.bf16.mxu0 %v268
    %479 = vmatpush1.bf16.msra.mxu0 %v267
    %480 = vmatprep.subr.bf16.mxu0 %v276
    %481 = vmatpush1.bf16.msra.mxu0 %v275
    %482 = vmatprep.subr.bf16.mxu0 %v284
    %483 = vmatpush1.bf16.msra.mxu0 %v283
    %484 = vmatprep.subr.bf16.mxu0 %v347
    %485 = vmatpush1.bf16.msra.mxu0 %v344
    %486 = vmatprep.subr.bf16.mxu0 0
    %487 = vmatpush1.bf16.msra.mxu0 0
    %488 = vmatprep.subr.bf16.mxu0 0
    %489 = vmatpush1.bf16.msra.mxu0 0
    %490 = vmatprep.subr.bf16.mxu0 0
    %491 = vmatpush1.bf16.msra.mxu0 0
    %492 = vmatprep.subr.bf16.mxu0 0
    %493 = vmatpush1.bf16.msra.mxu0 0
    %494 = vmatprep.subr.bf16.mxu0 0
    %495 = vmatpush1.bf16.msra.mxu0 0
    %496 = vmatprep.subr.bf16.mxu0 0
    %497 = vmatpush1.bf16.msra.mxu0 0
    %498 = vmatprep.subr.bf16.mxu0 0
    %499 = vmatpush1.bf16.msra.mxu0 0
    %500 = vmatprep.subr.bf16.mxu0 0
    %501 = vmatpush1.bf16.msra.mxu0 0
    %502 = vmatprep.subr.bf16.mxu0 0
    %503 = vmatpush1.bf16.msra.mxu0 0
    %504 = vmatprep.subr.bf16.mxu0 0
    %505 = vmatpush1.bf16.msra.mxu0 0
    %506 = vmatprep.subr.bf16.mxu0 0
    %507 = vmatpush1.bf16.msra.mxu0 0
    %508 = vmatprep.subr.bf16.mxu0 0
    %509 = vmatpush1.bf16.msra.mxu0 0
    %510 = vmatprep.mubr.bf16.mxu0 0
    %511 = vmatmul.mubr.bf16.gmra.mrb[0].mxu0 %v319
    %v512 = vpop.f32.mrb[0].mxu0
    %v513 = vadd.f32 %v164, %v512
    %v514 = vpop.f32.mrb[0].mxu0
    %v515 = vadd.f32 %v168, %v514
    %v516 = vpop.f32.mrb[0].mxu0
    %v517 = vadd.f32 %v164, %v516
    %v518 = vpop.f32.mrb[0].mxu0
    %v519 = vadd.f32 %v168, %v518
    %520 = vdwg.mxu0
    %v521 = vmax.f32 %v384, 0.0
    %v522 = vmax.f32 %v386, 0.0
    %v523 = vmax.f32 %v427, 0.0
    %v524 = vmax.f32 %v429, 0.0
    %v525 = vmax.f32 %v470, 0.0
    %v526 = vmax.f32 %v472, 0.0
    %v527 = vmax.f32 %v513, 0.0
    %v528 = vmax.f32 %v515, 0.0
    %v529 = vmax.f32 %v388, 0.0
    %v530 = vmax.f32 %v390, 0.0
    %v531 = vmax.f32 %v431, 0.0
    %v532 = vmax.f32 %v433, 0.0
    %v533 = vmax.f32 %v474, 0.0
    %v534 = vmax.f32 %v476, 0.0
    %v535 = vmax.f32 %v517, 0.0
    %v536 = vmax.f32 %v519, 0.0
    %v537 = vpack.c.bf16 %v529, %v521
    %v538 = vpack.c.bf16 %v530, %v522
    %v539 = vpack.c.bf16 %v531, %v523
    %v540 = vpack.c.bf16 %v532, %v524
    %v541 = vpack.c.bf16 %v533, %v525
    %v542 = vpack.c.bf16 %v534, %v526
    %v543 = vpack.c.bf16 %v535, %v527
    %v544 = vpack.c.bf16 %v536, %v528
    %v545 = vld [vmem:[#allocation8] sm:$0xff]
    %v546 = vld [vmem:[#allocation8 + $0x8] sm:$0xff]
    %v547 = vld [vmem:[#allocation8 + $0x10] sm:$0xff]
    %v548 = vld [vmem:[#allocation8 + $0x18] sm:$0xff]
    %v549 = vld [vmem:[#allocation8 + $0x20] sm:$0xff]
    %v550 = vld [vmem:[#allocation8 + $0x28] sm:$0xff]
    %v551 = vld [vmem:[#allocation8 + $0x30] sm:$0xff]
    %v552 = vld [vmem:[#allocation8 + $0x38] sm:$0xff]
    %v553 = vld [vmem:[#allocation8 + $0x40] sm:$0xff]
    %v554 = vld [vmem:[#allocation8 + $0x48] sm:$0xff]
    %v555 = vld [vmem:[#allocation8 + $0x50] sm:$0xff]
    %v556 = vld [vmem:[#allocation8 + $0x58] sm:$0xff]
    %v557 = vld [vmem:[#allocation8 + $0x60] sm:$0xff]
    %v558 = vld [vmem:[#allocation8 + $0x68] sm:$0xff]
    %v559 = vld [vmem:[#allocation8 + $0x70] sm:$0xff]
    %v560 = vld [vmem:[#allocation8 + $0x78] sm:$0xff]
    %v561 = vld [vmem:[#allocation8 + $0x80] sm:$0xff]
    %v562 = vld [vmem:[#allocation8 + $0x88] sm:$0xff]
    %v563 = vld [vmem:[#allocation8 + $0x90] sm:$0xff]
    %v564 = vld [vmem:[#allocation8 + $0x98] sm:$0xff]
    %v565 = vld [vmem:[#allocation8 + $0xa0] sm:$0xff]
    %v566 = vld [vmem:[#allocation8 + $0xa8] sm:$0xff]
    %v567 = vld [vmem:[#allocation8 + $0xb0] sm:$0xff]
    %v568 = vld [vmem:[#allocation8 + $0xb8] sm:$0xff]
    %v569 = vld [vmem:[#allocation8 + $0xc0] sm:$0xff]
    %v570 = vld [vmem:[#allocation8 + $0xc8] sm:$0xff]
    %v571 = vld [vmem:[#allocation8 + $0xd0] sm:$0xff]
    %v572 = vld [vmem:[#allocation8 + $0xd8] sm:$0xff]
    %v573 = vld [vmem:[#allocation8 + $0xe0] sm:$0xff]
    %v574 = vld [vmem:[#allocation8 + $0xe8] sm:$0xff]
    %v575 = vld [vmem:[#allocation8 + $0xf0] sm:$0xff]
    %v576 = vld [vmem:[#allocation8 + $0xf8] sm:$0xff]
    %v577 = vld [vmem:[#allocation8 + $0x100] sm:$0xff]
    %v578 = vld [vmem:[#allocation8 + $0x108] sm:$0xff]
    %v579 = vld [vmem:[#allocation8 + $0x110] sm:$0xff]
    %v580 = vld [vmem:[#allocation8 + $0x118] sm:$0xff]
    %v581 = vld [vmem:[#allocation8 + $0x120] sm:$0xff]
    %v582 = vld [vmem:[#allocation8 + $0x128] sm:$0xff]
    %v583 = vld [vmem:[#allocation8 + $0x130] sm:$0xff]
    %v584 = vld [vmem:[#allocation8 + $0x138] sm:$0xff]
    %v585 = vld [vmem:[#allocation8 + $0x140] sm:$0xff]
    %v586 = vld [vmem:[#allocation8 + $0x148] sm:$0xff]
    %v587 = vld [vmem:[#allocation8 + $0x150] sm:$0xff]
    %v588 = vld [vmem:[#allocation8 + $0x158] sm:$0xff]
    %v589 = vld [vmem:[#allocation8 + $0x160] sm:$0xff]
    %v590 = vld [vmem:[#allocation8 + $0x168] sm:$0xff]
    %v591 = vld [vmem:[#allocation8 + $0x170] sm:$0xff]
    %v592 = vld [vmem:[#allocation8 + $0x178] sm:$0xff]
    %v593 = vld [vmem:[#allocation8 + $0x180] sm:$0xff]
    %v594 = vld [vmem:[#allocation8 + $0x188] sm:$0xff]
    %v595 = vld [vmem:[#allocation8 + $0x190] sm:$0xff]
    %v596 = vld [vmem:[#allocation8 + $0x198] sm:$0xff]
    %v597 = vld [vmem:[#allocation8 + $0x1a0] sm:$0xff]
    %v598 = vld [vmem:[#allocation8 + $0x1a8] sm:$0xff]
    %v599 = vld [vmem:[#allocation8 + $0x1b0] sm:$0xff]
    %v600 = vld [vmem:[#allocation8 + $0x1b8] sm:$0xff]
    %v601 = vld [vmem:[#allocation8 + $0x1c0] sm:$0xff]
    %v602 = vld [vmem:[#allocation8 + $0x1c8] sm:$0xff]
    %v603 = vld [vmem:[#allocation8 + $0x1d0] sm:$0xff]
    %v604 = vld [vmem:[#allocation8 + $0x1d8] sm:$0xff]
    %v605 = vld [vmem:[#allocation8 + $0x1e0] sm:$0xff]
    %v606 = vld [vmem:[#allocation8 + $0x1e8] sm:$0xff]
    %v607 = vld [vmem:[#allocation8 + $0x1f0] sm:$0xff]
    %v608 = vld [vmem:[#allocation8 + $0x1f8] sm:$0xff]
    %v609 = vld [vmem:[#allocation8 + $0x200] sm:$0xff]
    %v610 = vld [vmem:[#allocation8 + $0x208] sm:$0xff]
    %v611 = vld [vmem:[#allocation8 + $0x210] sm:$0xff]
    %v612 = vld [vmem:[#allocation8 + $0x218] sm:$0xff]
    %v613 = vld [vmem:[#allocation8 + $0x220] sm:$0xff]
    %v614 = vld [vmem:[#allocation8 + $0x228] sm:$0xff]
    %v615 = vld [vmem:[#allocation8 + $0x230] sm:$0xff]
    %v616 = vld [vmem:[#allocation8 + $0x238] sm:$0xff]
    %v617 = vld [vmem:[#allocation8 + $0x240] sm:$0xff]
    %v618 = vld [vmem:[#allocation8 + $0x248] sm:$0xff]
    %v619 = vld [vmem:[#allocation8 + $0x250] sm:$0xff]
    %v620 = vld [vmem:[#allocation8 + $0x258] sm:$0xff]
    %v621 = vld [vmem:[#allocation8 + $0x260] sm:$0xff]
    %v622 = vld [vmem:[#allocation8 + $0x268] sm:$0xff]
    %v623 = vld [vmem:[#allocation8 + $0x270] sm:$0xff]
    %v624 = vld [vmem:[#allocation8 + $0x278] sm:$0xff]
    %v625 = vld [vmem:[#allocation8 + $0x280] sm:$0xff]
    %v626 = vld [vmem:[#allocation8 + $0x288] sm:$0xff]
    %v627 = vld [vmem:[#allocation8 + $0x290] sm:$0xff]
    %v628 = vld [vmem:[#allocation8 + $0x298] sm:$0xff]
    %v629 = vld [vmem:[#allocation8 + $0x2a0] sm:$0xff]
    %v630 = vld [vmem:[#allocation8 + $0x2a8] sm:$0xff]
    %v631 = vld [vmem:[#allocation8 + $0x2b0] sm:$0xff]
    %v632 = vld [vmem:[#allocation8 + $0x2b8] sm:$0xff]
    %v633 = vld [vmem:[#allocation8 + $0x2c0] sm:$0xff]
    %v634 = vld [vmem:[#allocation8 + $0x2c8] sm:$0xff]
    %v635 = vld [vmem:[#allocation8 + $0x2d0] sm:$0xff]
    %v636 = vld [vmem:[#allocation8 + $0x2d8] sm:$0xff]
    %v637 = vld [vmem:[#allocation8 + $0x2e0] sm:$0xff]
    %v638 = vld [vmem:[#allocation8 + $0x2e8] sm:$0xff]
    %v639 = vld [vmem:[#allocation8 + $0x2f0] sm:$0xff]
    %v640 = vld [vmem:[#allocation8 + $0x2f8] sm:$0xff]
    %v641 = vld [vmem:[#allocation8 + $0x300] sm:$0xff]
    %v642 = vld [vmem:[#allocation8 + $0x308] sm:$0xff]
    %v643 = vld [vmem:[#allocation8 + $0x310] sm:$0xff]
    %v644 = vld [vmem:[#allocation8 + $0x318] sm:$0xff]
    %v645 = vld [vmem:[#allocation8 + $0x320] sm:$0xff]
    %v646 = vld [vmem:[#allocation8 + $0x328] sm:$0xff]
    %v647 = vld [vmem:[#allocation8 + $0x330] sm:$0xff]
    %v648 = vld [vmem:[#allocation8 + $0x338] sm:$0xff]
    %v649 = vld [vmem:[#allocation8 + $0x340] sm:$0xff]
    %v650 = vld [vmem:[#allocation8 + $0x348] sm:$0xff]
    %v651 = vld [vmem:[#allocation8 + $0x350] sm:$0xff]
    %v652 = vld [vmem:[#allocation8 + $0x358] sm:$0xff]
    %v653 = vld [vmem:[#allocation8 + $0x360] sm:$0xff]
    %v654 = vld [vmem:[#allocation8 + $0x368] sm:$0xff]
    %v655 = vld [vmem:[#allocation8 + $0x370] sm:$0xff]
    %v656 = vld [vmem:[#allocation8 + $0x378] sm:$0xff]
    %v657 = vld [vmem:[#allocation8 + $0x380] sm:$0xff]
    %v658 = vld [vmem:[#allocation8 + $0x388] sm:$0xff]
    %v659 = vld [vmem:[#allocation8 + $0x390] sm:$0xff]
    %v660 = vld [vmem:[#allocation8 + $0x398] sm:$0xff]
    %v661 = vld [vmem:[#allocation8 + $0x3a0] sm:$0xff]
    %v662 = vld [vmem:[#allocation8 + $0x3a8] sm:$0xff]
    %v663 = vld [vmem:[#allocation8 + $0x3b0] sm:$0xff]
    %v664 = vld [vmem:[#allocation8 + $0x3b8] sm:$0xff]
    %v665 = vld [vmem:[#allocation8 + $0x3c0] sm:$0xff]
    %v666 = vld [vmem:[#allocation8 + $0x3c8] sm:$0xff]
    %v667 = vld [vmem:[#allocation8 + $0x3d0] sm:$0xff]
    %v668 = vld [vmem:[#allocation8 + $0x3d8] sm:$0xff]
    %v669 = vld [vmem:[#allocation8 + $0x3e0] sm:$0xff]
    %v670 = vld [vmem:[#allocation8 + $0x3e8] sm:$0xff]
    %v671 = vld [vmem:[#allocation8 + $0x3f0] sm:$0xff]
    %v672 = vld [vmem:[#allocation8 + $0x3f8] sm:$0xff]
    %v673 = vld [vmem:[#allocation8 + $0x400] sm:$0xff]
    %v674 = vld [vmem:[#allocation8 + $0x408] sm:$0xff]
    %v675 = vld [vmem:[#allocation8 + $0x410] sm:$0xff]
    %v676 = vld [vmem:[#allocation8 + $0x418] sm:$0xff]
    %v677 = vld [vmem:[#allocation8 + $0x420] sm:$0xff]
    %v678 = vld [vmem:[#allocation8 + $0x428] sm:$0xff]
    %v679 = vld [vmem:[#allocation8 + $0x430] sm:$0xff]
    %v680 = vld [vmem:[#allocation8 + $0x438] sm:$0xff]
    %v681 = vld [vmem:[#allocation8 + $0x440] sm:$0xff]
    %v682 = vld [vmem:[#allocation8 + $0x448] sm:$0xff]
    %v683 = vld [vmem:[#allocation8 + $0x450] sm:$0xff]
    %v684 = vld [vmem:[#allocation8 + $0x458] sm:$0xff]
    %v685 = vld [vmem:[#allocation8 + $0x460] sm:$0xff]
    %v686 = vld [vmem:[#allocation8 + $0x468] sm:$0xff]
    %v687 = vld [vmem:[#allocation8 + $0x470] sm:$0xff]
    %v688 = vld [vmem:[#allocation8 + $0x478] sm:$0xff]
    %v689 = vld [vmem:[#allocation8 + $0x480] sm:$0xff]
    %v690 = vld [vmem:[#allocation8 + $0x488] sm:$0xff]
    %v691 = vld [vmem:[#allocation8 + $0x490] sm:$0xff]
    %v692 = vld [vmem:[#allocation8 + $0x498] sm:$0xff]
    %v693 = vld [vmem:[#allocation8 + $0x4a0] sm:$0xff]
    %v694 = vld [vmem:[#allocation8 + $0x4a8] sm:$0xff]
    %v695 = vld [vmem:[#allocation8 + $0x4b0] sm:$0xff]
    %v696 = vld [vmem:[#allocation8 + $0x4b8] sm:$0xff]
    %v697 = vld [vmem:[#allocation8 + $0x4c0] sm:$0xff]
    %v698 = vld [vmem:[#allocation8 + $0x4c8] sm:$0xff]
    %v699 = vld [vmem:[#allocation8 + $0x4d0] sm:$0xff]
    %v700 = vld [vmem:[#allocation8 + $0x4d8] sm:$0xff]
    %v701 = vld [vmem:[#allocation8 + $0x4e0] sm:$0xff]
    %v702 = vld [vmem:[#allocation8 + $0x4e8] sm:$0xff]
    %v703 = vld [vmem:[#allocation8 + $0x4f0] sm:$0xff]
    %v704 = vld [vmem:[#allocation8 + $0x4f8] sm:$0xff]
    %v705 = vld [vmem:[#allocation8 + $0x500] sm:$0xff]
    %v706 = vld [vmem:[#allocation8 + $0x508] sm:$0xff]
    %v707 = vld [vmem:[#allocation8 + $0x510] sm:$0xff]
    %v708 = vld [vmem:[#allocation8 + $0x518] sm:$0xff]
    %v709 = vld [vmem:[#allocation8 + $0x520] sm:$0xff]
    %v710 = vld [vmem:[#allocation8 + $0x528] sm:$0xff]
    %v711 = vld [vmem:[#allocation8 + $0x530] sm:$0xff]
    %v712 = vld [vmem:[#allocation8 + $0x538] sm:$0xff]
    %v713 = vld [vmem:[#allocation8 + $0x540] sm:$0xff]
    %v714 = vld [vmem:[#allocation8 + $0x548] sm:$0xff]
    %v715 = vld [vmem:[#allocation8 + $0x550] sm:$0xff]
    %v716 = vld [vmem:[#allocation8 + $0x558] sm:$0xff]
    %v717 = vld [vmem:[#allocation8 + $0x560] sm:$0xff]
    %v718 = vld [vmem:[#allocation8 + $0x568] sm:$0xff]
    %v719 = vld [vmem:[#allocation8 + $0x570] sm:$0xff]
    %v720 = vld [vmem:[#allocation8 + $0x578] sm:$0xff]
    %v721 = vld [vmem:[#allocation8 + $0x580] sm:$0xff]
    %v722 = vld [vmem:[#allocation8 + $0x588] sm:$0xff]
    %v723 = vld [vmem:[#allocation8 + $0x590] sm:$0xff]
    %v724 = vld [vmem:[#allocation8 + $0x598] sm:$0xff]
    %v725 = vld [vmem:[#allocation8 + $0x5a0] sm:$0xff]
    %v726 = vld [vmem:[#allocation8 + $0x5a8] sm:$0xff]
    %v727 = vld [vmem:[#allocation8 + $0x5b0] sm:$0xff]
    %v728 = vld [vmem:[#allocation8 + $0x5b8] sm:$0xff]
    %v729 = vld [vmem:[#allocation8 + $0x5c0] sm:$0xff]
    %v730 = vld [vmem:[#allocation8 + $0x5c8] sm:$0xff]
    %v731 = vld [vmem:[#allocation8 + $0x5d0] sm:$0xff]
    %v732 = vld [vmem:[#allocation8 + $0x5d8] sm:$0xff]
    %v733 = vld [vmem:[#allocation8 + $0x5e0] sm:$0xff]
    %v734 = vld [vmem:[#allocation8 + $0x5e8] sm:$0xff]
    %v735 = vld [vmem:[#allocation8 + $0x5f0] sm:$0xff]
    %v736 = vld [vmem:[#allocation8 + $0x5f8] sm:$0xff]
    %v737 = vld [vmem:[#allocation8 + $0x600] sm:$0xff]
    %v738 = vld [vmem:[#allocation8 + $0x608] sm:$0xff]
    %v739 = vld [vmem:[#allocation8 + $0x610] sm:$0xff]
    %v740 = vld [vmem:[#allocation8 + $0x618] sm:$0xff]
    %v741 = vld [vmem:[#allocation8 + $0x620] sm:$0xff]
    %v742 = vld [vmem:[#allocation8 + $0x628] sm:$0xff]
    %v743 = vld [vmem:[#allocation8 + $0x630] sm:$0xff]
    %v744 = vld [vmem:[#allocation8 + $0x638] sm:$0xff]
    %v745 = vld [vmem:[#allocation8 + $0x640] sm:$0xff]
    %v746 = vld [vmem:[#allocation8 + $0x648] sm:$0xff]
    %v747 = vld [vmem:[#allocation8 + $0x650] sm:$0xff]
    %v748 = vld [vmem:[#allocation8 + $0x658] sm:$0xff]
    %v749 = vld [vmem:[#allocation8 + $0x660] sm:$0xff]
    %v750 = vld [vmem:[#allocation8 + $0x668] sm:$0xff]
    %v751 = vld [vmem:[#allocation8 + $0x670] sm:$0xff]
    %v752 = vld [vmem:[#allocation8 + $0x678] sm:$0xff]
    %v753 = vld [vmem:[#allocation8 + $0x680] sm:$0xff]
    %v754 = vld [vmem:[#allocation8 + $0x688] sm:$0xff]
    %v755 = vld [vmem:[#allocation8 + $0x690] sm:$0xff]
    %v756 = vld [vmem:[#allocation8 + $0x698] sm:$0xff]
    %v757 = vld [vmem:[#allocation8 + $0x6a0] sm:$0xff]
    %v758 = vld [vmem:[#allocation8 + $0x6a8] sm:$0xff]
    %v759 = vld [vmem:[#allocation8 + $0x6b0] sm:$0xff]
    %v760 = vld [vmem:[#allocation8 + $0x6b8] sm:$0xff]
    %v761 = vld [vmem:[#allocation8 + $0x6c0] sm:$0xff]
    %v762 = vld [vmem:[#allocation8 + $0x6c8] sm:$0xff]
    %v763 = vld [vmem:[#allocation8 + $0x6d0] sm:$0xff]
    %v764 = vld [vmem:[#allocation8 + $0x6d8] sm:$0xff]
    %v765 = vld [vmem:[#allocation8 + $0x6e0] sm:$0xff]
    %v766 = vld [vmem:[#allocation8 + $0x6e8] sm:$0xff]
    %v767 = vld [vmem:[#allocation8 + $0x6f0] sm:$0xff]
    %v768 = vld [vmem:[#allocation8 + $0x6f8] sm:$0xff]
    %v769 = vld [vmem:[#allocation8 + $0x700] sm:$0xff]
    %v770 = vld [vmem:[#allocation8 + $0x708] sm:$0xff]
    %v771 = vld [vmem:[#allocation8 + $0x710] sm:$0xff]
    %v772 = vld [vmem:[#allocation8 + $0x718] sm:$0xff]
    %v773 = vld [vmem:[#allocation8 + $0x720] sm:$0xff]
    %v774 = vld [vmem:[#allocation8 + $0x728] sm:$0xff]
    %v775 = vld [vmem:[#allocation8 + $0x730] sm:$0xff]
    %v776 = vld [vmem:[#allocation8 + $0x738] sm:$0xff]
    %v777 = vld [vmem:[#allocation8 + $0x740] sm:$0xff]
    %v778 = vld [vmem:[#allocation8 + $0x748] sm:$0xff]
    %v779 = vld [vmem:[#allocation8 + $0x750] sm:$0xff]
    %v780 = vld [vmem:[#allocation8 + $0x758] sm:$0xff]
    %v781 = vld [vmem:[#allocation8 + $0x760] sm:$0xff]
    %v782 = vld [vmem:[#allocation8 + $0x768] sm:$0xff]
    %v783 = vld [vmem:[#allocation8 + $0x770] sm:$0xff]
    %v784 = vld [vmem:[#allocation8 + $0x778] sm:$0xff]
    %v785 = vld [vmem:[#allocation8 + $0x780] sm:$0xff]
    %v786 = vld [vmem:[#allocation8 + $0x788] sm:$0xff]
    %v787 = vld [vmem:[#allocation8 + $0x790] sm:$0xff]
    %v788 = vld [vmem:[#allocation8 + $0x798] sm:$0xff]
    %v789 = vld [vmem:[#allocation8 + $0x7a0] sm:$0xff]
    %v790 = vld [vmem:[#allocation8 + $0x7a8] sm:$0xff]
    %v791 = vld [vmem:[#allocation8 + $0x7b0] sm:$0xff]
    %v792 = vld [vmem:[#allocation8 + $0x7b8] sm:$0xff]
    %v793 = vld [vmem:[#allocation8 + $0x7c0] sm:$0xff]
    %v794 = vld [vmem:[#allocation8 + $0x7c8] sm:$0xff]
    %v795 = vld [vmem:[#allocation8 + $0x7d0] sm:$0xff]
    %v796 = vld [vmem:[#allocation8 + $0x7d8] sm:$0xff]
    %v797 = vld [vmem:[#allocation8 + $0x7e0] sm:$0xff]
    %v798 = vld [vmem:[#allocation8 + $0x7e8] sm:$0xff]
    %v799 = vld [vmem:[#allocation8 + $0x7f0] sm:$0xff]
    %v800 = vld [vmem:[#allocation8 + $0x7f8] sm:$0xff]
    %v801 = vld [vmem:[#allocation8 + $0x800] sm:$0xff]
    %v802 = vld [vmem:[#allocation8 + $0x808] sm:$0xff]
    %v803 = vld [vmem:[#allocation8 + $0x810] sm:$0xff]
    %v804 = vld [vmem:[#allocation8 + $0x818] sm:$0xff]
    %v805 = vld [vmem:[#allocation8 + $0x820] sm:$0xff]
    %v806 = vld [vmem:[#allocation8 + $0x828] sm:$0xff]
    %v807 = vld [vmem:[#allocation8 + $0x830] sm:$0xff]
    %v808 = vld [vmem:[#allocation8 + $0x838] sm:$0xff]
    %v809 = vld [vmem:[#allocation8 + $0x840] sm:$0xff]
    %v810 = vld [vmem:[#allocation8 + $0x848] sm:$0xff]
    %v811 = vld [vmem:[#allocation8 + $0x850] sm:$0xff]
    %v812 = vld [vmem:[#allocation8 + $0x858] sm:$0xff]
    %v813 = vld [vmem:[#allocation8 + $0x860] sm:$0xff]
    %v814 = vld [vmem:[#allocation8 + $0x868] sm:$0xff]
    %v815 = vld [vmem:[#allocation8 + $0x870] sm:$0xff]
    %v816 = vld [vmem:[#allocation8 + $0x878] sm:$0xff]
    %v817 = vld [vmem:[#allocation8 + $0x880] sm:$0xff]
    %v818 = vld [vmem:[#allocation8 + $0x888] sm:$0xff]
    %v819 = vld [vmem:[#allocation8 + $0x890] sm:$0xff]
    %v820 = vld [vmem:[#allocation8 + $0x898] sm:$0xff]
    %v821 = vld [vmem:[#allocation8 + $0x8a0] sm:$0xff]
    %v822 = vld [vmem:[#allocation8 + $0x8a8] sm:$0xff]
    %v823 = vld [vmem:[#allocation8 + $0x8b0] sm:$0xff]
    %v824 = vld [vmem:[#allocation8 + $0x8b8] sm:$0xff]
    %v825 = vld [vmem:[#allocation8 + $0x8c0] sm:$0xff]
    %v826 = vld [vmem:[#allocation8 + $0x8c8] sm:$0xff]
    %v827 = vld [vmem:[#allocation8 + $0x8d0] sm:$0xff]
    %v828 = vld [vmem:[#allocation8 + $0x8d8] sm:$0xff]
    %v829 = vld [vmem:[#allocation8 + $0x8e0] sm:$0xff]
    %v830 = vld [vmem:[#allocation8 + $0x8e8] sm:$0xff]
    %v831 = vld [vmem:[#allocation8 + $0x8f0] sm:$0xff]
    %v832 = vld [vmem:[#allocation8 + $0x8f8] sm:$0xff]
    %v833 = vld [vmem:[#allocation8 + $0x900] sm:$0xff]
    %v834 = vld [vmem:[#allocation8 + $0x908] sm:$0xff]
    %v835 = vld [vmem:[#allocation8 + $0x910] sm:$0xff]
    %v836 = vld [vmem:[#allocation8 + $0x918] sm:$0xff]
    %v837 = vld [vmem:[#allocation8 + $0x920] sm:$0xff]
    %v838 = vld [vmem:[#allocation8 + $0x928] sm:$0xff]
    %v839 = vld [vmem:[#allocation8 + $0x930] sm:$0xff]
    %v840 = vld [vmem:[#allocation8 + $0x938] sm:$0xff]
    %v841 = vld [vmem:[#allocation8 + $0x940] sm:$0xff]
    %v842 = vld [vmem:[#allocation8 + $0x948] sm:$0xff]
    %v843 = vld [vmem:[#allocation8 + $0x950] sm:$0xff]
    %v844 = vld [vmem:[#allocation8 + $0x958] sm:$0xff]
    %v845 = vld [vmem:[#allocation8 + $0x960] sm:$0xff]
    %v846 = vld [vmem:[#allocation8 + $0x968] sm:$0xff]
    %v847 = vld [vmem:[#allocation8 + $0x970] sm:$0xff]
    %v848 = vld [vmem:[#allocation8 + $0x978] sm:$0xff]
    %v849 = vld [vmem:[#allocation8 + $0x980] sm:$0xff]
    %v850 = vld [vmem:[#allocation8 + $0x988] sm:$0xff]
    %v851 = vld [vmem:[#allocation8 + $0x990] sm:$0xff]
    %v852 = vld [vmem:[#allocation8 + $0x998] sm:$0xff]
    %v853 = vld [vmem:[#allocation8 + $0x9a0] sm:$0xff]
    %v854 = vld [vmem:[#allocation8 + $0x9a8] sm:$0xff]
    %v855 = vld [vmem:[#allocation8 + $0x9b0] sm:$0xff]
    %v856 = vld [vmem:[#allocation8 + $0x9b8] sm:$0xff]
    %v857 = vld [vmem:[#allocation8 + $0x9c0] sm:$0xff]
    %v858 = vld [vmem:[#allocation8 + $0x9c8] sm:$0xff]
    %v859 = vld [vmem:[#allocation8 + $0x9d0] sm:$0xff]
    %v860 = vld [vmem:[#allocation8 + $0x9d8] sm:$0xff]
    %v861 = vld [vmem:[#allocation8 + $0x9e0] sm:$0xff]
    %v862 = vld [vmem:[#allocation8 + $0x9e8] sm:$0xff]
    %v863 = vld [vmem:[#allocation8 + $0x9f0] sm:$0xff]
    %v864 = vld [vmem:[#allocation8 + $0x9f8] sm:$0xff]
    %v865 = vld [vmem:[#allocation8 + $0xa00] sm:$0xff]
    %v866 = vld [vmem:[#allocation8 + $0xa08] sm:$0xff]
    %v867 = vld [vmem:[#allocation8 + $0xa10] sm:$0xff]
    %v868 = vld [vmem:[#allocation8 + $0xa18] sm:$0xff]
    %v869 = vld [vmem:[#allocation8 + $0xa20] sm:$0xff]
    %v870 = vld [vmem:[#allocation8 + $0xa28] sm:$0xff]
    %v871 = vld [vmem:[#allocation8 + $0xa30] sm:$0xff]
    %v872 = vld [vmem:[#allocation8 + $0xa38] sm:$0xff]
    %v873 = vld [vmem:[#allocation8 + $0xa40] sm:$0xff]
    %v874 = vld [vmem:[#allocation8 + $0xa48] sm:$0xff]
    %v875 = vld [vmem:[#allocation8 + $0xa50] sm:$0xff]
    %v876 = vld [vmem:[#allocation8 + $0xa58] sm:$0xff]
    %v877 = vld [vmem:[#allocation8 + $0xa60] sm:$0xff]
    %v878 = vld [vmem:[#allocation8 + $0xa68] sm:$0xff]
    %v879 = vld [vmem:[#allocation8 + $0xa70] sm:$0xff]
    %v880 = vld [vmem:[#allocation8 + $0xa78] sm:$0xff]
    %v881 = vld [vmem:[#allocation8 + $0xa80] sm:$0xff]
    %v882 = vld [vmem:[#allocation8 + $0xa88] sm:$0xff]
    %v883 = vld [vmem:[#allocation8 + $0xa90] sm:$0xff]
    %v884 = vld [vmem:[#allocation8 + $0xa98] sm:$0xff]
    %v885 = vld [vmem:[#allocation8 + $0xaa0] sm:$0xff]
    %v886 = vld [vmem:[#allocation8 + $0xaa8] sm:$0xff]
    %v887 = vld [vmem:[#allocation8 + $0xab0] sm:$0xff]
    %v888 = vld [vmem:[#allocation8 + $0xab8] sm:$0xff]
    %v889 = vld [vmem:[#allocation8 + $0xac0] sm:$0xff]
    %v890 = vld [vmem:[#allocation8 + $0xac8] sm:$0xff]
    %v891 = vld [vmem:[#allocation8 + $0xad0] sm:$0xff]
    %v892 = vld [vmem:[#allocation8 + $0xad8] sm:$0xff]
    %v893 = vld [vmem:[#allocation8 + $0xae0] sm:$0xff]
    %v894 = vld [vmem:[#allocation8 + $0xae8] sm:$0xff]
    %v895 = vld [vmem:[#allocation8 + $0xaf0] sm:$0xff]
    %v896 = vld [vmem:[#allocation8 + $0xaf8] sm:$0xff]
    %v897 = vld [vmem:[#allocation8 + $0xb00] sm:$0xff]
    %v898 = vld [vmem:[#allocation8 + $0xb08] sm:$0xff]
    %v899 = vld [vmem:[#allocation8 + $0xb10] sm:$0xff]
    %v900 = vld [vmem:[#allocation8 + $0xb18] sm:$0xff]
    %v901 = vld [vmem:[#allocation8 + $0xb20] sm:$0xff]
    %v902 = vld [vmem:[#allocation8 + $0xb28] sm:$0xff]
    %v903 = vld [vmem:[#allocation8 + $0xb30] sm:$0xff]
    %v904 = vld [vmem:[#allocation8 + $0xb38] sm:$0xff]
    %v905 = vld [vmem:[#allocation8 + $0xb40] sm:$0xff]
    %v906 = vld [vmem:[#allocation8 + $0xb48] sm:$0xff]
    %v907 = vld [vmem:[#allocation8 + $0xb50] sm:$0xff]
    %v908 = vld [vmem:[#allocation8 + $0xb58] sm:$0xff]
    %v909 = vld [vmem:[#allocation8 + $0xb60] sm:$0xff]
    %v910 = vld [vmem:[#allocation8 + $0xb68] sm:$0xff]
    %v911 = vld [vmem:[#allocation8 + $0xb70] sm:$0xff]
    %v912 = vld [vmem:[#allocation8 + $0xb78] sm:$0xff]
    %v913 = vld [vmem:[#allocation8 + $0xb80] sm:$0xff]
    %v914 = vld [vmem:[#allocation8 + $0xb88] sm:$0xff]
    %v915 = vld [vmem:[#allocation8 + $0xb90] sm:$0xff]
    %v916 = vld [vmem:[#allocation8 + $0xb98] sm:$0xff]
    %v917 = vld [vmem:[#allocation8 + $0xba0] sm:$0xff]
    %v918 = vld [vmem:[#allocation8 + $0xba8] sm:$0xff]
    %v919 = vld [vmem:[#allocation8 + $0xbb0] sm:$0xff]
    %v920 = vld [vmem:[#allocation8 + $0xbb8] sm:$0xff]
    %v921 = vld [vmem:[#allocation8 + $0xbc0] sm:$0xff]
    %v922 = vld [vmem:[#allocation8 + $0xbc8] sm:$0xff]
    %v923 = vld [vmem:[#allocation8 + $0xbd0] sm:$0xff]
    %v924 = vld [vmem:[#allocation8 + $0xbd8] sm:$0xff]
    %v925 = vld [vmem:[#allocation8 + $0xbe0] sm:$0xff]
    %v926 = vld [vmem:[#allocation8 + $0xbe8] sm:$0xff]
    %v927 = vld [vmem:[#allocation8 + $0xbf0] sm:$0xff]
    %v928 = vld [vmem:[#allocation8 + $0xbf8] sm:$0xff]
    %v929 = vld [vmem:[#allocation8 + $0xc00] sm:$0xff]
    %v930 = vld [vmem:[#allocation8 + $0xc08] sm:$0xff]
    %v931 = vld [vmem:[#allocation8 + $0xc10] sm:$0xff]
    %v932 = vld [vmem:[#allocation8 + $0xc18] sm:$0xff]
    %v933 = vld [vmem:[#allocation8 + $0xc20] sm:$0xff]
    %v934 = vld [vmem:[#allocation8 + $0xc28] sm:$0xff]
    %v935 = vld [vmem:[#allocation8 + $0xc30] sm:$0xff]
    %v936 = vld [vmem:[#allocation8 + $0xc38] sm:$0xff]
    %v937 = vld [vmem:[#allocation8 + $0xc40] sm:$0xff]
    %v938 = vld [vmem:[#allocation8 + $0xc48] sm:$0xff]
    %v939 = vld [vmem:[#allocation8 + $0xc50] sm:$0xff]
    %v940 = vld [vmem:[#allocation8 + $0xc58] sm:$0xff]
    %v941 = vld [vmem:[#allocation8 + $0xc60] sm:$0xff]
    %v942 = vld [vmem:[#allocation8 + $0xc68] sm:$0xff]
    %v943 = vld [vmem:[#allocation8 + $0xc70] sm:$0xff]
    %v944 = vld [vmem:[#allocation8 + $0xc78] sm:$0xff]
    %v945 = vld [vmem:[#allocation8 + $0xc80] sm:$0xff]
    %v946 = vld [vmem:[#allocation8 + $0xc88] sm:$0xff]
    %v947 = vld [vmem:[#allocation8 + $0xc90] sm:$0xff]
    %v948 = vld [vmem:[#allocation8 + $0xc98] sm:$0xff]
    %v949 = vld [vmem:[#allocation8 + $0xca0] sm:$0xff]
    %v950 = vld [vmem:[#allocation8 + $0xca8] sm:$0xff]
    %v951 = vld [vmem:[#allocation8 + $0xcb0] sm:$0xff]
    %v952 = vld [vmem:[#allocation8 + $0xcb8] sm:$0xff]
    %v953 = vld [vmem:[#allocation8 + $0xcc0] sm:$0xff]
    %v954 = vld [vmem:[#allocation8 + $0xcc8] sm:$0xff]
    %v955 = vld [vmem:[#allocation8 + $0xcd0] sm:$0xff]
    %v956 = vld [vmem:[#allocation8 + $0xcd8] sm:$0xff]
    %v957 = vld [vmem:[#allocation8 + $0xce0] sm:$0xff]
    %v958 = vld [vmem:[#allocation8 + $0xce8] sm:$0xff]
    %v959 = vld [vmem:[#allocation8 + $0xcf0] sm:$0xff]
    %v960 = vld [vmem:[#allocation8 + $0xcf8] sm:$0xff]
    %v961 = vld [vmem:[#allocation8 + $0xd00] sm:$0xff]
    %v962 = vld [vmem:[#allocation8 + $0xd08] sm:$0xff]
    %v963 = vld [vmem:[#allocation8 + $0xd10] sm:$0xff]
    %v964 = vld [vmem:[#allocation8 + $0xd18] sm:$0xff]
    %v965 = vld [vmem:[#allocation8 + $0xd20] sm:$0xff]
    %v966 = vld [vmem:[#allocation8 + $0xd28] sm:$0xff]
    %v967 = vld [vmem:[#allocation8 + $0xd30] sm:$0xff]
    %v968 = vld [vmem:[#allocation8 + $0xd38] sm:$0xff]
    %v969 = vld [vmem:[#allocation8 + $0xd40] sm:$0xff]
    %v970 = vld [vmem:[#allocation8 + $0xd48] sm:$0xff]
    %v971 = vld [vmem:[#allocation8 + $0xd50] sm:$0xff]
    %v972 = vld [vmem:[#allocation8 + $0xd58] sm:$0xff]
    %v973 = vld [vmem:[#allocation8 + $0xd60] sm:$0xff]
    %v974 = vld [vmem:[#allocation8 + $0xd68] sm:$0xff]
    %v975 = vld [vmem:[#allocation8 + $0xd70] sm:$0xff]
    %v976 = vld [vmem:[#allocation8 + $0xd78] sm:$0xff]
    %v977 = vld [vmem:[#allocation8 + $0xd80] sm:$0xff]
    %v978 = vld [vmem:[#allocation8 + $0xd88] sm:$0xff]
    %v979 = vld [vmem:[#allocation8 + $0xd90] sm:$0xff]
    %v980 = vld [vmem:[#allocation8 + $0xd98] sm:$0xff]
    %v981 = vld [vmem:[#allocation8 + $0xda0] sm:$0xff]
    %v982 = vld [vmem:[#allocation8 + $0xda8] sm:$0xff]
    %v983 = vld [vmem:[#allocation8 + $0xdb0] sm:$0xff]
    %v984 = vld [vmem:[#allocation8 + $0xdb8] sm:$0xff]
    %v985 = vld [vmem:[#allocation8 + $0xdc0] sm:$0xff]
    %v986 = vld [vmem:[#allocation8 + $0xdc8] sm:$0xff]
    %v987 = vld [vmem:[#allocation8 + $0xdd0] sm:$0xff]
    %v988 = vld [vmem:[#allocation8 + $0xdd8] sm:$0xff]
    %v989 = vld [vmem:[#allocation8 + $0xde0] sm:$0xff]
    %v990 = vld [vmem:[#allocation8 + $0xde8] sm:$0xff]
    %v991 = vld [vmem:[#allocation8 + $0xdf0] sm:$0xff]
    %v992 = vld [vmem:[#allocation8 + $0xdf8] sm:$0xff]
    %v993 = vld [vmem:[#allocation8 + $0xe00] sm:$0xff]
    %v994 = vld [vmem:[#allocation8 + $0xe08] sm:$0xff]
    %v995 = vld [vmem:[#allocation8 + $0xe10] sm:$0xff]
    %v996 = vld [vmem:[#allocation8 + $0xe18] sm:$0xff]
    %v997 = vld [vmem:[#allocation8 + $0xe20] sm:$0xff]
    %v998 = vld [vmem:[#allocation8 + $0xe28] sm:$0xff]
    %v999 = vld [vmem:[#allocation8 + $0xe30] sm:$0xff]
    %v1000 = vld [vmem:[#allocation8 + $0xe38] sm:$0xff]
    %v1001 = vld [vmem:[#allocation8 + $0xe40] sm:$0xff]
    %v1002 = vld [vmem:[#allocation8 + $0xe48] sm:$0xff]
    %v1003 = vld [vmem:[#allocation8 + $0xe50] sm:$0xff]
    %v1004 = vld [vmem:[#allocation8 + $0xe58] sm:$0xff]
    %v1005 = vld [vmem:[#allocation8 + $0xe60] sm:$0xff]
    %v1006 = vld [vmem:[#allocation8 + $0xe68] sm:$0xff]
    %v1007 = vld [vmem:[#allocation8 + $0xe70] sm:$0xff]
    %v1008 = vld [vmem:[#allocation8 + $0xe78] sm:$0xff]
    %v1009 = vld [vmem:[#allocation8 + $0xe80] sm:$0xff]
    %v1010 = vld [vmem:[#allocation8 + $0xe88] sm:$0xff]
    %v1011 = vld [vmem:[#allocation8 + $0xe90] sm:$0xff]
    %v1012 = vld [vmem:[#allocation8 + $0xe98] sm:$0xff]
    %v1013 = vld [vmem:[#allocation8 + $0xea0] sm:$0xff]
    %v1014 = vld [vmem:[#allocation8 + $0xea8] sm:$0xff]
    %v1015 = vld [vmem:[#allocation8 + $0xeb0] sm:$0xff]
    %v1016 = vld [vmem:[#allocation8 + $0xeb8] sm:$0xff]
    %v1017 = vld [vmem:[#allocation8 + $0xec0] sm:$0xff]
    %v1018 = vld [vmem:[#allocation8 + $0xec8] sm:$0xff]
    %v1019 = vld [vmem:[#allocation8 + $0xed0] sm:$0xff]
    %v1020 = vld [vmem:[#allocation8 + $0xed8] sm:$0xff]
    %v1021 = vld [vmem:[#allocation8 + $0xee0] sm:$0xff]
    %v1022 = vld [vmem:[#allocation8 + $0xee8] sm:$0xff]
    %v1023 = vld [vmem:[#allocation8 + $0xef0] sm:$0xff]
    %v1024 = vld [vmem:[#allocation8 + $0xef8] sm:$0xff]
    %v1025 = vld [vmem:[#allocation8 + $0xf00] sm:$0xff]
    %v1026 = vld [vmem:[#allocation8 + $0xf08] sm:$0xff]
    %v1027 = vld [vmem:[#allocation8 + $0xf10] sm:$0xff]
    %v1028 = vld [vmem:[#allocation8 + $0xf18] sm:$0xff]
    %v1029 = vld [vmem:[#allocation8 + $0xf20] sm:$0xff]
    %v1030 = vld [vmem:[#allocation8 + $0xf28] sm:$0xff]
    %v1031 = vld [vmem:[#allocation8 + $0xf30] sm:$0xff]
    %v1032 = vld [vmem:[#allocation8 + $0xf38] sm:$0xff]
    %v1033 = vld [vmem:[#allocation8 + $0xf40] sm:$0xff]
    %v1034 = vld [vmem:[#allocation8 + $0xf48] sm:$0xff]
    %v1035 = vld [vmem:[#allocation8 + $0xf50] sm:$0xff]
    %v1036 = vld [vmem:[#allocation8 + $0xf58] sm:$0xff]
    %v1037 = vld [vmem:[#allocation8 + $0xf60] sm:$0xff]
    %v1038 = vld [vmem:[#allocation8 + $0xf68] sm:$0xff]
    %v1039 = vld [vmem:[#allocation8 + $0xf70] sm:$0xff]
    %v1040 = vld [vmem:[#allocation8 + $0xf78] sm:$0xff]
    %v1041 = vld [vmem:[#allocation8 + $0xf80] sm:$0xff]
    %v1042 = vld [vmem:[#allocation8 + $0xf88] sm:$0xff]
    %v1043 = vld [vmem:[#allocation8 + $0xf90] sm:$0xff]
    %v1044 = vld [vmem:[#allocation8 + $0xf98] sm:$0xff]
    %v1045 = vld [vmem:[#allocation8 + $0xfa0] sm:$0xff]
    %v1046 = vld [vmem:[#allocation8 + $0xfa8] sm:$0xff]
    %v1047 = vld [vmem:[#allocation8 + $0xfb0] sm:$0xff]
    %v1048 = vld [vmem:[#allocation8 + $0xfb8] sm:$0xff]
    %v1049 = vld [vmem:[#allocation8 + $0xfc0] sm:$0xff]
    %v1050 = vld [vmem:[#allocation8 + $0xfc8] sm:$0xff]
    %v1051 = vld [vmem:[#allocation8 + $0xfd0] sm:$0xff]
    %v1052 = vld [vmem:[#allocation8 + $0xfd8] sm:$0xff]
    %v1053 = vld [vmem:[#allocation8 + $0xfe0] sm:$0xff]
    %v1054 = vld [vmem:[#allocation8 + $0xfe8] sm:$0xff]
    %v1055 = vld [vmem:[#allocation8 + $0xff0] sm:$0xff]
    %v1056 = vld [vmem:[#allocation8 + $0xff8] sm:$0xff]
    %v1057 = vld [vmem:[#allocation10] sm:$0xff]
    %v1059 = vlaneseq
    %v1060 = vshrl.u32 %v1059, 7
    %v1061 = vsub.s32 0, %v1060
    %v1062 = vrot.slane %v1057, %v1061
    %v1063 = vlaneseq
    %v1064 = vshrl.u32 %v1063, 7
    %v1065 = vsub.s32 1, %v1064
    %v1066 = vrot.slane %v1057, %v1065
    %v1067 = vlaneseq
    %v1068 = vshrl.u32 %v1067, 7
    %v1069 = vsub.s32 2, %v1068
    %v1070 = vrot.slane %v1057, %v1069
    %v1071 = vlaneseq
    %v1072 = vshrl.u32 %v1071, 7
    %v1073 = vsub.s32 3, %v1072
    %v1074 = vrot.slane %v1057, %v1073
    %v1075 = vlaneseq
    %v1076 = vshrl.u32 %v1075, 7
    %v1077 = vsub.s32 4, %v1076
    %v1078 = vrot.slane %v1057, %v1077
    %v1079 = vlaneseq
    %v1080 = vshrl.u32 %v1079, 7
    %v1081 = vsub.s32 5, %v1080
    %v1082 = vrot.slane %v1057, %v1081
    %v1083 = vlaneseq
    %v1084 = vshrl.u32 %v1083, 7
    %v1085 = vsub.s32 6, %v1084
    %v1086 = vrot.slane %v1057, %v1085
    %v1087 = vlaneseq
    %v1088 = vshrl.u32 %v1087, 7
    %v1089 = vsub.s32 7, %v1088
    %v1090 = vrot.slane %v1057, %v1089
    %v1611 = vunpack.c.l.b16 %v545
    %v1612 = vunpack.c.h.b16 %v545
    %v1613 = vunpack.c.l.b16 %v546
    %v1614 = vunpack.c.h.b16 %v546
    %v1615 = vunpack.c.l.b16 %v547
    %v1616 = vunpack.c.h.b16 %v547
    %v1617 = vunpack.c.l.b16 %v548
    %v1618 = vunpack.c.h.b16 %v548
    %v1619 = vunpack.c.l.b16 %v549
    %v1620 = vunpack.c.h.b16 %v549
    %v1621 = vunpack.c.l.b16 %v550
    %v1622 = vunpack.c.h.b16 %v550
    %v1623 = vunpack.c.l.b16 %v551
    %v1624 = vunpack.c.h.b16 %v551
    %v1625 = vunpack.c.l.b16 %v552
    %v1626 = vunpack.c.h.b16 %v552
    %v1627 = vunpack.c.l.b16 %v553
    %v1628 = vunpack.c.h.b16 %v553
    %v1629 = vunpack.c.l.b16 %v554
    %v1630 = vunpack.c.h.b16 %v554
    %v1631 = vunpack.c.l.b16 %v555
    %v1632 = vunpack.c.h.b16 %v555
    %v1633 = vunpack.c.l.b16 %v556
    %v1634 = vunpack.c.h.b16 %v556
    %v1635 = vunpack.c.l.b16 %v557
    %v1636 = vunpack.c.h.b16 %v557
    %v1637 = vunpack.c.l.b16 %v558
    %v1638 = vunpack.c.h.b16 %v558
    %v1639 = vunpack.c.l.b16 %v559
    %v1640 = vunpack.c.h.b16 %v559
    %v1641 = vunpack.c.l.b16 %v560
    %v1642 = vunpack.c.h.b16 %v560
    %v1643 = vunpack.c.l.b16 %v561
    %v1644 = vunpack.c.h.b16 %v561
    %v1645 = vunpack.c.l.b16 %v562
    %v1646 = vunpack.c.h.b16 %v562
    %v1647 = vunpack.c.l.b16 %v563
    %v1648 = vunpack.c.h.b16 %v563
    %v1649 = vunpack.c.l.b16 %v564
    %v1650 = vunpack.c.h.b16 %v564
    %v1651 = vunpack.c.l.b16 %v565
    %v1652 = vunpack.c.h.b16 %v565
    %v1653 = vunpack.c.l.b16 %v566
    %v1654 = vunpack.c.h.b16 %v566
    %v1655 = vunpack.c.l.b16 %v567
    %v1656 = vunpack.c.h.b16 %v567
    %v1657 = vunpack.c.l.b16 %v568
    %v1658 = vunpack.c.h.b16 %v568
    %v1659 = vunpack.c.l.b16 %v569
    %v1660 = vunpack.c.h.b16 %v569
    %v1661 = vunpack.c.l.b16 %v570
    %v1662 = vunpack.c.h.b16 %v570
    %v1663 = vunpack.c.l.b16 %v571
    %v1664 = vunpack.c.h.b16 %v571
    %v1665 = vunpack.c.l.b16 %v572
    %v1666 = vunpack.c.h.b16 %v572
    %v1667 = vunpack.c.l.b16 %v573
    %v1668 = vunpack.c.h.b16 %v573
    %v1669 = vunpack.c.l.b16 %v574
    %v1670 = vunpack.c.h.b16 %v574
    %v1671 = vunpack.c.l.b16 %v575
    %v1672 = vunpack.c.h.b16 %v575
    %v1673 = vunpack.c.l.b16 %v576
    %v1674 = vunpack.c.h.b16 %v576
    %v1675 = vunpack.c.l.b16 %v577
    %v1676 = vunpack.c.h.b16 %v577
    %v1677 = vunpack.c.l.b16 %v578
    %v1678 = vunpack.c.h.b16 %v578
    %v1679 = vunpack.c.l.b16 %v579
    %v1680 = vunpack.c.h.b16 %v579
    %v1681 = vunpack.c.l.b16 %v580
    %v1682 = vunpack.c.h.b16 %v580
    %v1683 = vunpack.c.l.b16 %v581
    %v1684 = vunpack.c.h.b16 %v581
    %v1685 = vunpack.c.l.b16 %v582
    %v1686 = vunpack.c.h.b16 %v582
    %v1687 = vunpack.c.l.b16 %v583
    %v1688 = vunpack.c.h.b16 %v583
    %v1689 = vunpack.c.l.b16 %v584
    %v1690 = vunpack.c.h.b16 %v584
    %v1691 = vunpack.c.l.b16 %v585
    %v1692 = vunpack.c.h.b16 %v585
    %v1693 = vunpack.c.l.b16 %v586
    %v1694 = vunpack.c.h.b16 %v586
    %v1695 = vunpack.c.l.b16 %v587
    %v1696 = vunpack.c.h.b16 %v587
    %v1697 = vunpack.c.l.b16 %v588
    %v1698 = vunpack.c.h.b16 %v588
    %v1699 = vunpack.c.l.b16 %v589
    %v1700 = vunpack.c.h.b16 %v589
    %v1701 = vunpack.c.l.b16 %v590
    %v1702 = vunpack.c.h.b16 %v590
    %v1703 = vunpack.c.l.b16 %v591
    %v1704 = vunpack.c.h.b16 %v591
    %v1705 = vunpack.c.l.b16 %v592
    %v1706 = vunpack.c.h.b16 %v592
    %v1707 = vunpack.c.l.b16 %v593
    %v1708 = vunpack.c.h.b16 %v593
    %v1709 = vunpack.c.l.b16 %v594
    %v1710 = vunpack.c.h.b16 %v594
    %v1711 = vunpack.c.l.b16 %v595
    %v1712 = vunpack.c.h.b16 %v595
    %v1713 = vunpack.c.l.b16 %v596
    %v1714 = vunpack.c.h.b16 %v596
    %v1715 = vunpack.c.l.b16 %v597
    %v1716 = vunpack.c.h.b16 %v597
    %v1717 = vunpack.c.l.b16 %v598
    %v1718 = vunpack.c.h.b16 %v598
    %v1719 = vunpack.c.l.b16 %v599
    %v1720 = vunpack.c.h.b16 %v599
    %v1721 = vunpack.c.l.b16 %v600
    %v1722 = vunpack.c.h.b16 %v600
    %v1723 = vunpack.c.l.b16 %v601
    %v1724 = vunpack.c.h.b16 %v601
    %v1725 = vunpack.c.l.b16 %v602
    %v1726 = vunpack.c.h.b16 %v602
    %v1727 = vunpack.c.l.b16 %v603
    %v1728 = vunpack.c.h.b16 %v603
    %v1729 = vunpack.c.l.b16 %v604
    %v1730 = vunpack.c.h.b16 %v604
    %v1731 = vunpack.c.l.b16 %v605
    %v1732 = vunpack.c.h.b16 %v605
    %v1733 = vunpack.c.l.b16 %v606
    %v1734 = vunpack.c.h.b16 %v606
    %v1735 = vunpack.c.l.b16 %v607
    %v1736 = vunpack.c.h.b16 %v607
    %v1737 = vunpack.c.l.b16 %v608
    %v1738 = vunpack.c.h.b16 %v608
    %v1739 = vunpack.c.l.b16 %v609
    %v1740 = vunpack.c.h.b16 %v609
    %v1741 = vunpack.c.l.b16 %v610
    %v1742 = vunpack.c.h.b16 %v610
    %v1743 = vunpack.c.l.b16 %v611
    %v1744 = vunpack.c.h.b16 %v611
    %v1745 = vunpack.c.l.b16 %v612
    %v1746 = vunpack.c.h.b16 %v612
    %v1747 = vunpack.c.l.b16 %v613
    %v1748 = vunpack.c.h.b16 %v613
    %v1749 = vunpack.c.l.b16 %v614
    %v1750 = vunpack.c.h.b16 %v614
    %v1751 = vunpack.c.l.b16 %v615
    %v1752 = vunpack.c.h.b16 %v615
    %v1753 = vunpack.c.l.b16 %v616
    %v1754 = vunpack.c.h.b16 %v616
    %v1755 = vunpack.c.l.b16 %v617
    %v1756 = vunpack.c.h.b16 %v617
    %v1757 = vunpack.c.l.b16 %v618
    %v1758 = vunpack.c.h.b16 %v618
    %v1759 = vunpack.c.l.b16 %v619
    %v1760 = vunpack.c.h.b16 %v619
    %v1761 = vunpack.c.l.b16 %v620
    %v1762 = vunpack.c.h.b16 %v620
    %v1763 = vunpack.c.l.b16 %v621
    %v1764 = vunpack.c.h.b16 %v621
    %v1765 = vunpack.c.l.b16 %v622
    %v1766 = vunpack.c.h.b16 %v622
    %v1767 = vunpack.c.l.b16 %v623
    %v1768 = vunpack.c.h.b16 %v623
    %v1769 = vunpack.c.l.b16 %v624
    %v1770 = vunpack.c.h.b16 %v624
    %v1771 = vunpack.c.l.b16 %v625
    %v1772 = vunpack.c.h.b16 %v625
    %v1773 = vunpack.c.l.b16 %v626
    %v1774 = vunpack.c.h.b16 %v626
    %v1775 = vunpack.c.l.b16 %v627
    %v1776 = vunpack.c.h.b16 %v627
    %v1777 = vunpack.c.l.b16 %v628
    %v1778 = vunpack.c.h.b16 %v628
    %v1779 = vunpack.c.l.b16 %v629
    %v1780 = vunpack.c.h.b16 %v629
    %v1781 = vunpack.c.l.b16 %v630
    %v1782 = vunpack.c.h.b16 %v630
    %v1783 = vunpack.c.l.b16 %v631
    %v1784 = vunpack.c.h.b16 %v631
    %v1785 = vunpack.c.l.b16 %v632
    %v1786 = vunpack.c.h.b16 %v632
    %v1787 = vunpack.c.l.b16 %v633
    %v1788 = vunpack.c.h.b16 %v633
    %v1789 = vunpack.c.l.b16 %v634
    %v1790 = vunpack.c.h.b16 %v634
    %v1791 = vunpack.c.l.b16 %v635
    %v1792 = vunpack.c.h.b16 %v635
    %v1793 = vunpack.c.l.b16 %v636
    %v1794 = vunpack.c.h.b16 %v636
    %v1795 = vunpack.c.l.b16 %v637
    %v1796 = vunpack.c.h.b16 %v637
    %v1797 = vunpack.c.l.b16 %v638
    %v1798 = vunpack.c.h.b16 %v638
    %v1799 = vunpack.c.l.b16 %v639
    %v1800 = vunpack.c.h.b16 %v639
    %v1801 = vunpack.c.l.b16 %v640
    %v1802 = vunpack.c.h.b16 %v640
    %v1803 = vunpack.c.l.b16 %v641
    %v1804 = vunpack.c.h.b16 %v641
    %v1805 = vunpack.c.l.b16 %v642
    %v1806 = vunpack.c.h.b16 %v642
    %v1807 = vunpack.c.l.b16 %v643
    %v1808 = vunpack.c.h.b16 %v643
    %v1809 = vunpack.c.l.b16 %v644
    %v1810 = vunpack.c.h.b16 %v644
    %v1811 = vunpack.c.l.b16 %v645
    %v1812 = vunpack.c.h.b16 %v645
    %v1813 = vunpack.c.l.b16 %v646
    %v1814 = vunpack.c.h.b16 %v646
    %v1815 = vunpack.c.l.b16 %v647
    %v1816 = vunpack.c.h.b16 %v647
    %v1817 = vunpack.c.l.b16 %v648
    %v1818 = vunpack.c.h.b16 %v648
    %v1819 = vunpack.c.l.b16 %v649
    %v1820 = vunpack.c.h.b16 %v649
    %v1821 = vunpack.c.l.b16 %v650
    %v1822 = vunpack.c.h.b16 %v650
    %v1823 = vunpack.c.l.b16 %v651
    %v1824 = vunpack.c.h.b16 %v651
    %v1825 = vunpack.c.l.b16 %v652
    %v1826 = vunpack.c.h.b16 %v652
    %v1827 = vunpack.c.l.b16 %v653
    %v1828 = vunpack.c.h.b16 %v653
    %v1829 = vunpack.c.l.b16 %v654
    %v1830 = vunpack.c.h.b16 %v654
    %v1831 = vunpack.c.l.b16 %v655
    %v1832 = vunpack.c.h.b16 %v655
    %v1833 = vunpack.c.l.b16 %v656
    %v1834 = vunpack.c.h.b16 %v656
    %v1835 = vunpack.c.l.b16 %v657
    %v1836 = vunpack.c.h.b16 %v657
    %v1837 = vunpack.c.l.b16 %v658
    %v1838 = vunpack.c.h.b16 %v658
    %v1839 = vunpack.c.l.b16 %v659
    %v1840 = vunpack.c.h.b16 %v659
    %v1841 = vunpack.c.l.b16 %v660
    %v1842 = vunpack.c.h.b16 %v660
    %v1843 = vunpack.c.l.b16 %v661
    %v1844 = vunpack.c.h.b16 %v661
    %v1845 = vunpack.c.l.b16 %v662
    %v1846 = vunpack.c.h.b16 %v662
    %v1847 = vunpack.c.l.b16 %v663
    %v1848 = vunpack.c.h.b16 %v663
    %v1849 = vunpack.c.l.b16 %v664
    %v1850 = vunpack.c.h.b16 %v664
    %v1851 = vunpack.c.l.b16 %v665
    %v1852 = vunpack.c.h.b16 %v665
    %v1853 = vunpack.c.l.b16 %v666
    %v1854 = vunpack.c.h.b16 %v666
    %v1855 = vunpack.c.l.b16 %v667
    %v1856 = vunpack.c.h.b16 %v667
    %v1857 = vunpack.c.l.b16 %v668
    %v1858 = vunpack.c.h.b16 %v668
    %v1859 = vunpack.c.l.b16 %v669
    %v1860 = vunpack.c.h.b16 %v669
    %v1861 = vunpack.c.l.b16 %v670
    %v1862 = vunpack.c.h.b16 %v670
    %v1863 = vunpack.c.l.b16 %v671
    %v1864 = vunpack.c.h.b16 %v671
    %v1865 = vunpack.c.l.b16 %v672
    %v1866 = vunpack.c.h.b16 %v672
    %v1867 = vunpack.c.l.b16 %v673
    %v1868 = vunpack.c.h.b16 %v673
    %v1869 = vunpack.c.l.b16 %v674
    %v1870 = vunpack.c.h.b16 %v674
    %v1871 = vunpack.c.l.b16 %v675
    %v1872 = vunpack.c.h.b16 %v675
    %v1873 = vunpack.c.l.b16 %v676
    %v1874 = vunpack.c.h.b16 %v676
    %v1875 = vunpack.c.l.b16 %v677
    %v1876 = vunpack.c.h.b16 %v677
    %v1877 = vunpack.c.l.b16 %v678
    %v1878 = vunpack.c.h.b16 %v678
    %v1879 = vunpack.c.l.b16 %v679
    %v1880 = vunpack.c.h.b16 %v679
    %v1881 = vunpack.c.l.b16 %v680
    %v1882 = vunpack.c.h.b16 %v680
    %v1883 = vunpack.c.l.b16 %v681
    %v1884 = vunpack.c.h.b16 %v681
    %v1885 = vunpack.c.l.b16 %v682
    %v1886 = vunpack.c.h.b16 %v682
    %v1887 = vunpack.c.l.b16 %v683
    %v1888 = vunpack.c.h.b16 %v683
    %v1889 = vunpack.c.l.b16 %v684
    %v1890 = vunpack.c.h.b16 %v684
    %v1891 = vunpack.c.l.b16 %v685
    %v1892 = vunpack.c.h.b16 %v685
    %v1893 = vunpack.c.l.b16 %v686
    %v1894 = vunpack.c.h.b16 %v686
    %v1895 = vunpack.c.l.b16 %v687
    %v1896 = vunpack.c.h.b16 %v687
    %v1897 = vunpack.c.l.b16 %v688
    %v1898 = vunpack.c.h.b16 %v688
    %v1899 = vunpack.c.l.b16 %v689
    %v1900 = vunpack.c.h.b16 %v689
    %v1901 = vunpack.c.l.b16 %v690
    %v1902 = vunpack.c.h.b16 %v690
    %v1903 = vunpack.c.l.b16 %v691
    %v1904 = vunpack.c.h.b16 %v691
    %v1905 = vunpack.c.l.b16 %v692
    %v1906 = vunpack.c.h.b16 %v692
    %v1907 = vunpack.c.l.b16 %v693
    %v1908 = vunpack.c.h.b16 %v693
    %v1909 = vunpack.c.l.b16 %v694
    %v1910 = vunpack.c.h.b16 %v694
    %v1911 = vunpack.c.l.b16 %v695
    %v1912 = vunpack.c.h.b16 %v695
    %v1913 = vunpack.c.l.b16 %v696
    %v1914 = vunpack.c.h.b16 %v696
    %v1915 = vunpack.c.l.b16 %v697
    %v1916 = vunpack.c.h.b16 %v697
    %v1917 = vunpack.c.l.b16 %v698
    %v1918 = vunpack.c.h.b16 %v698
    %v1919 = vunpack.c.l.b16 %v699
    %v1920 = vunpack.c.h.b16 %v699
    %v1921 = vunpack.c.l.b16 %v700
    %v1922 = vunpack.c.h.b16 %v700
    %v1923 = vunpack.c.l.b16 %v701
    %v1924 = vunpack.c.h.b16 %v701
    %v1925 = vunpack.c.l.b16 %v702
    %v1926 = vunpack.c.h.b16 %v702
    %v1927 = vunpack.c.l.b16 %v703
    %v1928 = vunpack.c.h.b16 %v703
    %v1929 = vunpack.c.l.b16 %v704
    %v1930 = vunpack.c.h.b16 %v704
    %v1931 = vunpack.c.l.b16 %v705
    %v1932 = vunpack.c.h.b16 %v705
    %v1933 = vunpack.c.l.b16 %v706
    %v1934 = vunpack.c.h.b16 %v706
    %v1935 = vunpack.c.l.b16 %v707
    %v1936 = vunpack.c.h.b16 %v707
    %v1937 = vunpack.c.l.b16 %v708
    %v1938 = vunpack.c.h.b16 %v708
    %v1939 = vunpack.c.l.b16 %v709
    %v1940 = vunpack.c.h.b16 %v709
    %v1941 = vunpack.c.l.b16 %v710
    %v1942 = vunpack.c.h.b16 %v710
    %v1943 = vunpack.c.l.b16 %v711
    %v1944 = vunpack.c.h.b16 %v711
    %v1945 = vunpack.c.l.b16 %v712
    %v1946 = vunpack.c.h.b16 %v712
    %v1947 = vunpack.c.l.b16 %v713
    %v1948 = vunpack.c.h.b16 %v713
    %v1949 = vunpack.c.l.b16 %v714
    %v1950 = vunpack.c.h.b16 %v714
    %v1951 = vunpack.c.l.b16 %v715
    %v1952 = vunpack.c.h.b16 %v715
    %v1953 = vunpack.c.l.b16 %v716
    %v1954 = vunpack.c.h.b16 %v716
    %v1955 = vunpack.c.l.b16 %v717
    %v1956 = vunpack.c.h.b16 %v717
    %v1957 = vunpack.c.l.b16 %v718
    %v1958 = vunpack.c.h.b16 %v718
    %v1959 = vunpack.c.l.b16 %v719
    %v1960 = vunpack.c.h.b16 %v719
    %v1961 = vunpack.c.l.b16 %v720
    %v1962 = vunpack.c.h.b16 %v720
    %v1963 = vunpack.c.l.b16 %v721
    %v1964 = vunpack.c.h.b16 %v721
    %v1965 = vunpack.c.l.b16 %v722
    %v1966 = vunpack.c.h.b16 %v722
    %v1967 = vunpack.c.l.b16 %v723
    %v1968 = vunpack.c.h.b16 %v723
    %v1969 = vunpack.c.l.b16 %v724
    %v1970 = vunpack.c.h.b16 %v724
    %v1971 = vunpack.c.l.b16 %v725
    %v1972 = vunpack.c.h.b16 %v725
    %v1973 = vunpack.c.l.b16 %v726
    %v1974 = vunpack.c.h.b16 %v726
    %v1975 = vunpack.c.l.b16 %v727
    %v1976 = vunpack.c.h.b16 %v727
    %v1977 = vunpack.c.l.b16 %v728
    %v1978 = vunpack.c.h.b16 %v728
    %v1979 = vunpack.c.l.b16 %v729
    %v1980 = vunpack.c.h.b16 %v729
    %v1981 = vunpack.c.l.b16 %v730
    %v1982 = vunpack.c.h.b16 %v730
    %v1983 = vunpack.c.l.b16 %v731
    %v1984 = vunpack.c.h.b16 %v731
    %v1985 = vunpack.c.l.b16 %v732
    %v1986 = vunpack.c.h.b16 %v732
    %v1987 = vunpack.c.l.b16 %v733
    %v1988 = vunpack.c.h.b16 %v733
    %v1989 = vunpack.c.l.b16 %v734
    %v1990 = vunpack.c.h.b16 %v734
    %v1991 = vunpack.c.l.b16 %v735
    %v1992 = vunpack.c.h.b16 %v735
    %v1993 = vunpack.c.l.b16 %v736
    %v1994 = vunpack.c.h.b16 %v736
    %v1995 = vunpack.c.l.b16 %v737
    %v1996 = vunpack.c.h.b16 %v737
    %v1997 = vunpack.c.l.b16 %v738
    %v1998 = vunpack.c.h.b16 %v738
    %v1999 = vunpack.c.l.b16 %v739
    %v2000 = vunpack.c.h.b16 %v739
    %v2001 = vunpack.c.l.b16 %v740
    %v2002 = vunpack.c.h.b16 %v740
    %v2003 = vunpack.c.l.b16 %v741
    %v2004 = vunpack.c.h.b16 %v741
    %v2005 = vunpack.c.l.b16 %v742
    %v2006 = vunpack.c.h.b16 %v742
    %v2007 = vunpack.c.l.b16 %v743
    %v2008 = vunpack.c.h.b16 %v743
    %v2009 = vunpack.c.l.b16 %v744
    %v2010 = vunpack.c.h.b16 %v744
    %v2011 = vunpack.c.l.b16 %v745
    %v2012 = vunpack.c.h.b16 %v745
    %v2013 = vunpack.c.l.b16 %v746
    %v2014 = vunpack.c.h.b16 %v746
    %v2015 = vunpack.c.l.b16 %v747
    %v2016 = vunpack.c.h.b16 %v747
    %v2017 = vunpack.c.l.b16 %v748
    %v2018 = vunpack.c.h.b16 %v748
    %v2019 = vunpack.c.l.b16 %v749
    %v2020 = vunpack.c.h.b16 %v749
    %v2021 = vunpack.c.l.b16 %v750
    %v2022 = vunpack.c.h.b16 %v750
    %v2023 = vunpack.c.l.b16 %v751
    %v2024 = vunpack.c.h.b16 %v751
    %v2025 = vunpack.c.l.b16 %v752
    %v2026 = vunpack.c.h.b16 %v752
    %v2027 = vunpack.c.l.b16 %v753
    %v2028 = vunpack.c.h.b16 %v753
    %v2029 = vunpack.c.l.b16 %v754
    %v2030 = vunpack.c.h.b16 %v754
    %v2031 = vunpack.c.l.b16 %v755
    %v2032 = vunpack.c.h.b16 %v755
    %v2033 = vunpack.c.l.b16 %v756
    %v2034 = vunpack.c.h.b16 %v756
    %v2035 = vunpack.c.l.b16 %v757
    %v2036 = vunpack.c.h.b16 %v757
    %v2037 = vunpack.c.l.b16 %v758
    %v2038 = vunpack.c.h.b16 %v758
    %v2039 = vunpack.c.l.b16 %v759
    %v2040 = vunpack.c.h.b16 %v759
    %v2041 = vunpack.c.l.b16 %v760
    %v2042 = vunpack.c.h.b16 %v760
    %v2043 = vunpack.c.l.b16 %v761
    %v2044 = vunpack.c.h.b16 %v761
    %v2045 = vunpack.c.l.b16 %v762
    %v2046 = vunpack.c.h.b16 %v762
    %v2047 = vunpack.c.l.b16 %v763
    %v2048 = vunpack.c.h.b16 %v763
    %v2049 = vunpack.c.l.b16 %v764
    %v2050 = vunpack.c.h.b16 %v764
    %v2051 = vunpack.c.l.b16 %v765
    %v2052 = vunpack.c.h.b16 %v765
    %v2053 = vunpack.c.l.b16 %v766
    %v2054 = vunpack.c.h.b16 %v766
    %v2055 = vunpack.c.l.b16 %v767
    %v2056 = vunpack.c.h.b16 %v767
    %v2057 = vunpack.c.l.b16 %v768
    %v2058 = vunpack.c.h.b16 %v768
    %v2059 = vunpack.c.l.b16 %v769
    %v2060 = vunpack.c.h.b16 %v769
    %v2061 = vunpack.c.l.b16 %v770
    %v2062 = vunpack.c.h.b16 %v770
    %v2063 = vunpack.c.l.b16 %v771
    %v2064 = vunpack.c.h.b16 %v771
    %v2065 = vunpack.c.l.b16 %v772
    %v2066 = vunpack.c.h.b16 %v772
    %v2067 = vunpack.c.l.b16 %v773
    %v2068 = vunpack.c.h.b16 %v773
    %v2069 = vunpack.c.l.b16 %v774
    %v2070 = vunpack.c.h.b16 %v774
    %v2071 = vunpack.c.l.b16 %v775
    %v2072 = vunpack.c.h.b16 %v775
    %v2073 = vunpack.c.l.b16 %v776
    %v2074 = vunpack.c.h.b16 %v776
    %v2075 = vunpack.c.l.b16 %v777
    %v2076 = vunpack.c.h.b16 %v777
    %v2077 = vunpack.c.l.b16 %v778
    %v2078 = vunpack.c.h.b16 %v778
    %v2079 = vunpack.c.l.b16 %v779
    %v2080 = vunpack.c.h.b16 %v779
    %v2081 = vunpack.c.l.b16 %v780
    %v2082 = vunpack.c.h.b16 %v780
    %v2083 = vunpack.c.l.b16 %v781
    %v2084 = vunpack.c.h.b16 %v781
    %v2085 = vunpack.c.l.b16 %v782
    %v2086 = vunpack.c.h.b16 %v782
    %v2087 = vunpack.c.l.b16 %v783
    %v2088 = vunpack.c.h.b16 %v783
    %v2089 = vunpack.c.l.b16 %v784
    %v2090 = vunpack.c.h.b16 %v784
    %v2091 = vunpack.c.l.b16 %v785
    %v2092 = vunpack.c.h.b16 %v785
    %v2093 = vunpack.c.l.b16 %v786
    %v2094 = vunpack.c.h.b16 %v786
    %v2095 = vunpack.c.l.b16 %v787
    %v2096 = vunpack.c.h.b16 %v787
    %v2097 = vunpack.c.l.b16 %v788
    %v2098 = vunpack.c.h.b16 %v788
    %v2099 = vunpack.c.l.b16 %v789
    %v2100 = vunpack.c.h.b16 %v789
    %v2101 = vunpack.c.l.b16 %v790
    %v2102 = vunpack.c.h.b16 %v790
    %v2103 = vunpack.c.l.b16 %v791
    %v2104 = vunpack.c.h.b16 %v791
    %v2105 = vunpack.c.l.b16 %v792
    %v2106 = vunpack.c.h.b16 %v792
    %v2107 = vunpack.c.l.b16 %v793
    %v2108 = vunpack.c.h.b16 %v793
    %v2109 = vunpack.c.l.b16 %v794
    %v2110 = vunpack.c.h.b16 %v794
    %v2111 = vunpack.c.l.b16 %v795
    %v2112 = vunpack.c.h.b16 %v795
    %v2113 = vunpack.c.l.b16 %v796
    %v2114 = vunpack.c.h.b16 %v796
    %v2115 = vunpack.c.l.b16 %v797
    %v2116 = vunpack.c.h.b16 %v797
    %v2117 = vunpack.c.l.b16 %v798
    %v2118 = vunpack.c.h.b16 %v798
    %v2119 = vunpack.c.l.b16 %v799
    %v2120 = vunpack.c.h.b16 %v799
    %v2121 = vunpack.c.l.b16 %v800
    %v2122 = vunpack.c.h.b16 %v800
    %v2123 = vunpack.c.l.b16 %v801
    %v2124 = vunpack.c.h.b16 %v801
    %v2125 = vunpack.c.l.b16 %v802
    %v2126 = vunpack.c.h.b16 %v802
    %v2127 = vunpack.c.l.b16 %v803
    %v2128 = vunpack.c.h.b16 %v803
    %v2129 = vunpack.c.l.b16 %v804
    %v2130 = vunpack.c.h.b16 %v804
    %v2131 = vunpack.c.l.b16 %v805
    %v2132 = vunpack.c.h.b16 %v805
    %v2133 = vunpack.c.l.b16 %v806
    %v2134 = vunpack.c.h.b16 %v806
    %v2135 = vunpack.c.l.b16 %v807
    %v2136 = vunpack.c.h.b16 %v807
    %v2137 = vunpack.c.l.b16 %v808
    %v2138 = vunpack.c.h.b16 %v808
    %v2139 = vunpack.c.l.b16 %v809
    %v2140 = vunpack.c.h.b16 %v809
    %v2141 = vunpack.c.l.b16 %v810
    %v2142 = vunpack.c.h.b16 %v810
    %v2143 = vunpack.c.l.b16 %v811
    %v2144 = vunpack.c.h.b16 %v811
    %v2145 = vunpack.c.l.b16 %v812
    %v2146 = vunpack.c.h.b16 %v812
    %v2147 = vunpack.c.l.b16 %v813
    %v2148 = vunpack.c.h.b16 %v813
    %v2149 = vunpack.c.l.b16 %v814
    %v2150 = vunpack.c.h.b16 %v814
    %v2151 = vunpack.c.l.b16 %v815
    %v2152 = vunpack.c.h.b16 %v815
    %v2153 = vunpack.c.l.b16 %v816
    %v2154 = vunpack.c.h.b16 %v816
    %v2155 = vunpack.c.l.b16 %v817
    %v2156 = vunpack.c.h.b16 %v817
    %v2157 = vunpack.c.l.b16 %v818
    %v2158 = vunpack.c.h.b16 %v818
    %v2159 = vunpack.c.l.b16 %v819
    %v2160 = vunpack.c.h.b16 %v819
    %v2161 = vunpack.c.l.b16 %v820
    %v2162 = vunpack.c.h.b16 %v820
    %v2163 = vunpack.c.l.b16 %v821
    %v2164 = vunpack.c.h.b16 %v821
    %v2165 = vunpack.c.l.b16 %v822
    %v2166 = vunpack.c.h.b16 %v822
    %v2167 = vunpack.c.l.b16 %v823
    %v2168 = vunpack.c.h.b16 %v823
    %v2169 = vunpack.c.l.b16 %v824
    %v2170 = vunpack.c.h.b16 %v824
    %v2171 = vunpack.c.l.b16 %v825
    %v2172 = vunpack.c.h.b16 %v825
    %v2173 = vunpack.c.l.b16 %v826
    %v2174 = vunpack.c.h.b16 %v826
    %v2175 = vunpack.c.l.b16 %v827
    %v2176 = vunpack.c.h.b16 %v827
    %v2177 = vunpack.c.l.b16 %v828
    %v2178 = vunpack.c.h.b16 %v828
    %v2179 = vunpack.c.l.b16 %v829
    %v2180 = vunpack.c.h.b16 %v829
    %v2181 = vunpack.c.l.b16 %v830
    %v2182 = vunpack.c.h.b16 %v830
    %v2183 = vunpack.c.l.b16 %v831
    %v2184 = vunpack.c.h.b16 %v831
    %v2185 = vunpack.c.l.b16 %v832
    %v2186 = vunpack.c.h.b16 %v832
    %v2187 = vunpack.c.l.b16 %v833
    %v2188 = vunpack.c.h.b16 %v833
    %v2189 = vunpack.c.l.b16 %v834
    %v2190 = vunpack.c.h.b16 %v834
    %v2191 = vunpack.c.l.b16 %v835
    %v2192 = vunpack.c.h.b16 %v835
    %v2193 = vunpack.c.l.b16 %v836
    %v2194 = vunpack.c.h.b16 %v836
    %v2195 = vunpack.c.l.b16 %v837
    %v2196 = vunpack.c.h.b16 %v837
    %v2197 = vunpack.c.l.b16 %v838
    %v2198 = vunpack.c.h.b16 %v838
    %v2199 = vunpack.c.l.b16 %v839
    %v2200 = vunpack.c.h.b16 %v839
    %v2201 = vunpack.c.l.b16 %v840
    %v2202 = vunpack.c.h.b16 %v840
    %v2203 = vunpack.c.l.b16 %v841
    %v2204 = vunpack.c.h.b16 %v841
    %v2205 = vunpack.c.l.b16 %v842
    %v2206 = vunpack.c.h.b16 %v842
    %v2207 = vunpack.c.l.b16 %v843
    %v2208 = vunpack.c.h.b16 %v843
    %v2209 = vunpack.c.l.b16 %v844
    %v2210 = vunpack.c.h.b16 %v844
    %v2211 = vunpack.c.l.b16 %v845
    %v2212 = vunpack.c.h.b16 %v845
    %v2213 = vunpack.c.l.b16 %v846
    %v2214 = vunpack.c.h.b16 %v846
    %v2215 = vunpack.c.l.b16 %v847
    %v2216 = vunpack.c.h.b16 %v847
    %v2217 = vunpack.c.l.b16 %v848
    %v2218 = vunpack.c.h.b16 %v848
    %v2219 = vunpack.c.l.b16 %v849
    %v2220 = vunpack.c.h.b16 %v849
    %v2221 = vunpack.c.l.b16 %v850
    %v2222 = vunpack.c.h.b16 %v850
    %v2223 = vunpack.c.l.b16 %v851
    %v2224 = vunpack.c.h.b16 %v851
    %v2225 = vunpack.c.l.b16 %v852
    %v2226 = vunpack.c.h.b16 %v852
    %v2227 = vunpack.c.l.b16 %v853
    %v2228 = vunpack.c.h.b16 %v853
    %v2229 = vunpack.c.l.b16 %v854
    %v2230 = vunpack.c.h.b16 %v854
    %v2231 = vunpack.c.l.b16 %v855
    %v2232 = vunpack.c.h.b16 %v855
    %v2233 = vunpack.c.l.b16 %v856
    %v2234 = vunpack.c.h.b16 %v856
    %v2235 = vunpack.c.l.b16 %v857
    %v2236 = vunpack.c.h.b16 %v857
    %v2237 = vunpack.c.l.b16 %v858
    %v2238 = vunpack.c.h.b16 %v858
    %v2239 = vunpack.c.l.b16 %v859
    %v2240 = vunpack.c.h.b16 %v859
    %v2241 = vunpack.c.l.b16 %v860
    %v2242 = vunpack.c.h.b16 %v860
    %v2243 = vunpack.c.l.b16 %v861
    %v2244 = vunpack.c.h.b16 %v861
    %v2245 = vunpack.c.l.b16 %v862
    %v2246 = vunpack.c.h.b16 %v862
    %v2247 = vunpack.c.l.b16 %v863
    %v2248 = vunpack.c.h.b16 %v863
    %v2249 = vunpack.c.l.b16 %v864
    %v2250 = vunpack.c.h.b16 %v864
    %v2251 = vunpack.c.l.b16 %v865
    %v2252 = vunpack.c.h.b16 %v865
    %v2253 = vunpack.c.l.b16 %v866
    %v2254 = vunpack.c.h.b16 %v866
    %v2255 = vunpack.c.l.b16 %v867
    %v2256 = vunpack.c.h.b16 %v867
    %v2257 = vunpack.c.l.b16 %v868
    %v2258 = vunpack.c.h.b16 %v868
    %v2259 = vunpack.c.l.b16 %v869
    %v2260 = vunpack.c.h.b16 %v869
    %v2261 = vunpack.c.l.b16 %v870
    %v2262 = vunpack.c.h.b16 %v870
    %v2263 = vunpack.c.l.b16 %v871
    %v2264 = vunpack.c.h.b16 %v871
    %v2265 = vunpack.c.l.b16 %v872
    %v2266 = vunpack.c.h.b16 %v872
    %v2267 = vunpack.c.l.b16 %v873
    %v2268 = vunpack.c.h.b16 %v873
    %v2269 = vunpack.c.l.b16 %v874
    %v2270 = vunpack.c.h.b16 %v874
    %v2271 = vunpack.c.l.b16 %v875
    %v2272 = vunpack.c.h.b16 %v875
    %v2273 = vunpack.c.l.b16 %v876
    %v2274 = vunpack.c.h.b16 %v876
    %v2275 = vunpack.c.l.b16 %v877
    %v2276 = vunpack.c.h.b16 %v877
    %v2277 = vunpack.c.l.b16 %v878
    %v2278 = vunpack.c.h.b16 %v878
    %v2279 = vunpack.c.l.b16 %v879
    %v2280 = vunpack.c.h.b16 %v879
    %v2281 = vunpack.c.l.b16 %v880
    %v2282 = vunpack.c.h.b16 %v880
    %v2283 = vunpack.c.l.b16 %v881
    %v2284 = vunpack.c.h.b16 %v881
    %v2285 = vunpack.c.l.b16 %v882
    %v2286 = vunpack.c.h.b16 %v882
    %v2287 = vunpack.c.l.b16 %v883
    %v2288 = vunpack.c.h.b16 %v883
    %v2289 = vunpack.c.l.b16 %v884
    %v2290 = vunpack.c.h.b16 %v884
    %v2291 = vunpack.c.l.b16 %v885
    %v2292 = vunpack.c.h.b16 %v885
    %v2293 = vunpack.c.l.b16 %v886
    %v2294 = vunpack.c.h.b16 %v886
    %v2295 = vunpack.c.l.b16 %v887
    %v2296 = vunpack.c.h.b16 %v887
    %v2297 = vunpack.c.l.b16 %v888
    %v2298 = vunpack.c.h.b16 %v888
    %v2299 = vunpack.c.l.b16 %v889
    %v2300 = vunpack.c.h.b16 %v889
    %v2301 = vunpack.c.l.b16 %v890
    %v2302 = vunpack.c.h.b16 %v890
    %v2303 = vunpack.c.l.b16 %v891
    %v2304 = vunpack.c.h.b16 %v891
    %v2305 = vunpack.c.l.b16 %v892
    %v2306 = vunpack.c.h.b16 %v892
    %v2307 = vunpack.c.l.b16 %v893
    %v2308 = vunpack.c.h.b16 %v893
    %v2309 = vunpack.c.l.b16 %v894
    %v2310 = vunpack.c.h.b16 %v894
    %v2311 = vunpack.c.l.b16 %v895
    %v2312 = vunpack.c.h.b16 %v895
    %v2313 = vunpack.c.l.b16 %v896
    %v2314 = vunpack.c.h.b16 %v896
    %v2315 = vunpack.c.l.b16 %v897
    %v2316 = vunpack.c.h.b16 %v897
    %v2317 = vunpack.c.l.b16 %v898
    %v2318 = vunpack.c.h.b16 %v898
    %v2319 = vunpack.c.l.b16 %v899
    %v2320 = vunpack.c.h.b16 %v899
    %v2321 = vunpack.c.l.b16 %v900
    %v2322 = vunpack.c.h.b16 %v900
    %v2323 = vunpack.c.l.b16 %v901
    %v2324 = vunpack.c.h.b16 %v901
    %v2325 = vunpack.c.l.b16 %v902
    %v2326 = vunpack.c.h.b16 %v902
    %v2327 = vunpack.c.l.b16 %v903
    %v2328 = vunpack.c.h.b16 %v903
    %v2329 = vunpack.c.l.b16 %v904
    %v2330 = vunpack.c.h.b16 %v904
    %v2331 = vunpack.c.l.b16 %v905
    %v2332 = vunpack.c.h.b16 %v905
    %v2333 = vunpack.c.l.b16 %v906
    %v2334 = vunpack.c.h.b16 %v906
    %v2335 = vunpack.c.l.b16 %v907
    %v2336 = vunpack.c.h.b16 %v907
    %v2337 = vunpack.c.l.b16 %v908
    %v2338 = vunpack.c.h.b16 %v908
    %v2339 = vunpack.c.l.b16 %v909
    %v2340 = vunpack.c.h.b16 %v909
    %v2341 = vunpack.c.l.b16 %v910
    %v2342 = vunpack.c.h.b16 %v910
    %v2343 = vunpack.c.l.b16 %v911
    %v2344 = vunpack.c.h.b16 %v911
    %v2345 = vunpack.c.l.b16 %v912
    %v2346 = vunpack.c.h.b16 %v912
    %v2347 = vunpack.c.l.b16 %v913
    %v2348 = vunpack.c.h.b16 %v913
    %v2349 = vunpack.c.l.b16 %v914
    %v2350 = vunpack.c.h.b16 %v914
    %v2351 = vunpack.c.l.b16 %v915
    %v2352 = vunpack.c.h.b16 %v915
    %v2353 = vunpack.c.l.b16 %v916
    %v2354 = vunpack.c.h.b16 %v916
    %v2355 = vunpack.c.l.b16 %v917
    %v2356 = vunpack.c.h.b16 %v917
    %v2357 = vunpack.c.l.b16 %v918
    %v2358 = vunpack.c.h.b16 %v918
    %v2359 = vunpack.c.l.b16 %v919
    %v2360 = vunpack.c.h.b16 %v919
    %v2361 = vunpack.c.l.b16 %v920
    %v2362 = vunpack.c.h.b16 %v920
    %v2363 = vunpack.c.l.b16 %v921
    %v2364 = vunpack.c.h.b16 %v921
    %v2365 = vunpack.c.l.b16 %v922
    %v2366 = vunpack.c.h.b16 %v922
    %v2367 = vunpack.c.l.b16 %v923
    %v2368 = vunpack.c.h.b16 %v923
    %v2369 = vunpack.c.l.b16 %v924
    %v2370 = vunpack.c.h.b16 %v924
    %v2371 = vunpack.c.l.b16 %v925
    %v2372 = vunpack.c.h.b16 %v925
    %v2373 = vunpack.c.l.b16 %v926
    %v2374 = vunpack.c.h.b16 %v926
    %v2375 = vunpack.c.l.b16 %v927
    %v2376 = vunpack.c.h.b16 %v927
    %v2377 = vunpack.c.l.b16 %v928
    %v2378 = vunpack.c.h.b16 %v928
    %v2379 = vunpack.c.l.b16 %v929
    %v2380 = vunpack.c.h.b16 %v929
    %v2381 = vunpack.c.l.b16 %v930
    %v2382 = vunpack.c.h.b16 %v930
    %v2383 = vunpack.c.l.b16 %v931
    %v2384 = vunpack.c.h.b16 %v931
    %v2385 = vunpack.c.l.b16 %v932
    %v2386 = vunpack.c.h.b16 %v932
    %v2387 = vunpack.c.l.b16 %v933
    %v2388 = vunpack.c.h.b16 %v933
    %v2389 = vunpack.c.l.b16 %v934
    %v2390 = vunpack.c.h.b16 %v934
    %v2391 = vunpack.c.l.b16 %v935
    %v2392 = vunpack.c.h.b16 %v935
    %v2393 = vunpack.c.l.b16 %v936
    %v2394 = vunpack.c.h.b16 %v936
    %v2395 = vunpack.c.l.b16 %v937
    %v2396 = vunpack.c.h.b16 %v937
    %v2397 = vunpack.c.l.b16 %v938
    %v2398 = vunpack.c.h.b16 %v938
    %v2399 = vunpack.c.l.b16 %v939
    %v2400 = vunpack.c.h.b16 %v939
    %v2401 = vunpack.c.l.b16 %v940
    %v2402 = vunpack.c.h.b16 %v940
    %v2403 = vunpack.c.l.b16 %v941
    %v2404 = vunpack.c.h.b16 %v941
    %v2405 = vunpack.c.l.b16 %v942
    %v2406 = vunpack.c.h.b16 %v942
    %v2407 = vunpack.c.l.b16 %v943
    %v2408 = vunpack.c.h.b16 %v943
    %v2409 = vunpack.c.l.b16 %v944
    %v2410 = vunpack.c.h.b16 %v944
    %v2411 = vunpack.c.l.b16 %v945
    %v2412 = vunpack.c.h.b16 %v945
    %v2413 = vunpack.c.l.b16 %v946
    %v2414 = vunpack.c.h.b16 %v946
    %v2415 = vunpack.c.l.b16 %v947
    %v2416 = vunpack.c.h.b16 %v947
    %v2417 = vunpack.c.l.b16 %v948
    %v2418 = vunpack.c.h.b16 %v948
    %v2419 = vunpack.c.l.b16 %v949
    %v2420 = vunpack.c.h.b16 %v949
    %v2421 = vunpack.c.l.b16 %v950
    %v2422 = vunpack.c.h.b16 %v950
    %v2423 = vunpack.c.l.b16 %v951
    %v2424 = vunpack.c.h.b16 %v951
    %v2425 = vunpack.c.l.b16 %v952
    %v2426 = vunpack.c.h.b16 %v952
    %v2427 = vunpack.c.l.b16 %v953
    %v2428 = vunpack.c.h.b16 %v953
    %v2429 = vunpack.c.l.b16 %v954
    %v2430 = vunpack.c.h.b16 %v954
    %v2431 = vunpack.c.l.b16 %v955
    %v2432 = vunpack.c.h.b16 %v955
    %v2433 = vunpack.c.l.b16 %v956
    %v2434 = vunpack.c.h.b16 %v956
    %v2435 = vunpack.c.l.b16 %v957
    %v2436 = vunpack.c.h.b16 %v957
    %v2437 = vunpack.c.l.b16 %v958
    %v2438 = vunpack.c.h.b16 %v958
    %v2439 = vunpack.c.l.b16 %v959
    %v2440 = vunpack.c.h.b16 %v959
    %v2441 = vunpack.c.l.b16 %v960
    %v2442 = vunpack.c.h.b16 %v960
    %v2443 = vunpack.c.l.b16 %v961
    %v2444 = vunpack.c.h.b16 %v961
    %v2445 = vunpack.c.l.b16 %v962
    %v2446 = vunpack.c.h.b16 %v962
    %v2447 = vunpack.c.l.b16 %v963
    %v2448 = vunpack.c.h.b16 %v963
    %v2449 = vunpack.c.l.b16 %v964
    %v2450 = vunpack.c.h.b16 %v964
    %v2451 = vunpack.c.l.b16 %v965
    %v2452 = vunpack.c.h.b16 %v965
    %v2453 = vunpack.c.l.b16 %v966
    %v2454 = vunpack.c.h.b16 %v966
    %v2455 = vunpack.c.l.b16 %v967
    %v2456 = vunpack.c.h.b16 %v967
    %v2457 = vunpack.c.l.b16 %v968
    %v2458 = vunpack.c.h.b16 %v968
    %v2459 = vunpack.c.l.b16 %v969
    %v2460 = vunpack.c.h.b16 %v969
    %v2461 = vunpack.c.l.b16 %v970
    %v2462 = vunpack.c.h.b16 %v970
    %v2463 = vunpack.c.l.b16 %v971
    %v2464 = vunpack.c.h.b16 %v971
    %v2465 = vunpack.c.l.b16 %v972
    %v2466 = vunpack.c.h.b16 %v972
    %v2467 = vunpack.c.l.b16 %v973
    %v2468 = vunpack.c.h.b16 %v973
    %v2469 = vunpack.c.l.b16 %v974
    %v2470 = vunpack.c.h.b16 %v974
    %v2471 = vunpack.c.l.b16 %v975
    %v2472 = vunpack.c.h.b16 %v975
    %v2473 = vunpack.c.l.b16 %v976
    %v2474 = vunpack.c.h.b16 %v976
    %v2475 = vunpack.c.l.b16 %v977
    %v2476 = vunpack.c.h.b16 %v977
    %v2477 = vunpack.c.l.b16 %v978
    %v2478 = vunpack.c.h.b16 %v978
    %v2479 = vunpack.c.l.b16 %v979
    %v2480 = vunpack.c.h.b16 %v979
    %v2481 = vunpack.c.l.b16 %v980
    %v2482 = vunpack.c.h.b16 %v980
    %v2483 = vunpack.c.l.b16 %v981
    %v2484 = vunpack.c.h.b16 %v981
    %v2485 = vunpack.c.l.b16 %v982
    %v2486 = vunpack.c.h.b16 %v982
    %v2487 = vunpack.c.l.b16 %v983
    %v2488 = vunpack.c.h.b16 %v983
    %v2489 = vunpack.c.l.b16 %v984
    %v2490 = vunpack.c.h.b16 %v984
    %v2491 = vunpack.c.l.b16 %v985
    %v2492 = vunpack.c.h.b16 %v985
    %v2493 = vunpack.c.l.b16 %v986
    %v2494 = vunpack.c.h.b16 %v986
    %v2495 = vunpack.c.l.b16 %v987
    %v2496 = vunpack.c.h.b16 %v987
    %v2497 = vunpack.c.l.b16 %v988
    %v2498 = vunpack.c.h.b16 %v988
    %v2499 = vunpack.c.l.b16 %v989
    %v2500 = vunpack.c.h.b16 %v989
    %v2501 = vunpack.c.l.b16 %v990
    %v2502 = vunpack.c.h.b16 %v990
    %v2503 = vunpack.c.l.b16 %v991
    %v2504 = vunpack.c.h.b16 %v991
    %v2505 = vunpack.c.l.b16 %v992
    %v2506 = vunpack.c.h.b16 %v992
    %v2507 = vunpack.c.l.b16 %v993
    %v2508 = vunpack.c.h.b16 %v993
    %v2509 = vunpack.c.l.b16 %v994
    %v2510 = vunpack.c.h.b16 %v994
    %v2511 = vunpack.c.l.b16 %v995
    %v2512 = vunpack.c.h.b16 %v995
    %v2513 = vunpack.c.l.b16 %v996
    %v2514 = vunpack.c.h.b16 %v996
    %v2515 = vunpack.c.l.b16 %v997
    %v2516 = vunpack.c.h.b16 %v997
    %v2517 = vunpack.c.l.b16 %v998
    %v2518 = vunpack.c.h.b16 %v998
    %v2519 = vunpack.c.l.b16 %v999
    %v2520 = vunpack.c.h.b16 %v999
    %v2521 = vunpack.c.l.b16 %v1000
    %v2522 = vunpack.c.h.b16 %v1000
    %v2523 = vunpack.c.l.b16 %v1001
    %v2524 = vunpack.c.h.b16 %v1001
    %v2525 = vunpack.c.l.b16 %v1002
    %v2526 = vunpack.c.h.b16 %v1002
    %v2527 = vunpack.c.l.b16 %v1003
    %v2528 = vunpack.c.h.b16 %v1003
    %v2529 = vunpack.c.l.b16 %v1004
    %v2530 = vunpack.c.h.b16 %v1004
    %v2531 = vunpack.c.l.b16 %v1005
    %v2532 = vunpack.c.h.b16 %v1005
    %v2533 = vunpack.c.l.b16 %v1006
    %v2534 = vunpack.c.h.b16 %v1006
    %v2535 = vunpack.c.l.b16 %v1007
    %v2536 = vunpack.c.h.b16 %v1007
    %v2537 = vunpack.c.l.b16 %v1008
    %v2538 = vunpack.c.h.b16 %v1008
    %v2539 = vunpack.c.l.b16 %v1009
    %v2540 = vunpack.c.h.b16 %v1009
    %v2541 = vunpack.c.l.b16 %v1010
    %v2542 = vunpack.c.h.b16 %v1010
    %v2543 = vunpack.c.l.b16 %v1011
    %v2544 = vunpack.c.h.b16 %v1011
    %v2545 = vunpack.c.l.b16 %v1012
    %v2546 = vunpack.c.h.b16 %v1012
    %v2547 = vunpack.c.l.b16 %v1013
    %v2548 = vunpack.c.h.b16 %v1013
    %v2549 = vunpack.c.l.b16 %v1014
    %v2550 = vunpack.c.h.b16 %v1014
    %v2551 = vunpack.c.l.b16 %v1015
    %v2552 = vunpack.c.h.b16 %v1015
    %v2553 = vunpack.c.l.b16 %v1016
    %v2554 = vunpack.c.h.b16 %v1016
    %v2555 = vunpack.c.l.b16 %v1017
    %v2556 = vunpack.c.h.b16 %v1017
    %v2557 = vunpack.c.l.b16 %v1018
    %v2558 = vunpack.c.h.b16 %v1018
    %v2559 = vunpack.c.l.b16 %v1019
    %v2560 = vunpack.c.h.b16 %v1019
    %v2561 = vunpack.c.l.b16 %v1020
    %v2562 = vunpack.c.h.b16 %v1020
    %v2563 = vunpack.c.l.b16 %v1021
    %v2564 = vunpack.c.h.b16 %v1021
    %v2565 = vunpack.c.l.b16 %v1022
    %v2566 = vunpack.c.h.b16 %v1022
    %v2567 = vunpack.c.l.b16 %v1023
    %v2568 = vunpack.c.h.b16 %v1023
    %v2569 = vunpack.c.l.b16 %v1024
    %v2570 = vunpack.c.h.b16 %v1024
    %v2571 = vunpack.c.l.b16 %v1025
    %v2572 = vunpack.c.h.b16 %v1025
    %v2573 = vunpack.c.l.b16 %v1026
    %v2574 = vunpack.c.h.b16 %v1026
    %v2575 = vunpack.c.l.b16 %v1027
    %v2576 = vunpack.c.h.b16 %v1027
    %v2577 = vunpack.c.l.b16 %v1028
    %v2578 = vunpack.c.h.b16 %v1028
    %v2579 = vunpack.c.l.b16 %v1029
    %v2580 = vunpack.c.h.b16 %v1029
    %v2581 = vunpack.c.l.b16 %v1030
    %v2582 = vunpack.c.h.b16 %v1030
    %v2583 = vunpack.c.l.b16 %v1031
    %v2584 = vunpack.c.h.b16 %v1031
    %v2585 = vunpack.c.l.b16 %v1032
    %v2586 = vunpack.c.h.b16 %v1032
    %v2587 = vunpack.c.l.b16 %v1033
    %v2588 = vunpack.c.h.b16 %v1033
    %v2589 = vunpack.c.l.b16 %v1034
    %v2590 = vunpack.c.h.b16 %v1034
    %v2591 = vunpack.c.l.b16 %v1035
    %v2592 = vunpack.c.h.b16 %v1035
    %v2593 = vunpack.c.l.b16 %v1036
    %v2594 = vunpack.c.h.b16 %v1036
    %v2595 = vunpack.c.l.b16 %v1037
    %v2596 = vunpack.c.h.b16 %v1037
    %v2597 = vunpack.c.l.b16 %v1038
    %v2598 = vunpack.c.h.b16 %v1038
    %v2599 = vunpack.c.l.b16 %v1039
    %v2600 = vunpack.c.h.b16 %v1039
    %v2601 = vunpack.c.l.b16 %v1040
    %v2602 = vunpack.c.h.b16 %v1040
    %v2603 = vunpack.c.l.b16 %v1041
    %v2604 = vunpack.c.h.b16 %v1041
    %v2605 = vunpack.c.l.b16 %v1042
    %v2606 = vunpack.c.h.b16 %v1042
    %v2607 = vunpack.c.l.b16 %v1043
    %v2608 = vunpack.c.h.b16 %v1043
    %v2609 = vunpack.c.l.b16 %v1044
    %v2610 = vunpack.c.h.b16 %v1044
    %v2611 = vunpack.c.l.b16 %v1045
    %v2612 = vunpack.c.h.b16 %v1045
    %v2613 = vunpack.c.l.b16 %v1046
    %v2614 = vunpack.c.h.b16 %v1046
    %v2615 = vunpack.c.l.b16 %v1047
    %v2616 = vunpack.c.h.b16 %v1047
    %v2617 = vunpack.c.l.b16 %v1048
    %v2618 = vunpack.c.h.b16 %v1048
    %v2619 = vunpack.c.l.b16 %v1049
    %v2620 = vunpack.c.h.b16 %v1049
    %v2621 = vunpack.c.l.b16 %v1050
    %v2622 = vunpack.c.h.b16 %v1050
    %v2623 = vunpack.c.l.b16 %v1051
    %v2624 = vunpack.c.h.b16 %v1051
    %v2625 = vunpack.c.l.b16 %v1052
    %v2626 = vunpack.c.h.b16 %v1052
    %v2627 = vunpack.c.l.b16 %v1053
    %v2628 = vunpack.c.h.b16 %v1053
    %v2629 = vunpack.c.l.b16 %v1054
    %v2630 = vunpack.c.h.b16 %v1054
    %v2631 = vunpack.c.l.b16 %v1055
    %v2632 = vunpack.c.h.b16 %v1055
    %v2633 = vunpack.c.l.b16 %v1056
    %v2634 = vunpack.c.h.b16 %v1056
    %v2635 = vpack.c.b16 %v1619, %v1611
    %v2636 = vpack.c.b16 %v1620, %v1612
    %v2637 = vpack.c.b16 %v1621, %v1613
    %v2638 = vpack.c.b16 %v1622, %v1614
    %v2639 = vpack.c.b16 %v1623, %v1615
    %v2640 = vpack.c.b16 %v1624, %v1616
    %v2641 = vpack.c.b16 %v1625, %v1617
    %v2642 = vpack.c.b16 %v1626, %v1618
    %v2643 = vpack.c.b16 %v1635, %v1627
    %v2644 = vpack.c.b16 %v1636, %v1628
    %v2645 = vpack.c.b16 %v1637, %v1629
    %v2646 = vpack.c.b16 %v1638, %v1630
    %v2647 = vpack.c.b16 %v1639, %v1631
    %v2648 = vpack.c.b16 %v1640, %v1632
    %v2649 = vpack.c.b16 %v1641, %v1633
    %v2650 = vpack.c.b16 %v1642, %v1634
    %v2651 = vpack.c.b16 %v1651, %v1643
    %v2652 = vpack.c.b16 %v1652, %v1644
    %v2653 = vpack.c.b16 %v1653, %v1645
    %v2654 = vpack.c.b16 %v1654, %v1646
    %v2655 = vpack.c.b16 %v1655, %v1647
    %v2656 = vpack.c.b16 %v1656, %v1648
    %v2657 = vpack.c.b16 %v1657, %v1649
    %v2658 = vpack.c.b16 %v1658, %v1650
    %v2659 = vpack.c.b16 %v1667, %v1659
    %v2660 = vpack.c.b16 %v1668, %v1660
    %v2661 = vpack.c.b16 %v1669, %v1661
    %v2662 = vpack.c.b16 %v1670, %v1662
    %v2663 = vpack.c.b16 %v1671, %v1663
    %v2664 = vpack.c.b16 %v1672, %v1664
    %v2665 = vpack.c.b16 %v1673, %v1665
    %v2666 = vpack.c.b16 %v1674, %v1666
    %v2667 = vpack.c.b16 %v1683, %v1675
    %v2668 = vpack.c.b16 %v1684, %v1676
    %v2669 = vpack.c.b16 %v1685, %v1677
    %v2670 = vpack.c.b16 %v1686, %v1678
    %v2671 = vpack.c.b16 %v1687, %v1679
    %v2672 = vpack.c.b16 %v1688, %v1680
    %v2673 = vpack.c.b16 %v1689, %v1681
    %v2674 = vpack.c.b16 %v1690, %v1682
    %v2675 = vpack.c.b16 %v1699, %v1691
    %v2676 = vpack.c.b16 %v1700, %v1692
    %v2677 = vpack.c.b16 %v1701, %v1693
    %v2678 = vpack.c.b16 %v1702, %v1694
    %v2679 = vpack.c.b16 %v1703, %v1695
    %v2680 = vpack.c.b16 %v1704, %v1696
    %v2681 = vpack.c.b16 %v1705, %v1697
    %v2682 = vpack.c.b16 %v1706, %v1698
    %v2683 = vpack.c.b16 %v1715, %v1707
    %v2684 = vpack.c.b16 %v1716, %v1708
    %v2685 = vpack.c.b16 %v1717, %v1709
    %v2686 = vpack.c.b16 %v1718, %v1710
    %v2687 = vpack.c.b16 %v1719, %v1711
    %v2688 = vpack.c.b16 %v1720, %v1712
    %v2689 = vpack.c.b16 %v1721, %v1713
    %v2690 = vpack.c.b16 %v1722, %v1714
    %v2691 = vpack.c.b16 %v1731, %v1723
    %v2692 = vpack.c.b16 %v1732, %v1724
    %v2693 = vpack.c.b16 %v1733, %v1725
    %v2694 = vpack.c.b16 %v1734, %v1726
    %v2695 = vpack.c.b16 %v1735, %v1727
    %v2696 = vpack.c.b16 %v1736, %v1728
    %v2697 = vpack.c.b16 %v1737, %v1729
    %v2698 = vpack.c.b16 %v1738, %v1730
    %v2699 = vpack.c.b16 %v1747, %v1739
    %v2700 = vpack.c.b16 %v1748, %v1740
    %v2701 = vpack.c.b16 %v1749, %v1741
    %v2702 = vpack.c.b16 %v1750, %v1742
    %v2703 = vpack.c.b16 %v1751, %v1743
    %v2704 = vpack.c.b16 %v1752, %v1744
    %v2705 = vpack.c.b16 %v1753, %v1745
    %v2706 = vpack.c.b16 %v1754, %v1746
    %v2707 = vpack.c.b16 %v1763, %v1755
    %v2708 = vpack.c.b16 %v1764, %v1756
    %v2709 = vpack.c.b16 %v1765, %v1757
    %v2710 = vpack.c.b16 %v1766, %v1758
    %v2711 = vpack.c.b16 %v1767, %v1759
    %v2712 = vpack.c.b16 %v1768, %v1760
    %v2713 = vpack.c.b16 %v1769, %v1761
    %v2714 = vpack.c.b16 %v1770, %v1762
    %v2715 = vpack.c.b16 %v1779, %v1771
    %v2716 = vpack.c.b16 %v1780, %v1772
    %v2717 = vpack.c.b16 %v1781, %v1773
    %v2718 = vpack.c.b16 %v1782, %v1774
    %v2719 = vpack.c.b16 %v1783, %v1775
    %v2720 = vpack.c.b16 %v1784, %v1776
    %v2721 = vpack.c.b16 %v1785, %v1777
    %v2722 = vpack.c.b16 %v1786, %v1778
    %v2723 = vpack.c.b16 %v1795, %v1787
    %v2724 = vpack.c.b16 %v1796, %v1788
    %v2725 = vpack.c.b16 %v1797, %v1789
    %v2726 = vpack.c.b16 %v1798, %v1790
    %v2727 = vpack.c.b16 %v1799, %v1791
    %v2728 = vpack.c.b16 %v1800, %v1792
    %v2729 = vpack.c.b16 %v1801, %v1793
    %v2730 = vpack.c.b16 %v1802, %v1794
    %v2731 = vpack.c.b16 %v1811, %v1803
    %v2732 = vpack.c.b16 %v1812, %v1804
    %v2733 = vpack.c.b16 %v1813, %v1805
    %v2734 = vpack.c.b16 %v1814, %v1806
    %v2735 = vpack.c.b16 %v1815, %v1807
    %v2736 = vpack.c.b16 %v1816, %v1808
    %v2737 = vpack.c.b16 %v1817, %v1809
    %v2738 = vpack.c.b16 %v1818, %v1810
    %v2739 = vpack.c.b16 %v1827, %v1819
    %v2740 = vpack.c.b16 %v1828, %v1820
    %v2741 = vpack.c.b16 %v1829, %v1821
    %v2742 = vpack.c.b16 %v1830, %v1822
    %v2743 = vpack.c.b16 %v1831, %v1823
    %v2744 = vpack.c.b16 %v1832, %v1824
    %v2745 = vpack.c.b16 %v1833, %v1825
    %v2746 = vpack.c.b16 %v1834, %v1826
    %v2747 = vpack.c.b16 %v1843, %v1835
    %v2748 = vpack.c.b16 %v1844, %v1836
    %v2749 = vpack.c.b16 %v1845, %v1837
    %v2750 = vpack.c.b16 %v1846, %v1838
    %v2751 = vpack.c.b16 %v1847, %v1839
    %v2752 = vpack.c.b16 %v1848, %v1840
    %v2753 = vpack.c.b16 %v1849, %v1841
    %v2754 = vpack.c.b16 %v1850, %v1842
    %v2755 = vpack.c.b16 %v1859, %v1851
    %v2756 = vpack.c.b16 %v1860, %v1852
    %v2757 = vpack.c.b16 %v1861, %v1853
    %v2758 = vpack.c.b16 %v1862, %v1854
    %v2759 = vpack.c.b16 %v1863, %v1855
    %v2760 = vpack.c.b16 %v1864, %v1856
    %v2761 = vpack.c.b16 %v1865, %v1857
    %v2762 = vpack.c.b16 %v1866, %v1858
    %v2763 = vpack.c.b16 %v1875, %v1867
    %v2764 = vpack.c.b16 %v1876, %v1868
    %v2765 = vpack.c.b16 %v1877, %v1869
    %v2766 = vpack.c.b16 %v1878, %v1870
    %v2767 = vpack.c.b16 %v1879, %v1871
    %v2768 = vpack.c.b16 %v1880, %v1872
    %v2769 = vpack.c.b16 %v1881, %v1873
    %v2770 = vpack.c.b16 %v1882, %v1874
    %v2771 = vpack.c.b16 %v1891, %v1883
    %v2772 = vpack.c.b16 %v1892, %v1884
    %v2773 = vpack.c.b16 %v1893, %v1885
    %v2774 = vpack.c.b16 %v1894, %v1886
    %v2775 = vpack.c.b16 %v1895, %v1887
    %v2776 = vpack.c.b16 %v1896, %v1888
    %v2777 = vpack.c.b16 %v1897, %v1889
    %v2778 = vpack.c.b16 %v1898, %v1890
    %v2779 = vpack.c.b16 %v1907, %v1899
    %v2780 = vpack.c.b16 %v1908, %v1900
    %v2781 = vpack.c.b16 %v1909, %v1901
    %v2782 = vpack.c.b16 %v1910, %v1902
    %v2783 = vpack.c.b16 %v1911, %v1903
    %v2784 = vpack.c.b16 %v1912, %v1904
    %v2785 = vpack.c.b16 %v1913, %v1905
    %v2786 = vpack.c.b16 %v1914, %v1906
    %v2787 = vpack.c.b16 %v1923, %v1915
    %v2788 = vpack.c.b16 %v1924, %v1916
    %v2789 = vpack.c.b16 %v1925, %v1917
    %v2790 = vpack.c.b16 %v1926, %v1918
    %v2791 = vpack.c.b16 %v1927, %v1919
    %v2792 = vpack.c.b16 %v1928, %v1920
    %v2793 = vpack.c.b16 %v1929, %v1921
    %v2794 = vpack.c.b16 %v1930, %v1922
    %v2795 = vpack.c.b16 %v1939, %v1931
    %v2796 = vpack.c.b16 %v1940, %v1932
    %v2797 = vpack.c.b16 %v1941, %v1933
    %v2798 = vpack.c.b16 %v1942, %v1934
    %v2799 = vpack.c.b16 %v1943, %v1935
    %v2800 = vpack.c.b16 %v1944, %v1936
    %v2801 = vpack.c.b16 %v1945, %v1937
    %v2802 = vpack.c.b16 %v1946, %v1938
    %v2803 = vpack.c.b16 %v1955, %v1947
    %v2804 = vpack.c.b16 %v1956, %v1948
    %v2805 = vpack.c.b16 %v1957, %v1949
    %v2806 = vpack.c.b16 %v1958, %v1950
    %v2807 = vpack.c.b16 %v1959, %v1951
    %v2808 = vpack.c.b16 %v1960, %v1952
    %v2809 = vpack.c.b16 %v1961, %v1953
    %v2810 = vpack.c.b16 %v1962, %v1954
    %v2811 = vpack.c.b16 %v1971, %v1963
    %v2812 = vpack.c.b16 %v1972, %v1964
    %v2813 = vpack.c.b16 %v1973, %v1965
    %v2814 = vpack.c.b16 %v1974, %v1966
    %v2815 = vpack.c.b16 %v1975, %v1967
    %v2816 = vpack.c.b16 %v1976, %v1968
    %v2817 = vpack.c.b16 %v1977, %v1969
    %v2818 = vpack.c.b16 %v1978, %v1970
    %v2819 = vpack.c.b16 %v1987, %v1979
    %v2820 = vpack.c.b16 %v1988, %v1980
    %v2821 = vpack.c.b16 %v1989, %v1981
    %v2822 = vpack.c.b16 %v1990, %v1982
    %v2823 = vpack.c.b16 %v1991, %v1983
    %v2824 = vpack.c.b16 %v1992, %v1984
    %v2825 = vpack.c.b16 %v1993, %v1985
    %v2826 = vpack.c.b16 %v1994, %v1986
    %v2827 = vpack.c.b16 %v2003, %v1995
    %v2828 = vpack.c.b16 %v2004, %v1996
    %v2829 = vpack.c.b16 %v2005, %v1997
    %v2830 = vpack.c.b16 %v2006, %v1998
    %v2831 = vpack.c.b16 %v2007, %v1999
    %v2832 = vpack.c.b16 %v2008, %v2000
    %v2833 = vpack.c.b16 %v2009, %v2001
    %v2834 = vpack.c.b16 %v2010, %v2002
    %v2835 = vpack.c.b16 %v2019, %v2011
    %v2836 = vpack.c.b16 %v2020, %v2012
    %v2837 = vpack.c.b16 %v2021, %v2013
    %v2838 = vpack.c.b16 %v2022, %v2014
    %v2839 = vpack.c.b16 %v2023, %v2015
    %v2840 = vpack.c.b16 %v2024, %v2016
    %v2841 = vpack.c.b16 %v2025, %v2017
    %v2842 = vpack.c.b16 %v2026, %v2018
    %v2843 = vpack.c.b16 %v2035, %v2027
    %v2844 = vpack.c.b16 %v2036, %v2028
    %v2845 = vpack.c.b16 %v2037, %v2029
    %v2846 = vpack.c.b16 %v2038, %v2030
    %v2847 = vpack.c.b16 %v2039, %v2031
    %v2848 = vpack.c.b16 %v2040, %v2032
    %v2849 = vpack.c.b16 %v2041, %v2033
    %v2850 = vpack.c.b16 %v2042, %v2034
    %v2851 = vpack.c.b16 %v2051, %v2043
    %v2852 = vpack.c.b16 %v2052, %v2044
    %v2853 = vpack.c.b16 %v2053, %v2045
    %v2854 = vpack.c.b16 %v2054, %v2046
    %v2855 = vpack.c.b16 %v2055, %v2047
    %v2856 = vpack.c.b16 %v2056, %v2048
    %v2857 = vpack.c.b16 %v2057, %v2049
    %v2858 = vpack.c.b16 %v2058, %v2050
    %v2859 = vpack.c.b16 %v2067, %v2059
    %v2860 = vpack.c.b16 %v2068, %v2060
    %v2861 = vpack.c.b16 %v2069, %v2061
    %v2862 = vpack.c.b16 %v2070, %v2062
    %v2863 = vpack.c.b16 %v2071, %v2063
    %v2864 = vpack.c.b16 %v2072, %v2064
    %v2865 = vpack.c.b16 %v2073, %v2065
    %v2866 = vpack.c.b16 %v2074, %v2066
    %v2867 = vpack.c.b16 %v2083, %v2075
    %v2868 = vpack.c.b16 %v2084, %v2076
    %v2869 = vpack.c.b16 %v2085, %v2077
    %v2870 = vpack.c.b16 %v2086, %v2078
    %v2871 = vpack.c.b16 %v2087, %v2079
    %v2872 = vpack.c.b16 %v2088, %v2080
    %v2873 = vpack.c.b16 %v2089, %v2081
    %v2874 = vpack.c.b16 %v2090, %v2082
    %v2875 = vpack.c.b16 %v2099, %v2091
    %v2876 = vpack.c.b16 %v2100, %v2092
    %v2877 = vpack.c.b16 %v2101, %v2093
    %v2878 = vpack.c.b16 %v2102, %v2094
    %v2879 = vpack.c.b16 %v2103, %v2095
    %v2880 = vpack.c.b16 %v2104, %v2096
    %v2881 = vpack.c.b16 %v2105, %v2097
    %v2882 = vpack.c.b16 %v2106, %v2098
    %v2883 = vpack.c.b16 %v2115, %v2107
    %v2884 = vpack.c.b16 %v2116, %v2108
    %v2885 = vpack.c.b16 %v2117, %v2109
    %v2886 = vpack.c.b16 %v2118, %v2110
    %v2887 = vpack.c.b16 %v2119, %v2111
    %v2888 = vpack.c.b16 %v2120, %v2112
    %v2889 = vpack.c.b16 %v2121, %v2113
    %v2890 = vpack.c.b16 %v2122, %v2114
    %v2891 = vpack.c.b16 %v2131, %v2123
    %v2892 = vpack.c.b16 %v2132, %v2124
    %v2893 = vpack.c.b16 %v2133, %v2125
    %v2894 = vpack.c.b16 %v2134, %v2126
    %v2895 = vpack.c.b16 %v2135, %v2127
    %v2896 = vpack.c.b16 %v2136, %v2128
    %v2897 = vpack.c.b16 %v2137, %v2129
    %v2898 = vpack.c.b16 %v2138, %v2130
    %v2899 = vpack.c.b16 %v2147, %v2139
    %v2900 = vpack.c.b16 %v2148, %v2140
    %v2901 = vpack.c.b16 %v2149, %v2141
    %v2902 = vpack.c.b16 %v2150, %v2142
    %v2903 = vpack.c.b16 %v2151, %v2143
    %v2904 = vpack.c.b16 %v2152, %v2144
    %v2905 = vpack.c.b16 %v2153, %v2145
    %v2906 = vpack.c.b16 %v2154, %v2146
    %v2907 = vpack.c.b16 %v2163, %v2155
    %v2908 = vpack.c.b16 %v2164, %v2156
    %v2909 = vpack.c.b16 %v2165, %v2157
    %v2910 = vpack.c.b16 %v2166, %v2158
    %v2911 = vpack.c.b16 %v2167, %v2159
    %v2912 = vpack.c.b16 %v2168, %v2160
    %v2913 = vpack.c.b16 %v2169, %v2161
    %v2914 = vpack.c.b16 %v2170, %v2162
    %v2915 = vpack.c.b16 %v2179, %v2171
    %v2916 = vpack.c.b16 %v2180, %v2172
    %v2917 = vpack.c.b16 %v2181, %v2173
    %v2918 = vpack.c.b16 %v2182, %v2174
    %v2919 = vpack.c.b16 %v2183, %v2175
    %v2920 = vpack.c.b16 %v2184, %v2176
    %v2921 = vpack.c.b16 %v2185, %v2177
    %v2922 = vpack.c.b16 %v2186, %v2178
    %v2923 = vpack.c.b16 %v2195, %v2187
    %v2924 = vpack.c.b16 %v2196, %v2188
    %v2925 = vpack.c.b16 %v2197, %v2189
    %v2926 = vpack.c.b16 %v2198, %v2190
    %v2927 = vpack.c.b16 %v2199, %v2191
    %v2928 = vpack.c.b16 %v2200, %v2192
    %v2929 = vpack.c.b16 %v2201, %v2193
    %v2930 = vpack.c.b16 %v2202, %v2194
    %v2931 = vpack.c.b16 %v2211, %v2203
    %v2932 = vpack.c.b16 %v2212, %v2204
    %v2933 = vpack.c.b16 %v2213, %v2205
    %v2934 = vpack.c.b16 %v2214, %v2206
    %v2935 = vpack.c.b16 %v2215, %v2207
    %v2936 = vpack.c.b16 %v2216, %v2208
    %v2937 = vpack.c.b16 %v2217, %v2209
    %v2938 = vpack.c.b16 %v2218, %v2210
    %v2939 = vpack.c.b16 %v2227, %v2219
    %v2940 = vpack.c.b16 %v2228, %v2220
    %v2941 = vpack.c.b16 %v2229, %v2221
    %v2942 = vpack.c.b16 %v2230, %v2222
    %v2943 = vpack.c.b16 %v2231, %v2223
    %v2944 = vpack.c.b16 %v2232, %v2224
    %v2945 = vpack.c.b16 %v2233, %v2225
    %v2946 = vpack.c.b16 %v2234, %v2226
    %v2947 = vpack.c.b16 %v2243, %v2235
    %v2948 = vpack.c.b16 %v2244, %v2236
    %v2949 = vpack.c.b16 %v2245, %v2237
    %v2950 = vpack.c.b16 %v2246, %v2238
    %v2951 = vpack.c.b16 %v2247, %v2239
    %v2952 = vpack.c.b16 %v2248, %v2240
    %v2953 = vpack.c.b16 %v2249, %v2241
    %v2954 = vpack.c.b16 %v2250, %v2242
    %v2955 = vpack.c.b16 %v2259, %v2251
    %v2956 = vpack.c.b16 %v2260, %v2252
    %v2957 = vpack.c.b16 %v2261, %v2253
    %v2958 = vpack.c.b16 %v2262, %v2254
    %v2959 = vpack.c.b16 %v2263, %v2255
    %v2960 = vpack.c.b16 %v2264, %v2256
    %v2961 = vpack.c.b16 %v2265, %v2257
    %v2962 = vpack.c.b16 %v2266, %v2258
    %v2963 = vpack.c.b16 %v2275, %v2267
    %v2964 = vpack.c.b16 %v2276, %v2268
    %v2965 = vpack.c.b16 %v2277, %v2269
    %v2966 = vpack.c.b16 %v2278, %v2270
    %v2967 = vpack.c.b16 %v2279, %v2271
    %v2968 = vpack.c.b16 %v2280, %v2272
    %v2969 = vpack.c.b16 %v2281, %v2273
    %v2970 = vpack.c.b16 %v2282, %v2274
    %v2971 = vpack.c.b16 %v2291, %v2283
    %v2972 = vpack.c.b16 %v2292, %v2284
    %v2973 = vpack.c.b16 %v2293, %v2285
    %v2974 = vpack.c.b16 %v2294, %v2286
    %v2975 = vpack.c.b16 %v2295, %v2287
    %v2976 = vpack.c.b16 %v2296, %v2288
    %v2977 = vpack.c.b16 %v2297, %v2289
    %v2978 = vpack.c.b16 %v2298, %v2290
    %v2979 = vpack.c.b16 %v2307, %v2299
    %v2980 = vpack.c.b16 %v2308, %v2300
    %v2981 = vpack.c.b16 %v2309, %v2301
    %v2982 = vpack.c.b16 %v2310, %v2302
    %v2983 = vpack.c.b16 %v2311, %v2303
    %v2984 = vpack.c.b16 %v2312, %v2304
    %v2985 = vpack.c.b16 %v2313, %v2305
    %v2986 = vpack.c.b16 %v2314, %v2306
    %v2987 = vpack.c.b16 %v2323, %v2315
    %v2988 = vpack.c.b16 %v2324, %v2316
    %v2989 = vpack.c.b16 %v2325, %v2317
    %v2990 = vpack.c.b16 %v2326, %v2318
    %v2991 = vpack.c.b16 %v2327, %v2319
    %v2992 = vpack.c.b16 %v2328, %v2320
    %v2993 = vpack.c.b16 %v2329, %v2321
    %v2994 = vpack.c.b16 %v2330, %v2322
    %v2995 = vpack.c.b16 %v2339, %v2331
    %v2996 = vpack.c.b16 %v2340, %v2332
    %v2997 = vpack.c.b16 %v2341, %v2333
    %v2998 = vpack.c.b16 %v2342, %v2334
    %v2999 = vpack.c.b16 %v2343, %v2335
    %v3000 = vpack.c.b16 %v2344, %v2336
    %v3001 = vpack.c.b16 %v2345, %v2337
    %v3002 = vpack.c.b16 %v2346, %v2338
    %v3003 = vpack.c.b16 %v2355, %v2347
    %v3004 = vpack.c.b16 %v2356, %v2348
    %v3005 = vpack.c.b16 %v2357, %v2349
    %v3006 = vpack.c.b16 %v2358, %v2350
    %v3007 = vpack.c.b16 %v2359, %v2351
    %v3008 = vpack.c.b16 %v2360, %v2352
    %v3009 = vpack.c.b16 %v2361, %v2353
    %v3010 = vpack.c.b16 %v2362, %v2354
    %v3011 = vpack.c.b16 %v2371, %v2363
    %v3012 = vpack.c.b16 %v2372, %v2364
    %v3013 = vpack.c.b16 %v2373, %v2365
    %v3014 = vpack.c.b16 %v2374, %v2366
    %v3015 = vpack.c.b16 %v2375, %v2367
    %v3016 = vpack.c.b16 %v2376, %v2368
    %v3017 = vpack.c.b16 %v2377, %v2369
    %v3018 = vpack.c.b16 %v2378, %v2370
    %v3019 = vpack.c.b16 %v2387, %v2379
    %v3020 = vpack.c.b16 %v2388, %v2380
    %v3021 = vpack.c.b16 %v2389, %v2381
    %v3022 = vpack.c.b16 %v2390, %v2382
    %v3023 = vpack.c.b16 %v2391, %v2383
    %v3024 = vpack.c.b16 %v2392, %v2384
    %v3025 = vpack.c.b16 %v2393, %v2385
    %v3026 = vpack.c.b16 %v2394, %v2386
    %v3027 = vpack.c.b16 %v2403, %v2395
    %v3028 = vpack.c.b16 %v2404, %v2396
    %v3029 = vpack.c.b16 %v2405, %v2397
    %v3030 = vpack.c.b16 %v2406, %v2398
    %v3031 = vpack.c.b16 %v2407, %v2399
    %v3032 = vpack.c.b16 %v2408, %v2400
    %v3033 = vpack.c.b16 %v2409, %v2401
    %v3034 = vpack.c.b16 %v2410, %v2402
    %v3035 = vpack.c.b16 %v2419, %v2411
    %v3036 = vpack.c.b16 %v2420, %v2412
    %v3037 = vpack.c.b16 %v2421, %v2413
    %v3038 = vpack.c.b16 %v2422, %v2414
    %v3039 = vpack.c.b16 %v2423, %v2415
    %v3040 = vpack.c.b16 %v2424, %v2416
    %v3041 = vpack.c.b16 %v2425, %v2417
    %v3042 = vpack.c.b16 %v2426, %v2418
    %v3043 = vpack.c.b16 %v2435, %v2427
    %v3044 = vpack.c.b16 %v2436, %v2428
    %v3045 = vpack.c.b16 %v2437, %v2429
    %v3046 = vpack.c.b16 %v2438, %v2430
    %v3047 = vpack.c.b16 %v2439, %v2431
    %v3048 = vpack.c.b16 %v2440, %v2432
    %v3049 = vpack.c.b16 %v2441, %v2433
    %v3050 = vpack.c.b16 %v2442, %v2434
    %v3051 = vpack.c.b16 %v2451, %v2443
    %v3052 = vpack.c.b16 %v2452, %v2444
    %v3053 = vpack.c.b16 %v2453, %v2445
    %v3054 = vpack.c.b16 %v2454, %v2446
    %v3055 = vpack.c.b16 %v2455, %v2447
    %v3056 = vpack.c.b16 %v2456, %v2448
    %v3057 = vpack.c.b16 %v2457, %v2449
    %v3058 = vpack.c.b16 %v2458, %v2450
    %v3059 = vpack.c.b16 %v2467, %v2459
    %v3060 = vpack.c.b16 %v2468, %v2460
    %v3061 = vpack.c.b16 %v2469, %v2461
    %v3062 = vpack.c.b16 %v2470, %v2462
    %v3063 = vpack.c.b16 %v2471, %v2463
    %v3064 = vpack.c.b16 %v2472, %v2464
    %v3065 = vpack.c.b16 %v2473, %v2465
    %v3066 = vpack.c.b16 %v2474, %v2466
    %v3067 = vpack.c.b16 %v2483, %v2475
    %v3068 = vpack.c.b16 %v2484, %v2476
    %v3069 = vpack.c.b16 %v2485, %v2477
    %v3070 = vpack.c.b16 %v2486, %v2478
    %v3071 = vpack.c.b16 %v2487, %v2479
    %v3072 = vpack.c.b16 %v2488, %v2480
    %v3073 = vpack.c.b16 %v2489, %v2481
    %v3074 = vpack.c.b16 %v2490, %v2482
    %v3075 = vpack.c.b16 %v2499, %v2491
    %v3076 = vpack.c.b16 %v2500, %v2492
    %v3077 = vpack.c.b16 %v2501, %v2493
    %v3078 = vpack.c.b16 %v2502, %v2494
    %v3079 = vpack.c.b16 %v2503, %v2495
    %v3080 = vpack.c.b16 %v2504, %v2496
    %v3081 = vpack.c.b16 %v2505, %v2497
    %v3082 = vpack.c.b16 %v2506, %v2498
    %v3083 = vpack.c.b16 %v2515, %v2507
    %v3084 = vpack.c.b16 %v2516, %v2508
    %v3085 = vpack.c.b16 %v2517, %v2509
    %v3086 = vpack.c.b16 %v2518, %v2510
    %v3087 = vpack.c.b16 %v2519, %v2511
    %v3088 = vpack.c.b16 %v2520, %v2512
    %v3089 = vpack.c.b16 %v2521, %v2513
    %v3090 = vpack.c.b16 %v2522, %v2514
    %v3091 = vpack.c.b16 %v2531, %v2523
    %v3092 = vpack.c.b16 %v2532, %v2524
    %v3093 = vpack.c.b16 %v2533, %v2525
    %v3094 = vpack.c.b16 %v2534, %v2526
    %v3095 = vpack.c.b16 %v2535, %v2527
    %v3096 = vpack.c.b16 %v2536, %v2528
    %v3097 = vpack.c.b16 %v2537, %v2529
    %v3098 = vpack.c.b16 %v2538, %v2530
    %v3099 = vpack.c.b16 %v2547, %v2539
    %v3100 = vpack.c.b16 %v2548, %v2540
    %v3101 = vpack.c.b16 %v2549, %v2541
    %v3102 = vpack.c.b16 %v2550, %v2542
    %v3103 = vpack.c.b16 %v2551, %v2543
    %v3104 = vpack.c.b16 %v2552, %v2544
    %v3105 = vpack.c.b16 %v2553, %v2545
    %v3106 = vpack.c.b16 %v2554, %v2546
    %v3107 = vpack.c.b16 %v2563, %v2555
    %v3108 = vpack.c.b16 %v2564, %v2556
    %v3109 = vpack.c.b16 %v2565, %v2557
    %v3110 = vpack.c.b16 %v2566, %v2558
    %v3111 = vpack.c.b16 %v2567, %v2559
    %v3112 = vpack.c.b16 %v2568, %v2560
    %v3113 = vpack.c.b16 %v2569, %v2561
    %v3114 = vpack.c.b16 %v2570, %v2562
    %v3115 = vpack.c.b16 %v2579, %v2571
    %v3116 = vpack.c.b16 %v2580, %v2572
    %v3117 = vpack.c.b16 %v2581, %v2573
    %v3118 = vpack.c.b16 %v2582, %v2574
    %v3119 = vpack.c.b16 %v2583, %v2575
    %v3120 = vpack.c.b16 %v2584, %v2576
    %v3121 = vpack.c.b16 %v2585, %v2577
    %v3122 = vpack.c.b16 %v2586, %v2578
    %v3123 = vpack.c.b16 %v2595, %v2587
    %v3124 = vpack.c.b16 %v2596, %v2588
    %v3125 = vpack.c.b16 %v2597, %v2589
    %v3126 = vpack.c.b16 %v2598, %v2590
    %v3127 = vpack.c.b16 %v2599, %v2591
    %v3128 = vpack.c.b16 %v2600, %v2592
    %v3129 = vpack.c.b16 %v2601, %v2593
    %v3130 = vpack.c.b16 %v2602, %v2594
    %v3131 = vpack.c.b16 %v2611, %v2603
    %v3132 = vpack.c.b16 %v2612, %v2604
    %v3133 = vpack.c.b16 %v2613, %v2605
    %v3134 = vpack.c.b16 %v2614, %v2606
    %v3135 = vpack.c.b16 %v2615, %v2607
    %v3136 = vpack.c.b16 %v2616, %v2608
    %v3137 = vpack.c.b16 %v2617, %v2609
    %v3138 = vpack.c.b16 %v2618, %v2610
    %v3139 = vpack.c.b16 %v2627, %v2619
    %v3140 = vpack.c.b16 %v2628, %v2620
    %v3141 = vpack.c.b16 %v2629, %v2621
    %v3142 = vpack.c.b16 %v2630, %v2622
    %v3143 = vpack.c.b16 %v2631, %v2623
    %v3144 = vpack.c.b16 %v2632, %v2624
    %v3145 = vpack.c.b16 %v2633, %v2625
    %v3146 = vpack.c.b16 %v2634, %v2626
    %3659 = vmatprep.subr.bf16.mxu0 %v2636
    %3660 = vmatpush1.bf16.msra.mxu0 %v2635
    %3661 = vmatprep.subr.bf16.mxu0 %v2644
    %3662 = vmatpush1.bf16.msra.mxu0 %v2643
    %3663 = vmatprep.subr.bf16.mxu0 %v2652
    %3664 = vmatpush1.bf16.msra.mxu0 %v2651
    %3665 = vmatprep.subr.bf16.mxu0 %v2660
    %3666 = vmatpush1.bf16.msra.mxu0 %v2659
    %3667 = vmatprep.subr.bf16.mxu0 %v2668
    %3668 = vmatpush1.bf16.msra.mxu0 %v2667
    %3669 = vmatprep.subr.bf16.mxu0 %v2676
    %3670 = vmatpush1.bf16.msra.mxu0 %v2675
    %3671 = vmatprep.subr.bf16.mxu0 %v2684
    %3672 = vmatpush1.bf16.msra.mxu0 %v2683
    %3673 = vmatprep.subr.bf16.mxu0 %v2692
    %3674 = vmatpush1.bf16.msra.mxu0 %v2691
    %3675 = vmatprep.subr.bf16.mxu0 %v2700
    %3676 = vmatpush1.bf16.msra.mxu0 %v2699
    %3677 = vmatprep.subr.bf16.mxu0 %v2708
    %3678 = vmatpush1.bf16.msra.mxu0 %v2707
    %3679 = vmatprep.subr.bf16.mxu0 %v2716
    %3680 = vmatpush1.bf16.msra.mxu0 %v2715
    %3681 = vmatprep.subr.bf16.mxu0 %v2724
    %3682 = vmatpush1.bf16.msra.mxu0 %v2723
    %3683 = vmatprep.subr.bf16.mxu0 %v2732
    %3684 = vmatpush1.bf16.msra.mxu0 %v2731
    %3685 = vmatprep.subr.bf16.mxu0 %v2740
    %3686 = vmatpush1.bf16.msra.mxu0 %v2739
    %3687 = vmatprep.subr.bf16.mxu0 %v2748
    %3688 = vmatpush1.bf16.msra.mxu0 %v2747
    %3689 = vmatprep.subr.bf16.mxu0 %v2756
    %3690 = vmatpush1.bf16.msra.mxu0 %v2755
    %3691 = vmatprep.mubr.bf16.mxu0 %v538
    %3692 = vmatmul.mubr.bf16.gmra.mrb[0].mxu0 %v537
    %v3693 = vpop.f32.mrb[0].mxu0
    %v3694 = vadd.f32 %v1062, %v3693
    %v3695 = vpop.f32.mrb[0].mxu0
    %v3696 = vadd.f32 %v1066, %v3695
    %v3697 = vpop.f32.mrb[0].mxu0
    %v3698 = vadd.f32 %v1062, %v3697
    %v3699 = vpop.f32.mrb[0].mxu0
    %v3700 = vadd.f32 %v1066, %v3699
    %3701 = vdwg.mxu0
    %3702 = vmatprep.subr.bf16.mxu0 %v2764
    %3703 = vmatpush1.bf16.msra.mxu0 %v2763
    %3704 = vmatprep.subr.bf16.mxu0 %v2772
    %3705 = vmatpush1.bf16.msra.mxu0 %v2771
    %3706 = vmatprep.subr.bf16.mxu0 %v2780
    %3707 = vmatpush1.bf16.msra.mxu0 %v2779
    %3708 = vmatprep.subr.bf16.mxu0 %v2788
    %3709 = vmatpush1.bf16.msra.mxu0 %v2787
    %3710 = vmatprep.subr.bf16.mxu0 %v2796
    %3711 = vmatpush1.bf16.msra.mxu0 %v2795
    %3712 = vmatprep.subr.bf16.mxu0 %v2804
    %3713 = vmatpush1.bf16.msra.mxu0 %v2803
    %3714 = vmatprep.subr.bf16.mxu0 %v2812
    %3715 = vmatpush1.bf16.msra.mxu0 %v2811
    %3716 = vmatprep.subr.bf16.mxu0 %v2820
    %3717 = vmatpush1.bf16.msra.mxu0 %v2819
    %3718 = vmatprep.subr.bf16.mxu0 %v2828
    %3719 = vmatpush1.bf16.msra.mxu0 %v2827
    %3720 = vmatprep.subr.bf16.mxu0 %v2836
    %3721 = vmatpush1.bf16.msra.mxu0 %v2835
    %3722 = vmatprep.subr.bf16.mxu0 %v2844
    %3723 = vmatpush1.bf16.msra.mxu0 %v2843
    %3724 = vmatprep.subr.bf16.mxu0 %v2852
    %3725 = vmatpush1.bf16.msra.mxu0 %v2851
    %3726 = vmatprep.subr.bf16.mxu0 %v2860
    %3727 = vmatpush1.bf16.msra.mxu0 %v2859
    %3728 = vmatprep.subr.bf16.mxu0 %v2868
    %3729 = vmatpush1.bf16.msra.mxu0 %v2867
    %3730 = vmatprep.subr.bf16.mxu0 %v2876
    %3731 = vmatpush1.bf16.msra.mxu0 %v2875
    %3732 = vmatprep.subr.bf16.mxu0 %v2884
    %3733 = vmatpush1.bf16.msra.mxu0 %v2883
    %3734 = vmatprep.mubr.bf16.mxu0 %v540
    %3735 = vmatmul.mubr.bf16.gmra.mrb[0].mxu0 %v539
    %v3736 = vpop.f32.mrb[0].mxu0
    %v3737 = vadd.f32 %v3694, %v3736
    %v3738 = vpop.f32.mrb[0].mxu0
    %v3739 = vadd.f32 %v3696, %v3738
    %v3740 = vpop.f32.mrb[0].mxu0
    %v3741 = vadd.f32 %v3698, %v3740
    %v3742 = vpop.f32.mrb[0].mxu0
    %v3743 = vadd.f32 %v3700, %v3742
    %3744 = vdwg.mxu0
    %3745 = vmatprep.subr.bf16.mxu0 %v2892
    %3746 = vmatpush1.bf16.msra.mxu0 %v2891
    %3747 = vmatprep.subr.bf16.mxu0 %v2900
    %3748 = vmatpush1.bf16.msra.mxu0 %v2899
    %3749 = vmatprep.subr.bf16.mxu0 %v2908
    %3750 = vmatpush1.bf16.msra.mxu0 %v2907
    %3751 = vmatprep.subr.bf16.mxu0 %v2916
    %3752 = vmatpush1.bf16.msra.mxu0 %v2915
    %3753 = vmatprep.subr.bf16.mxu0 %v2924
    %3754 = vmatpush1.bf16.msra.mxu0 %v2923
    %3755 = vmatprep.subr.bf16.mxu0 %v2932
    %3756 = vmatpush1.bf16.msra.mxu0 %v2931
    %3757 = vmatprep.subr.bf16.mxu0 %v2940
    %3758 = vmatpush1.bf16.msra.mxu0 %v2939
    %3759 = vmatprep.subr.bf16.mxu0 %v2948
    %3760 = vmatpush1.bf16.msra.mxu0 %v2947
    %3761 = vmatprep.subr.bf16.mxu0 %v2956
    %3762 = vmatpush1.bf16.msra.mxu0 %v2955
    %3763 = vmatprep.subr.bf16.mxu0 %v2964
    %3764 = vmatpush1.bf16.msra.mxu0 %v2963
    %3765 = vmatprep.subr.bf16.mxu0 %v2972
    %3766 = vmatpush1.bf16.msra.mxu0 %v2971
    %3767 = vmatprep.subr.bf16.mxu0 %v2980
    %3768 = vmatpush1.bf16.msra.mxu0 %v2979
    %3769 = vmatprep.subr.bf16.mxu0 %v2988
    %3770 = vmatpush1.bf16.msra.mxu0 %v2987
    %3771 = vmatprep.subr.bf16.mxu0 %v2996
    %3772 = vmatpush1.bf16.msra.mxu0 %v2995
    %3773 = vmatprep.subr.bf16.mxu0 %v3004
    %3774 = vmatpush1.bf16.msra.mxu0 %v3003
    %3775 = vmatprep.subr.bf16.mxu0 %v3012
    %3776 = vmatpush1.bf16.msra.mxu0 %v3011
    %3777 = vmatprep.mubr.bf16.mxu0 %v542
    %3778 = vmatmul.mubr.bf16.gmra.mrb[0].mxu0 %v541
    %v3779 = vpop.f32.mrb[0].mxu0
    %v3780 = vadd.f32 %v3737, %v3779
    %v3781 = vpop.f32.mrb[0].mxu0
    %v3782 = vadd.f32 %v3739, %v3781
    %v3783 = vpop.f32.mrb[0].mxu0
    %v3784 = vadd.f32 %v3741, %v3783
    %v3785 = vpop.f32.mrb[0].mxu0
    %v3786 = vadd.f32 %v3743, %v3785
    %3787 = vdwg.mxu0
    %3788 = vmatprep.subr.bf16.mxu0 %v3020
    %3789 = vmatpush1.bf16.msra.mxu0 %v3019
    %3790 = vmatprep.subr.bf16.mxu0 %v3028
    %3791 = vmatpush1.bf16.msra.mxu0 %v3027
    %3792 = vmatprep.subr.bf16.mxu0 %v3036
    %3793 = vmatpush1.bf16.msra.mxu0 %v3035
    %3794 = vmatprep.subr.bf16.mxu0 %v3044
    %3795 = vmatpush1.bf16.msra.mxu0 %v3043
    %3796 = vmatprep.subr.bf16.mxu0 %v3052
    %3797 = vmatpush1.bf16.msra.mxu0 %v3051
    %3798 = vmatprep.subr.bf16.mxu0 %v3060
    %3799 = vmatpush1.bf16.msra.mxu0 %v3059
    %3800 = vmatprep.subr.bf16.mxu0 %v3068
    %3801 = vmatpush1.bf16.msra.mxu0 %v3067
    %3802 = vmatprep.subr.bf16.mxu0 %v3076
    %3803 = vmatpush1.bf16.msra.mxu0 %v3075
    %3804 = vmatprep.subr.bf16.mxu0 %v3084
    %3805 = vmatpush1.bf16.msra.mxu0 %v3083
    %3806 = vmatprep.subr.bf16.mxu0 %v3092
    %3807 = vmatpush1.bf16.msra.mxu0 %v3091
    %3808 = vmatprep.subr.bf16.mxu0 %v3100
    %3809 = vmatpush1.bf16.msra.mxu0 %v3099
    %3810 = vmatprep.subr.bf16.mxu0 %v3108
    %3811 = vmatpush1.bf16.msra.mxu0 %v3107
    %3812 = vmatprep.subr.bf16.mxu0 %v3116
    %3813 = vmatpush1.bf16.msra.mxu0 %v3115
    %3814 = vmatprep.subr.bf16.mxu0 %v3124
    %3815 = vmatpush1.bf16.msra.mxu0 %v3123
    %3816 = vmatprep.subr.bf16.mxu0 %v3132
    %3817 = vmatpush1.bf16.msra.mxu0 %v3131
    %3818 = vmatprep.subr.bf16.mxu0 %v3140
    %3819 = vmatpush1.bf16.msra.mxu0 %v3139
    %3820 = vmatprep.mubr.bf16.mxu0 %v544
    %3821 = vmatmul.mubr.bf16.gmra.mrb[0].mxu0 %v543
    %v3822 = vpop.f32.mrb[0].mxu0
    %v3823 = vadd.f32 %v3780, %v3822
    %v3824 = vpop.f32.mrb[0].mxu0
    %v3825 = vadd.f32 %v3782, %v3824
    %v3826 = vpop.f32.mrb[0].mxu0
    %v3827 = vadd.f32 %v3784, %v3826
    %v3828 = vpop.f32.mrb[0].mxu0
    %v3829 = vadd.f32 %v3786, %v3828
    %3830 = vdwg.mxu0
    %3831 = vmatprep.subr.bf16.mxu0 %v2638
    %3832 = vmatpush1.bf16.msra.mxu0 %v2637
    %3833 = vmatprep.subr.bf16.mxu0 %v2646
    %3834 = vmatpush1.bf16.msra.mxu0 %v2645
    %3835 = vmatprep.subr.bf16.mxu0 %v2654
    %3836 = vmatpush1.bf16.msra.mxu0 %v2653
    %3837 = vmatprep.subr.bf16.mxu0 %v2662
    %3838 = vmatpush1.bf16.msra.mxu0 %v2661
    %3839 = vmatprep.subr.bf16.mxu0 %v2670
    %3840 = vmatpush1.bf16.msra.mxu0 %v2669
    %3841 = vmatprep.subr.bf16.mxu0 %v2678
    %3842 = vmatpush1.bf16.msra.mxu0 %v2677
    %3843 = vmatprep.subr.bf16.mxu0 %v2686
    %3844 = vmatpush1.bf16.msra.mxu0 %v2685
    %3845 = vmatprep.subr.bf16.mxu0 %v2694
    %3846 = vmatpush1.bf16.msra.mxu0 %v2693
    %3847 = vmatprep.subr.bf16.mxu0 %v2702
    %3848 = vmatpush1.bf16.msra.mxu0 %v2701
    %3849 = vmatprep.subr.bf16.mxu0 %v2710
    %3850 = vmatpush1.bf16.msra.mxu0 %v2709
    %3851 = vmatprep.subr.bf16.mxu0 %v2718
    %3852 = vmatpush1.bf16.msra.mxu0 %v2717
    %3853 = vmatprep.subr.bf16.mxu0 %v2726
    %3854 = vmatpush1.bf16.msra.mxu0 %v2725
    %3855 = vmatprep.subr.bf16.mxu0 %v2734
    %3856 = vmatpush1.bf16.msra.mxu0 %v2733
    %3857 = vmatprep.subr.bf16.mxu0 %v2742
    %3858 = vmatpush1.bf16.msra.mxu0 %v2741
    %3859 = vmatprep.subr.bf16.mxu0 %v2750
    %3860 = vmatpush1.bf16.msra.mxu0 %v2749
    %3861 = vmatprep.subr.bf16.mxu0 %v2758
    %3862 = vmatpush1.bf16.msra.mxu0 %v2757
    %3863 = vmatprep.mubr.bf16.mxu0 %v538
    %3864 = vmatmul.mubr.bf16.gmra.mrb[0].mxu0 %v537
    %v3865 = vpop.f32.mrb[0].mxu0
    %v3866 = vadd.f32 %v1070, %v3865
    %v3867 = vpop.f32.mrb[0].mxu0
    %v3868 = vadd.f32 %v1074, %v3867
    %v3869 = vpop.f32.mrb[0].mxu0
    %v3870 = vadd.f32 %v1070, %v3869
    %v3871 = vpop.f32.mrb[0].mxu0
    %v3872 = vadd.f32 %v1074, %v3871
    %3873 = vdwg.mxu0
    %3874 = vmatprep.subr.bf16.mxu0 %v2766
    %3875 = vmatpush1.bf16.msra.mxu0 %v2765
    %3876 = vmatprep.subr.bf16.mxu0 %v2774
    %3877 = vmatpush1.bf16.msra.mxu0 %v2773
    %3878 = vmatprep.subr.bf16.mxu0 %v2782
    %3879 = vmatpush1.bf16.msra.mxu0 %v2781
    %3880 = vmatprep.subr.bf16.mxu0 %v2790
    %3881 = vmatpush1.bf16.msra.mxu0 %v2789
    %3882 = vmatprep.subr.bf16.mxu0 %v2798
    %3883 = vmatpush1.bf16.msra.mxu0 %v2797
    %3884 = vmatprep.subr.bf16.mxu0 %v2806
    %3885 = vmatpush1.bf16.msra.mxu0 %v2805
    %3886 = vmatprep.subr.bf16.mxu0 %v2814
    %3887 = vmatpush1.bf16.msra.mxu0 %v2813
    %3888 = vmatprep.subr.bf16.mxu0 %v2822
    %3889 = vmatpush1.bf16.msra.mxu0 %v2821
    %3890 = vmatprep.subr.bf16.mxu0 %v2830
    %3891 = vmatpush1.bf16.msra.mxu0 %v2829
    %3892 = vmatprep.subr.bf16.mxu0 %v2838
    %3893 = vmatpush1.bf16.msra.mxu0 %v2837
    %3894 = vmatprep.subr.bf16.mxu0 %v2846
    %3895 = vmatpush1.bf16.msra.mxu0 %v2845
    %3896 = vmatprep.subr.bf16.mxu0 %v2854
    %3897 = vmatpush1.bf16.msra.mxu0 %v2853
    %3898 = vmatprep.subr.bf16.mxu0 %v2862
    %3899 = vmatpush1.bf16.msra.mxu0 %v2861
    %3900 = vmatprep.subr.bf16.mxu0 %v2870
    %3901 = vmatpush1.bf16.msra.mxu0 %v2869
    %3902 = vmatprep.subr.bf16.mxu0 %v2878
    %3903 = vmatpush1.bf16.msra.mxu0 %v2877
    %3904 = vmatprep.subr.bf16.mxu0 %v2886
    %3905 = vmatpush1.bf16.msra.mxu0 %v2885
    %3906 = vmatprep.mubr.bf16.mxu0 %v540
    %3907 = vmatmul.mubr.bf16.gmra.mrb[0].mxu0 %v539
    %v3908 = vpop.f32.mrb[0].mxu0
    %v3909 = vadd.f32 %v3866, %v3908
    %v3910 = vpop.f32.mrb[0].mxu0
    %v3911 = vadd.f32 %v3868, %v3910
    %v3912 = vpop.f32.mrb[0].mxu0
    %v3913 = vadd.f32 %v3870, %v3912
    %v3914 = vpop.f32.mrb[0].mxu0
    %v3915 = vadd.f32 %v3872, %v3914
    %3916 = vdwg.mxu0
    %3917 = vmatprep.subr.bf16.mxu0 %v2894
    %3918 = vmatpush1.bf16.msra.mxu0 %v2893
    %3919 = vmatprep.subr.bf16.mxu0 %v2902
    %3920 = vmatpush1.bf16.msra.mxu0 %v2901
    %3921 = vmatprep.subr.bf16.mxu0 %v2910
    %3922 = vmatpush1.bf16.msra.mxu0 %v2909
    %3923 = vmatprep.subr.bf16.mxu0 %v2918
    %3924 = vmatpush1.bf16.msra.mxu0 %v2917
    %3925 = vmatprep.subr.bf16.mxu0 %v2926
    %3926 = vmatpush1.bf16.msra.mxu0 %v2925
    %3927 = vmatprep.subr.bf16.mxu0 %v2934
    %3928 = vmatpush1.bf16.msra.mxu0 %v2933
    %3929 = vmatprep.subr.bf16.mxu0 %v2942
    %3930 = vmatpush1.bf16.msra.mxu0 %v2941
    %3931 = vmatprep.subr.bf16.mxu0 %v2950
    %3932 = vmatpush1.bf16.msra.mxu0 %v2949
    %3933 = vmatprep.subr.bf16.mxu0 %v2958
    %3934 = vmatpush1.bf16.msra.mxu0 %v2957
    %3935 = vmatprep.subr.bf16.mxu0 %v2966
    %3936 = vmatpush1.bf16.msra.mxu0 %v2965
    %3937 = vmatprep.subr.bf16.mxu0 %v2974
    %3938 = vmatpush1.bf16.msra.mxu0 %v2973
    %3939 = vmatprep.subr.bf16.mxu0 %v2982
    %3940 = vmatpush1.bf16.msra.mxu0 %v2981
    %3941 = vmatprep.subr.bf16.mxu0 %v2990
    %3942 = vmatpush1.bf16.msra.mxu0 %v2989
    %3943 = vmatprep.subr.bf16.mxu0 %v2998
    %3944 = vmatpush1.bf16.msra.mxu0 %v2997
    %3945 = vmatprep.subr.bf16.mxu0 %v3006
    %3946 = vmatpush1.bf16.msra.mxu0 %v3005
    %3947 = vmatprep.subr.bf16.mxu0 %v3014
    %3948 = vmatpush1.bf16.msra.mxu0 %v3013
    %3949 = vmatprep.mubr.bf16.mxu0 %v542
    %3950 = vmatmul.mubr.bf16.gmra.mrb[0].mxu0 %v541
    %v3951 = vpop.f32.mrb[0].mxu0
    %v3952 = vadd.f32 %v3909, %v3951
    %v3953 = vpop.f32.mrb[0].mxu0
    %v3954 = vadd.f32 %v3911, %v3953
    %v3955 = vpop.f32.mrb[0].mxu0
    %v3956 = vadd.f32 %v3913, %v3955
    %v3957 = vpop.f32.mrb[0].mxu0
    %v3958 = vadd.f32 %v3915, %v3957
    %3959 = vdwg.mxu0
    %3960 = vmatprep.subr.bf16.mxu0 %v3022
    %3961 = vmatpush1.bf16.msra.mxu0 %v3021
    %3962 = vmatprep.subr.bf16.mxu0 %v3030
    %3963 = vmatpush1.bf16.msra.mxu0 %v3029
    %3964 = vmatprep.subr.bf16.mxu0 %v3038
    %3965 = vmatpush1.bf16.msra.mxu0 %v3037
    %3966 = vmatprep.subr.bf16.mxu0 %v3046
    %3967 = vmatpush1.bf16.msra.mxu0 %v3045
    %3968 = vmatprep.subr.bf16.mxu0 %v3054
    %3969 = vmatpush1.bf16.msra.mxu0 %v3053
    %3970 = vmatprep.subr.bf16.mxu0 %v3062
    %3971 = vmatpush1.bf16.msra.mxu0 %v3061
    %3972 = vmatprep.subr.bf16.mxu0 %v3070
    %3973 = vmatpush1.bf16.msra.mxu0 %v3069
    %3974 = vmatprep.subr.bf16.mxu0 %v3078
    %3975 = vmatpush1.bf16.msra.mxu0 %v3077
    %3976 = vmatprep.subr.bf16.mxu0 %v3086
    %3977 = vmatpush1.bf16.msra.mxu0 %v3085
    %3978 = vmatprep.subr.bf16.mxu0 %v3094
    %3979 = vmatpush1.bf16.msra.mxu0 %v3093
    %3980 = vmatprep.subr.bf16.mxu0 %v3102
    %3981 = vmatpush1.bf16.msra.mxu0 %v3101
    %3982 = vmatprep.subr.bf16.mxu0 %v3110
    %3983 = vmatpush1.bf16.msra.mxu0 %v3109
    %3984 = vmatprep.subr.bf16.mxu0 %v3118
    %3985 = vmatpush1.bf16.msra.mxu0 %v3117
    %3986 = vmatprep.subr.bf16.mxu0 %v3126
    %3987 = vmatpush1.bf16.msra.mxu0 %v3125
    %3988 = vmatprep.subr.bf16.mxu0 %v3134
    %3989 = vmatpush1.bf16.msra.mxu0 %v3133
    %3990 = vmatprep.subr.bf16.mxu0 %v3142
    %3991 = vmatpush1.bf16.msra.mxu0 %v3141
    %3992 = vmatprep.mubr.bf16.mxu0 %v544
    %3993 = vmatmul.mubr.bf16.gmra.mrb[0].mxu0 %v543
    %v3994 = vpop.f32.mrb[0].mxu0
    %v3995 = vadd.f32 %v3952, %v3994
    %v3996 = vpop.f32.mrb[0].mxu0
    %v3997 = vadd.f32 %v3954, %v3996
    %v3998 = vpop.f32.mrb[0].mxu0
    %v3999 = vadd.f32 %v3956, %v3998
    %v4000 = vpop.f32.mrb[0].mxu0
    %v4001 = vadd.f32 %v3958, %v4000
    %4002 = vdwg.mxu0
    %4003 = vmatprep.subr.bf16.mxu0 %v2640
    %4004 = vmatpush1.bf16.msra.mxu0 %v2639
    %4005 = vmatprep.subr.bf16.mxu0 %v2648
    %4006 = vmatpush1.bf16.msra.mxu0 %v2647
    %4007 = vmatprep.subr.bf16.mxu0 %v2656
    %4008 = vmatpush1.bf16.msra.mxu0 %v2655
    %4009 = vmatprep.subr.bf16.mxu0 %v2664
    %4010 = vmatpush1.bf16.msra.mxu0 %v2663
    %4011 = vmatprep.subr.bf16.mxu0 %v2672
    %4012 = vmatpush1.bf16.msra.mxu0 %v2671
    %4013 = vmatprep.subr.bf16.mxu0 %v2680
    %4014 = vmatpush1.bf16.msra.mxu0 %v2679
    %4015 = vmatprep.subr.bf16.mxu0 %v2688
    %4016 = vmatpush1.bf16.msra.mxu0 %v2687
    %4017 = vmatprep.subr.bf16.mxu0 %v2696
    %4018 = vmatpush1.bf16.msra.mxu0 %v2695
    %4019 = vmatprep.subr.bf16.mxu0 %v2704
    %4020 = vmatpush1.bf16.msra.mxu0 %v2703
    %4021 = vmatprep.subr.bf16.mxu0 %v2712
    %4022 = vmatpush1.bf16.msra.mxu0 %v2711
    %4023 = vmatprep.subr.bf16.mxu0 %v2720
    %4024 = vmatpush1.bf16.msra.mxu0 %v2719
    %4025 = vmatprep.subr.bf16.mxu0 %v2728
    %4026 = vmatpush1.bf16.msra.mxu0 %v2727
    %4027 = vmatprep.subr.bf16.mxu0 %v2736
    %4028 = vmatpush1.bf16.msra.mxu0 %v2735
    %4029 = vmatprep.subr.bf16.mxu0 %v2744
    %4030 = vmatpush1.bf16.msra.mxu0 %v2743
    %4031 = vmatprep.subr.bf16.mxu0 %v2752
    %4032 = vmatpush1.bf16.msra.mxu0 %v2751
    %4033 = vmatprep.subr.bf16.mxu0 %v2760
    %4034 = vmatpush1.bf16.msra.mxu0 %v2759
    %4035 = vmatprep.mubr.bf16.mxu0 %v538
    %4036 = vmatmul.mubr.bf16.gmra.mrb[0].mxu0 %v537
    %v4037 = vpop.f32.mrb[0].mxu0
    %v4038 = vadd.f32 %v1078, %v4037
    %v4039 = vpop.f32.mrb[0].mxu0
    %v4040 = vadd.f32 %v1082, %v4039
    %v4041 = vpop.f32.mrb[0].mxu0
    %v4042 = vadd.f32 %v1078, %v4041
    %v4043 = vpop.f32.mrb[0].mxu0
    %v4044 = vadd.f32 %v1082, %v4043
    %4045 = vdwg.mxu0
    %4046 = vmatprep.subr.bf16.mxu0 %v2768
    %4047 = vmatpush1.bf16.msra.mxu0 %v2767
    %4048 = vmatprep.subr.bf16.mxu0 %v2776
    %4049 = vmatpush1.bf16.msra.mxu0 %v2775
    %4050 = vmatprep.subr.bf16.mxu0 %v2784
    %4051 = vmatpush1.bf16.msra.mxu0 %v2783
    %4052 = vmatprep.subr.bf16.mxu0 %v2792
    %4053 = vmatpush1.bf16.msra.mxu0 %v2791
    %4054 = vmatprep.subr.bf16.mxu0 %v2800
    %4055 = vmatpush1.bf16.msra.mxu0 %v2799
    %4056 = vmatprep.subr.bf16.mxu0 %v2808
    %4057 = vmatpush1.bf16.msra.mxu0 %v2807
    %4058 = vmatprep.subr.bf16.mxu0 %v2816
    %4059 = vmatpush1.bf16.msra.mxu0 %v2815
    %4060 = vmatprep.subr.bf16.mxu0 %v2824
    %4061 = vmatpush1.bf16.msra.mxu0 %v2823
    %4062 = vmatprep.subr.bf16.mxu0 %v2832
    %4063 = vmatpush1.bf16.msra.mxu0 %v2831
    %4064 = vmatprep.subr.bf16.mxu0 %v2840
    %4065 = vmatpush1.bf16.msra.mxu0 %v2839
    %4066 = vmatprep.subr.bf16.mxu0 %v2848
    %4067 = vmatpush1.bf16.msra.mxu0 %v2847
    %4068 = vmatprep.subr.bf16.mxu0 %v2856
    %4069 = vmatpush1.bf16.msra.mxu0 %v2855
    %4070 = vmatprep.subr.bf16.mxu0 %v2864
    %4071 = vmatpush1.bf16.msra.mxu0 %v2863
    %4072 = vmatprep.subr.bf16.mxu0 %v2872
    %4073 = vmatpush1.bf16.msra.mxu0 %v2871
    %4074 = vmatprep.subr.bf16.mxu0 %v2880
    %4075 = vmatpush1.bf16.msra.mxu0 %v2879
    %4076 = vmatprep.subr.bf16.mxu0 %v2888
    %4077 = vmatpush1.bf16.msra.mxu0 %v2887
    %4078 = vmatprep.mubr.bf16.mxu0 %v540
    %4079 = vmatmul.mubr.bf16.gmra.mrb[0].mxu0 %v539
    %v4080 = vpop.f32.mrb[0].mxu0
    %v4081 = vadd.f32 %v4038, %v4080
    %v4082 = vpop.f32.mrb[0].mxu0
    %v4083 = vadd.f32 %v4040, %v4082
    %v4084 = vpop.f32.mrb[0].mxu0
    %v4085 = vadd.f32 %v4042, %v4084
    %v4086 = vpop.f32.mrb[0].mxu0
    %v4087 = vadd.f32 %v4044, %v4086
    %4088 = vdwg.mxu0
    %4089 = vmatprep.subr.bf16.mxu0 %v2896
    %4090 = vmatpush1.bf16.msra.mxu0 %v2895
    %4091 = vmatprep.subr.bf16.mxu0 %v2904
    %4092 = vmatpush1.bf16.msra.mxu0 %v2903
    %4093 = vmatprep.subr.bf16.mxu0 %v2912
    %4094 = vmatpush1.bf16.msra.mxu0 %v2911
    %4095 = vmatprep.subr.bf16.mxu0 %v2920
    %4096 = vmatpush1.bf16.msra.mxu0 %v2919
    %4097 = vmatprep.subr.bf16.mxu0 %v2928
    %4098 = vmatpush1.bf16.msra.mxu0 %v2927
    %4099 = vmatprep.subr.bf16.mxu0 %v2936
    %4100 = vmatpush1.bf16.msra.mxu0 %v2935
    %4101 = vmatprep.subr.bf16.mxu0 %v2944
    %4102 = vmatpush1.bf16.msra.mxu0 %v2943
    %4103 = vmatprep.subr.bf16.mxu0 %v2952
    %4104 = vmatpush1.bf16.msra.mxu0 %v2951
    %4105 = vmatprep.subr.bf16.mxu0 %v2960
    %4106 = vmatpush1.bf16.msra.mxu0 %v2959
    %4107 = vmatprep.subr.bf16.mxu0 %v2968
    %4108 = vmatpush1.bf16.msra.mxu0 %v2967
    %4109 = vmatprep.subr.bf16.mxu0 %v2976
    %4110 = vmatpush1.bf16.msra.mxu0 %v2975
    %4111 = vmatprep.subr.bf16.mxu0 %v2984
    %4112 = vmatpush1.bf16.msra.mxu0 %v2983
    %4113 = vmatprep.subr.bf16.mxu0 %v2992
    %4114 = vmatpush1.bf16.msra.mxu0 %v2991
    %4115 = vmatprep.subr.bf16.mxu0 %v3000
    %4116 = vmatpush1.bf16.msra.mxu0 %v2999
    %4117 = vmatprep.subr.bf16.mxu0 %v3008
    %4118 = vmatpush1.bf16.msra.mxu0 %v3007
    %4119 = vmatprep.subr.bf16.mxu0 %v3016
    %4120 = vmatpush1.bf16.msra.mxu0 %v3015
    %4121 = vmatprep.mubr.bf16.mxu0 %v542
    %4122 = vmatmul.mubr.bf16.gmra.mrb[0].mxu0 %v541
    %v4123 = vpop.f32.mrb[0].mxu0
    %v4124 = vadd.f32 %v4081, %v4123
    %v4125 = vpop.f32.mrb[0].mxu0
    %v4126 = vadd.f32 %v4083, %v4125
    %v4127 = vpop.f32.mrb[0].mxu0
    %v4128 = vadd.f32 %v4085, %v4127
    %v4129 = vpop.f32.mrb[0].mxu0
    %v4130 = vadd.f32 %v4087, %v4129
    %4131 = vdwg.mxu0
    %4132 = vmatprep.subr.bf16.mxu0 %v3024
    %4133 = vmatpush1.bf16.msra.mxu0 %v3023
    %4134 = vmatprep.subr.bf16.mxu0 %v3032
    %4135 = vmatpush1.bf16.msra.mxu0 %v3031
    %4136 = vmatprep.subr.bf16.mxu0 %v3040
    %4137 = vmatpush1.bf16.msra.mxu0 %v3039
    %4138 = vmatprep.subr.bf16.mxu0 %v3048
    %4139 = vmatpush1.bf16.msra.mxu0 %v3047
    %4140 = vmatprep.subr.bf16.mxu0 %v3056
    %4141 = vmatpush1.bf16.msra.mxu0 %v3055
    %4142 = vmatprep.subr.bf16.mxu0 %v3064
    %4143 = vmatpush1.bf16.msra.mxu0 %v3063
    %4144 = vmatprep.subr.bf16.mxu0 %v3072
    %4145 = vmatpush1.bf16.msra.mxu0 %v3071
    %4146 = vmatprep.subr.bf16.mxu0 %v3080
    %4147 = vmatpush1.bf16.msra.mxu0 %v3079
    %4148 = vmatprep.subr.bf16.mxu0 %v3088
    %4149 = vmatpush1.bf16.msra.mxu0 %v3087
    %4150 = vmatprep.subr.bf16.mxu0 %v3096
    %4151 = vmatpush1.bf16.msra.mxu0 %v3095
    %4152 = vmatprep.subr.bf16.mxu0 %v3104
    %4153 = vmatpush1.bf16.msra.mxu0 %v3103
    %4154 = vmatprep.subr.bf16.mxu0 %v3112
    %4155 = vmatpush1.bf16.msra.mxu0 %v3111
    %4156 = vmatprep.subr.bf16.mxu0 %v3120
    %4157 = vmatpush1.bf16.msra.mxu0 %v3119
    %4158 = vmatprep.subr.bf16.mxu0 %v3128
    %4159 = vmatpush1.bf16.msra.mxu0 %v3127
    %4160 = vmatprep.subr.bf16.mxu0 %v3136
    %4161 = vmatpush1.bf16.msra.mxu0 %v3135
    %4162 = vmatprep.subr.bf16.mxu0 %v3144
    %4163 = vmatpush1.bf16.msra.mxu0 %v3143
    %4164 = vmatprep.mubr.bf16.mxu0 %v544
    %4165 = vmatmul.mubr.bf16.gmra.mrb[0].mxu0 %v543
    %v4166 = vpop.f32.mrb[0].mxu0
    %v4167 = vadd.f32 %v4124, %v4166
    %v4168 = vpop.f32.mrb[0].mxu0
    %v4169 = vadd.f32 %v4126, %v4168
    %v4170 = vpop.f32.mrb[0].mxu0
    %v4171 = vadd.f32 %v4128, %v4170
    %v4172 = vpop.f32.mrb[0].mxu0
    %v4173 = vadd.f32 %v4130, %v4172
    %4174 = vdwg.mxu0
    %4175 = vmatprep.subr.bf16.mxu0 %v2642
    %4176 = vmatpush1.bf16.msra.mxu0 %v2641
    %4177 = vmatprep.subr.bf16.mxu0 %v2650
    %4178 = vmatpush1.bf16.msra.mxu0 %v2649
    %4179 = vmatprep.subr.bf16.mxu0 %v2658
    %4180 = vmatpush1.bf16.msra.mxu0 %v2657
    %4181 = vmatprep.subr.bf16.mxu0 %v2666
    %4182 = vmatpush1.bf16.msra.mxu0 %v2665
    %4183 = vmatprep.subr.bf16.mxu0 %v2674
    %4184 = vmatpush1.bf16.msra.mxu0 %v2673
    %4185 = vmatprep.subr.bf16.mxu0 %v2682
    %4186 = vmatpush1.bf16.msra.mxu0 %v2681
    %4187 = vmatprep.subr.bf16.mxu0 %v2690
    %4188 = vmatpush1.bf16.msra.mxu0 %v2689
    %4189 = vmatprep.subr.bf16.mxu0 %v2698
    %4190 = vmatpush1.bf16.msra.mxu0 %v2697
    %4191 = vmatprep.subr.bf16.mxu0 %v2706
    %4192 = vmatpush1.bf16.msra.mxu0 %v2705
    %4193 = vmatprep.subr.bf16.mxu0 %v2714
    %4194 = vmatpush1.bf16.msra.mxu0 %v2713
    %4195 = vmatprep.subr.bf16.mxu0 %v2722
    %4196 = vmatpush1.bf16.msra.mxu0 %v2721
    %4197 = vmatprep.subr.bf16.mxu0 %v2730
    %4198 = vmatpush1.bf16.msra.mxu0 %v2729
    %4199 = vmatprep.subr.bf16.mxu0 %v2738
    %4200 = vmatpush1.bf16.msra.mxu0 %v2737
    %4201 = vmatprep.subr.bf16.mxu0 %v2746
    %4202 = vmatpush1.bf16.msra.mxu0 %v2745
    %4203 = vmatprep.subr.bf16.mxu0 %v2754
    %4204 = vmatpush1.bf16.msra.mxu0 %v2753
    %4205 = vmatprep.subr.bf16.mxu0 %v2762
    %4206 = vmatpush1.bf16.msra.mxu0 %v2761
    %4207 = vmatprep.mubr.bf16.mxu0 %v538
    %4208 = vmatmul.mubr.bf16.gmra.mrb[0].mxu0 %v537
    %v4209 = vpop.f32.mrb[0].mxu0
    %v4210 = vadd.f32 %v1086, %v4209
    %v4211 = vpop.f32.mrb[0].mxu0
    %v4212 = vadd.f32 %v1090, %v4211
    %v4213 = vpop.f32.mrb[0].mxu0
    %v4214 = vadd.f32 %v1086, %v4213
    %v4215 = vpop.f32.mrb[0].mxu0
    %v4216 = vadd.f32 %v1090, %v4215
    %4217 = vdwg.mxu0
    %4218 = vmatprep.subr.bf16.mxu0 %v2770
    %4219 = vmatpush1.bf16.msra.mxu0 %v2769
    %4220 = vmatprep.subr.bf16.mxu0 %v2778
    %4221 = vmatpush1.bf16.msra.mxu0 %v2777
    %4222 = vmatprep.subr.bf16.mxu0 %v2786
    %4223 = vmatpush1.bf16.msra.mxu0 %v2785
    %4224 = vmatprep.subr.bf16.mxu0 %v2794
    %4225 = vmatpush1.bf16.msra.mxu0 %v2793
    %4226 = vmatprep.subr.bf16.mxu0 %v2802
    %4227 = vmatpush1.bf16.msra.mxu0 %v2801
    %4228 = vmatprep.subr.bf16.mxu0 %v2810
    %4229 = vmatpush1.bf16.msra.mxu0 %v2809
    %4230 = vmatprep.subr.bf16.mxu0 %v2818
    %4231 = vmatpush1.bf16.msra.mxu0 %v2817
    %4232 = vmatprep.subr.bf16.mxu0 %v2826
    %4233 = vmatpush1.bf16.msra.mxu0 %v2825
    %4234 = vmatprep.subr.bf16.mxu0 %v2834
    %4235 = vmatpush1.bf16.msra.mxu0 %v2833
    %4236 = vmatprep.subr.bf16.mxu0 %v2842
    %4237 = vmatpush1.bf16.msra.mxu0 %v2841
    %4238 = vmatprep.subr.bf16.mxu0 %v2850
    %4239 = vmatpush1.bf16.msra.mxu0 %v2849
    %4240 = vmatprep.subr.bf16.mxu0 %v2858
    %4241 = vmatpush1.bf16.msra.mxu0 %v2857
    %4242 = vmatprep.subr.bf16.mxu0 %v2866
    %4243 = vmatpush1.bf16.msra.mxu0 %v2865
    %4244 = vmatprep.subr.bf16.mxu0 %v2874
    %4245 = vmatpush1.bf16.msra.mxu0 %v2873
    %4246 = vmatprep.subr.bf16.mxu0 %v2882
    %4247 = vmatpush1.bf16.msra.mxu0 %v2881
    %4248 = vmatprep.subr.bf16.mxu0 %v2890
    %4249 = vmatpush1.bf16.msra.mxu0 %v2889
    %4250 = vmatprep.mubr.bf16.mxu0 %v540
    %4251 = vmatmul.mubr.bf16.gmra.mrb[0].mxu0 %v539
    %v4252 = vpop.f32.mrb[0].mxu0
    %v4253 = vadd.f32 %v4210, %v4252
    %v4254 = vpop.f32.mrb[0].mxu0
    %v4255 = vadd.f32 %v4212, %v4254
    %v4256 = vpop.f32.mrb[0].mxu0
    %v4257 = vadd.f32 %v4214, %v4256
    %v4258 = vpop.f32.mrb[0].mxu0
    %v4259 = vadd.f32 %v4216, %v4258
    %4260 = vdwg.mxu0
    %4261 = vmatprep.subr.bf16.mxu0 %v2898
    %4262 = vmatpush1.bf16.msra.mxu0 %v2897
    %4263 = vmatprep.subr.bf16.mxu0 %v2906
    %4264 = vmatpush1.bf16.msra.mxu0 %v2905
    %4265 = vmatprep.subr.bf16.mxu0 %v2914
    %4266 = vmatpush1.bf16.msra.mxu0 %v2913
    %4267 = vmatprep.subr.bf16.mxu0 %v2922
    %4268 = vmatpush1.bf16.msra.mxu0 %v2921
    %4269 = vmatprep.subr.bf16.mxu0 %v2930
    %4270 = vmatpush1.bf16.msra.mxu0 %v2929
    %4271 = vmatprep.subr.bf16.mxu0 %v2938
    %4272 = vmatpush1.bf16.msra.mxu0 %v2937
    %4273 = vmatprep.subr.bf16.mxu0 %v2946
    %4274 = vmatpush1.bf16.msra.mxu0 %v2945
    %4275 = vmatprep.subr.bf16.mxu0 %v2954
    %4276 = vmatpush1.bf16.msra.mxu0 %v2953
    %4277 = vmatprep.subr.bf16.mxu0 %v2962
    %4278 = vmatpush1.bf16.msra.mxu0 %v2961
    %4279 = vmatprep.subr.bf16.mxu0 %v2970
    %4280 = vmatpush1.bf16.msra.mxu0 %v2969
    %4281 = vmatprep.subr.bf16.mxu0 %v2978
    %4282 = vmatpush1.bf16.msra.mxu0 %v2977
    %4283 = vmatprep.subr.bf16.mxu0 %v2986
    %4284 = vmatpush1.bf16.msra.mxu0 %v2985
    %4285 = vmatprep.subr.bf16.mxu0 %v2994
    %4286 = vmatpush1.bf16.msra.mxu0 %v2993
    %4287 = vmatprep.subr.bf16.mxu0 %v3002
    %4288 = vmatpush1.bf16.msra.mxu0 %v3001
    %4289 = vmatprep.subr.bf16.mxu0 %v3010
    %4290 = vmatpush1.bf16.msra.mxu0 %v3009
    %4291 = vmatprep.subr.bf16.mxu0 %v3018
    %4292 = vmatpush1.bf16.msra.mxu0 %v3017
    %4293 = vmatprep.mubr.bf16.mxu0 %v542
    %4294 = vmatmul.mubr.bf16.gmra.mrb[0].mxu0 %v541
    %v4295 = vpop.f32.mrb[0].mxu0
    %v4296 = vadd.f32 %v4253, %v4295
    %v4297 = vpop.f32.mrb[0].mxu0
    %v4298 = vadd.f32 %v4255, %v4297
    %v4299 = vpop.f32.mrb[0].mxu0
    %v4300 = vadd.f32 %v4257, %v4299
    %v4301 = vpop.f32.mrb[0].mxu0
    %v4302 = vadd.f32 %v4259, %v4301
    %4303 = vdwg.mxu0
    %4304 = vmatprep.subr.bf16.mxu0 %v3026
    %4305 = vmatpush1.bf16.msra.mxu0 %v3025
    %4306 = vmatprep.subr.bf16.mxu0 %v3034
    %4307 = vmatpush1.bf16.msra.mxu0 %v3033
    %4308 = vmatprep.subr.bf16.mxu0 %v3042
    %4309 = vmatpush1.bf16.msra.mxu0 %v3041
    %4310 = vmatprep.subr.bf16.mxu0 %v3050
    %4311 = vmatpush1.bf16.msra.mxu0 %v3049
    %4312 = vmatprep.subr.bf16.mxu0 %v3058
    %4313 = vmatpush1.bf16.msra.mxu0 %v3057
    %4314 = vmatprep.subr.bf16.mxu0 %v3066
    %4315 = vmatpush1.bf16.msra.mxu0 %v3065
    %4316 = vmatprep.subr.bf16.mxu0 %v3074
    %4317 = vmatpush1.bf16.msra.mxu0 %v3073
    %4318 = vmatprep.subr.bf16.mxu0 %v3082
    %4319 = vmatpush1.bf16.msra.mxu0 %v3081
    %4320 = vmatprep.subr.bf16.mxu0 %v3090
    %4321 = vmatpush1.bf16.msra.mxu0 %v3089
    %4322 = vmatprep.subr.bf16.mxu0 %v3098
    %4323 = vmatpush1.bf16.msra.mxu0 %v3097
    %4324 = vmatprep.subr.bf16.mxu0 %v3106
    %4325 = vmatpush1.bf16.msra.mxu0 %v3105
    %4326 = vmatprep.subr.bf16.mxu0 %v3114
    %4327 = vmatpush1.bf16.msra.mxu0 %v3113
    %4328 = vmatprep.subr.bf16.mxu0 %v3122
    %4329 = vmatpush1.bf16.msra.mxu0 %v3121
    %4330 = vmatprep.subr.bf16.mxu0 %v3130
    %4331 = vmatpush1.bf16.msra.mxu0 %v3129
    %4332 = vmatprep.subr.bf16.mxu0 %v3138
    %4333 = vmatpush1.bf16.msra.mxu0 %v3137
    %4334 = vmatprep.subr.bf16.mxu0 %v3146
    %4335 = vmatpush1.bf16.msra.mxu0 %v3145
    %4336 = vmatprep.mubr.bf16.mxu0 %v544
    %4337 = vmatmul.mubr.bf16.gmra.mrb[0].mxu0 %v543
    %v4338 = vpop.f32.mrb[0].mxu0
    %v4339 = vadd.f32 %v4296, %v4338
    %v4340 = vpop.f32.mrb[0].mxu0
    %v4341 = vadd.f32 %v4298, %v4340
    %v4342 = vpop.f32.mrb[0].mxu0
    %v4343 = vadd.f32 %v4300, %v4342
    %v4344 = vpop.f32.mrb[0].mxu0
    %v4345 = vadd.f32 %v4302, %v4344
    %4346 = vdwg.mxu0
    %v4347 = vmax.f32 %v3823, 0.0
    %v4348 = vmax.f32 %v3825, 0.0
    %v4349 = vmax.f32 %v3995, 0.0
    %v4350 = vmax.f32 %v3997, 0.0
    %v4351 = vmax.f32 %v4167, 0.0
    %v4352 = vmax.f32 %v4169, 0.0
    %v4353 = vmax.f32 %v4339, 0.0
    %v4354 = vmax.f32 %v4341, 0.0
    %v4355 = vmax.f32 %v3827, 0.0
    %v4356 = vmax.f32 %v3829, 0.0
    %v4357 = vmax.f32 %v3999, 0.0
    %v4358 = vmax.f32 %v4001, 0.0
    %v4359 = vmax.f32 %v4171, 0.0
    %v4360 = vmax.f32 %v4173, 0.0
    %v4361 = vmax.f32 %v4343, 0.0
    %v4362 = vmax.f32 %v4345, 0.0
    %v4363 = vpack.c.bf16 %v4355, %v4347
    %v4364 = vpack.c.bf16 %v4356, %v4348
    %v4365 = vpack.c.bf16 %v4357, %v4349
    %v4366 = vpack.c.bf16 %v4358, %v4350
    %v4367 = vpack.c.bf16 %v4359, %v4351
    %v4368 = vpack.c.bf16 %v4360, %v4352
    %v4369 = vpack.c.bf16 %v4361, %v4353
    %v4370 = vpack.c.bf16 %v4362, %v4354
    %v4371 = vld [vmem:[%s5] sm:$0xf]
    %v4372 = vld [vmem:[%s5 + $0x4] sm:$0xf]
    %v4373 = vld [vmem:[%s5 + $0x8] sm:$0xf]
    %v4374 = vld [vmem:[%s5 + $0xc] sm:$0xf]
    %v4375 = vld [vmem:[%s5 + $0x10] sm:$0xf]
    %v4376 = vld [vmem:[%s5 + $0x14] sm:$0xf]
    %v4377 = vld [vmem:[%s5 + $0x18] sm:$0xf]
    %v4378 = vld [vmem:[%s5 + $0x1c] sm:$0xf]
    %v4379 = vld [vmem:[%s5 + $0x20] sm:$0xf]
    %v4380 = vld [vmem:[%s5 + $0x24] sm:$0xf]
    %v4381 = vld [vmem:[%s5 + $0x28] sm:$0xf]
    %v4382 = vld [vmem:[%s5 + $0x2c] sm:$0xf]
    %v4383 = vld [vmem:[%s5 + $0x30] sm:$0xf]
    %v4384 = vld [vmem:[%s5 + $0x34] sm:$0xf]
    %v4385 = vld [vmem:[%s5 + $0x38] sm:$0xf]
    %v4386 = vld [vmem:[%s5 + $0x3c] sm:$0xf]
    %v4387 = vld [vmem:[%s5 + $0x40] sm:$0xf]
    %v4388 = vld [vmem:[%s5 + $0x44] sm:$0xf]
    %v4389 = vld [vmem:[%s5 + $0x48] sm:$0xf]
    %v4390 = vld [vmem:[%s5 + $0x4c] sm:$0xf]
    %v4391 = vld [vmem:[%s5 + $0x50] sm:$0xf]
    %v4392 = vld [vmem:[%s5 + $0x54] sm:$0xf]
    %v4393 = vld [vmem:[%s5 + $0x58] sm:$0xf]
    %v4394 = vld [vmem:[%s5 + $0x5c] sm:$0xf]
    %v4395 = vld [vmem:[%s5 + $0x60] sm:$0xf]
    %v4396 = vld [vmem:[%s5 + $0x64] sm:$0xf]
    %v4397 = vld [vmem:[%s5 + $0x68] sm:$0xf]
    %v4398 = vld [vmem:[%s5 + $0x6c] sm:$0xf]
    %v4399 = vld [vmem:[%s5 + $0x70] sm:$0xf]
    %v4400 = vld [vmem:[%s5 + $0x74] sm:$0xf]
    %v4401 = vld [vmem:[%s5 + $0x78] sm:$0xf]
    %v4402 = vld [vmem:[%s5 + $0x7c] sm:$0xf]
    %v4403 = vld [vmem:[%s5 + $0x80] sm:$0xf]
    %v4404 = vld [vmem:[%s5 + $0x84] sm:$0xf]
    %v4405 = vld [vmem:[%s5 + $0x88] sm:$0xf]
    %v4406 = vld [vmem:[%s5 + $0x8c] sm:$0xf]
    %v4407 = vld [vmem:[%s5 + $0x90] sm:$0xf]
    %v4408 = vld [vmem:[%s5 + $0x94] sm:$0xf]
    %v4409 = vld [vmem:[%s5 + $0x98] sm:$0xf]
    %v4410 = vld [vmem:[%s5 + $0x9c] sm:$0xf]
    %v4411 = vld [vmem:[%s5 + $0xa0] sm:$0xf]
    %v4412 = vld [vmem:[%s5 + $0xa4] sm:$0xf]
    %v4413 = vld [vmem:[%s5 + $0xa8] sm:$0xf]
    %v4414 = vld [vmem:[%s5 + $0xac] sm:$0xf]
    %v4415 = vld [vmem:[%s5 + $0xb0] sm:$0xf]
    %v4416 = vld [vmem:[%s5 + $0xb4] sm:$0xf]
    %v4417 = vld [vmem:[%s5 + $0xb8] sm:$0xf]
    %v4418 = vld [vmem:[%s5 + $0xbc] sm:$0xf]
    %v4419 = vld [vmem:[%s5 + $0xc0] sm:$0xf]
    %v4420 = vld [vmem:[%s5 + $0xc4] sm:$0xf]
    %v4421 = vld [vmem:[%s5 + $0xc8] sm:$0xf]
    %v4422 = vld [vmem:[%s5 + $0xcc] sm:$0xf]
    %v4423 = vld [vmem:[%s5 + $0xd0] sm:$0xf]
    %v4424 = vld [vmem:[%s5 + $0xd4] sm:$0xf]
    %v4425 = vld [vmem:[%s5 + $0xd8] sm:$0xf]
    %v4426 = vld [vmem:[%s5 + $0xdc] sm:$0xf]
    %v4427 = vld [vmem:[%s5 + $0xe0] sm:$0xf]
    %v4428 = vld [vmem:[%s5 + $0xe4] sm:$0xf]
    %v4429 = vld [vmem:[%s5 + $0xe8] sm:$0xf]
    %v4430 = vld [vmem:[%s5 + $0xec] sm:$0xf]
    %v4431 = vld [vmem:[%s5 + $0xf0] sm:$0xf]
    %v4432 = vld [vmem:[%s5 + $0xf4] sm:$0xf]
    %v4433 = vld [vmem:[%s5 + $0xf8] sm:$0xf]
    %v4434 = vld [vmem:[%s5 + $0xfc] sm:$0xf]
    %v4435 = vld [vmem:[%s5 + $0x100] sm:$0xf]
    %v4436 = vld [vmem:[%s5 + $0x104] sm:$0xf]
    %v4437 = vld [vmem:[%s5 + $0x108] sm:$0xf]
    %v4438 = vld [vmem:[%s5 + $0x10c] sm:$0xf]
    %v4439 = vld [vmem:[%s5 + $0x110] sm:$0xf]
    %v4440 = vld [vmem:[%s5 + $0x114] sm:$0xf]
    %v4441 = vld [vmem:[%s5 + $0x118] sm:$0xf]
    %v4442 = vld [vmem:[%s5 + $0x11c] sm:$0xf]
    %v4443 = vld [vmem:[%s5 + $0x120] sm:$0xf]
    %v4444 = vld [vmem:[%s5 + $0x124] sm:$0xf]
    %v4445 = vld [vmem:[%s5 + $0x128] sm:$0xf]
    %v4446 = vld [vmem:[%s5 + $0x12c] sm:$0xf]
    %v4447 = vld [vmem:[%s5 + $0x130] sm:$0xf]
    %v4448 = vld [vmem:[%s5 + $0x134] sm:$0xf]
    %v4449 = vld [vmem:[%s5 + $0x138] sm:$0xf]
    %v4450 = vld [vmem:[%s5 + $0x13c] sm:$0xf]
    %v4451 = vld [vmem:[%s5 + $0x140] sm:$0xf]
    %v4452 = vld [vmem:[%s5 + $0x144] sm:$0xf]
    %v4453 = vld [vmem:[%s5 + $0x148] sm:$0xf]
    %v4454 = vld [vmem:[%s5 + $0x14c] sm:$0xf]
    %v4455 = vld [vmem:[%s5 + $0x150] sm:$0xf]
    %v4456 = vld [vmem:[%s5 + $0x154] sm:$0xf]
    %v4457 = vld [vmem:[%s5 + $0x158] sm:$0xf]
    %v4458 = vld [vmem:[%s5 + $0x15c] sm:$0xf]
    %v4459 = vld [vmem:[%s5 + $0x160] sm:$0xf]
    %v4460 = vld [vmem:[%s5 + $0x164] sm:$0xf]
    %v4461 = vld [vmem:[%s5 + $0x168] sm:$0xf]
    %v4462 = vld [vmem:[%s5 + $0x16c] sm:$0xf]
    %v4463 = vld [vmem:[%s5 + $0x170] sm:$0xf]
    %v4464 = vld [vmem:[%s5 + $0x174] sm:$0xf]
    %v4465 = vld [vmem:[%s5 + $0x178] sm:$0xf]
    %v4466 = vld [vmem:[%s5 + $0x17c] sm:$0xf]
    %v4467 = vld [vmem:[%s5 + $0x180] sm:$0xf]
    %v4468 = vld [vmem:[%s5 + $0x184] sm:$0xf]
    %v4469 = vld [vmem:[%s5 + $0x188] sm:$0xf]
    %v4470 = vld [vmem:[%s5 + $0x18c] sm:$0xf]
    %v4471 = vld [vmem:[%s5 + $0x190] sm:$0xf]
    %v4472 = vld [vmem:[%s5 + $0x194] sm:$0xf]
    %v4473 = vld [vmem:[%s5 + $0x198] sm:$0xf]
    %v4474 = vld [vmem:[%s5 + $0x19c] sm:$0xf]
    %v4475 = vld [vmem:[%s5 + $0x1a0] sm:$0xf]
    %v4476 = vld [vmem:[%s5 + $0x1a4] sm:$0xf]
    %v4477 = vld [vmem:[%s5 + $0x1a8] sm:$0xf]
    %v4478 = vld [vmem:[%s5 + $0x1ac] sm:$0xf]
    %v4479 = vld [vmem:[%s5 + $0x1b0] sm:$0xf]
    %v4480 = vld [vmem:[%s5 + $0x1b4] sm:$0xf]
    %v4481 = vld [vmem:[%s5 + $0x1b8] sm:$0xf]
    %v4482 = vld [vmem:[%s5 + $0x1bc] sm:$0xf]
    %v4483 = vld [vmem:[%s5 + $0x1c0] sm:$0xf]
    %v4484 = vld [vmem:[%s5 + $0x1c4] sm:$0xf]
    %v4485 = vld [vmem:[%s5 + $0x1c8] sm:$0xf]
    %v4486 = vld [vmem:[%s5 + $0x1cc] sm:$0xf]
    %v4487 = vld [vmem:[%s5 + $0x1d0] sm:$0xf]
    %v4488 = vld [vmem:[%s5 + $0x1d4] sm:$0xf]
    %v4489 = vld [vmem:[%s5 + $0x1d8] sm:$0xf]
    %v4490 = vld [vmem:[%s5 + $0x1dc] sm:$0xf]
    %v4491 = vld [vmem:[%s5 + $0x1e0] sm:$0xf]
    %v4492 = vld [vmem:[%s5 + $0x1e4] sm:$0xf]
    %v4493 = vld [vmem:[%s5 + $0x1e8] sm:$0xf]
    %v4494 = vld [vmem:[%s5 + $0x1ec] sm:$0xf]
    %v4495 = vld [vmem:[%s5 + $0x1f0] sm:$0xf]
    %v4496 = vld [vmem:[%s5 + $0x1f4] sm:$0xf]
    %v4497 = vld [vmem:[%s5 + $0x1f8] sm:$0xf]
    %v4498 = vld [vmem:[%s5 + $0x1fc] sm:$0xf]
    %v4499 = vld [vmem:[#allocation11] sm:$0x1]
    %v4501 = vlaneseq
    %v4502 = vshrl.u32 %v4501, 7
    %v4503 = vsub.s32 0, %v4502
    %v4504 = vrot.slane %v4499, %v4503
    %v4634 = vunpack.c.l.b16 %v4371
    %v4635 = vunpack.c.l.b16 %v4372
    %v4636 = vunpack.c.l.b16 %v4373
    %v4637 = vunpack.c.l.b16 %v4374
    %v4638 = vunpack.c.l.b16 %v4375
    %v4639 = vunpack.c.l.b16 %v4376
    %v4640 = vunpack.c.l.b16 %v4377
    %v4641 = vunpack.c.l.b16 %v4378
    %v4642 = vunpack.c.l.b16 %v4379
    %v4643 = vunpack.c.l.b16 %v4380
    %v4644 = vunpack.c.l.b16 %v4381
    %v4645 = vunpack.c.l.b16 %v4382
    %v4646 = vunpack.c.l.b16 %v4383
    %v4647 = vunpack.c.l.b16 %v4384
    %v4648 = vunpack.c.l.b16 %v4385
    %v4649 = vunpack.c.l.b16 %v4386
    %v4650 = vunpack.c.l.b16 %v4387
    %v4651 = vunpack.c.l.b16 %v4388
    %v4652 = vunpack.c.l.b16 %v4389
    %v4653 = vunpack.c.l.b16 %v4390
    %v4654 = vunpack.c.l.b16 %v4391
    %v4655 = vunpack.c.l.b16 %v4392
    %v4656 = vunpack.c.l.b16 %v4393
    %v4657 = vunpack.c.l.b16 %v4394
    %v4658 = vunpack.c.l.b16 %v4395
    %v4659 = vunpack.c.l.b16 %v4396
    %v4660 = vunpack.c.l.b16 %v4397
    %v4661 = vunpack.c.l.b16 %v4398
    %v4662 = vunpack.c.l.b16 %v4399
    %v4663 = vunpack.c.l.b16 %v4400
    %v4664 = vunpack.c.l.b16 %v4401
    %v4665 = vunpack.c.l.b16 %v4402
    %v4666 = vunpack.c.l.b16 %v4403
    %v4667 = vunpack.c.l.b16 %v4404
    %v4668 = vunpack.c.l.b16 %v4405
    %v4669 = vunpack.c.l.b16 %v4406
    %v4670 = vunpack.c.l.b16 %v4407
    %v4671 = vunpack.c.l.b16 %v4408
    %v4672 = vunpack.c.l.b16 %v4409
    %v4673 = vunpack.c.l.b16 %v4410
    %v4674 = vunpack.c.l.b16 %v4411
    %v4675 = vunpack.c.l.b16 %v4412
    %v4676 = vunpack.c.l.b16 %v4413
    %v4677 = vunpack.c.l.b16 %v4414
    %v4678 = vunpack.c.l.b16 %v4415
    %v4679 = vunpack.c.l.b16 %v4416
    %v4680 = vunpack.c.l.b16 %v4417
    %v4681 = vunpack.c.l.b16 %v4418
    %v4682 = vunpack.c.l.b16 %v4419
    %v4683 = vunpack.c.l.b16 %v4420
    %v4684 = vunpack.c.l.b16 %v4421
    %v4685 = vunpack.c.l.b16 %v4422
    %v4686 = vunpack.c.l.b16 %v4423
    %v4687 = vunpack.c.l.b16 %v4424
    %v4688 = vunpack.c.l.b16 %v4425
    %v4689 = vunpack.c.l.b16 %v4426
    %v4690 = vunpack.c.l.b16 %v4427
    %v4691 = vunpack.c.l.b16 %v4428
    %v4692 = vunpack.c.l.b16 %v4429
    %v4693 = vunpack.c.l.b16 %v4430
    %v4694 = vunpack.c.l.b16 %v4431
    %v4695 = vunpack.c.l.b16 %v4432
    %v4696 = vunpack.c.l.b16 %v4433
    %v4697 = vunpack.c.l.b16 %v4434
    %v4698 = vunpack.c.l.b16 %v4435
    %v4699 = vunpack.c.l.b16 %v4436
    %v4700 = vunpack.c.l.b16 %v4437
    %v4701 = vunpack.c.l.b16 %v4438
    %v4702 = vunpack.c.l.b16 %v4439
    %v4703 = vunpack.c.l.b16 %v4440
    %v4704 = vunpack.c.l.b16 %v4441
    %v4705 = vunpack.c.l.b16 %v4442
    %v4706 = vunpack.c.l.b16 %v4443
    %v4707 = vunpack.c.l.b16 %v4444
    %v4708 = vunpack.c.l.b16 %v4445
    %v4709 = vunpack.c.l.b16 %v4446
    %v4710 = vunpack.c.l.b16 %v4447
    %v4711 = vunpack.c.l.b16 %v4448
    %v4712 = vunpack.c.l.b16 %v4449
    %v4713 = vunpack.c.l.b16 %v4450
    %v4714 = vunpack.c.l.b16 %v4451
    %v4715 = vunpack.c.l.b16 %v4452
    %v4716 = vunpack.c.l.b16 %v4453
    %v4717 = vunpack.c.l.b16 %v4454
    %v4718 = vunpack.c.l.b16 %v4455
    %v4719 = vunpack.c.l.b16 %v4456
    %v4720 = vunpack.c.l.b16 %v4457
    %v4721 = vunpack.c.l.b16 %v4458
    %v4722 = vunpack.c.l.b16 %v4459
    %v4723 = vunpack.c.l.b16 %v4460
    %v4724 = vunpack.c.l.b16 %v4461
    %v4725 = vunpack.c.l.b16 %v4462
    %v4726 = vunpack.c.l.b16 %v4463
    %v4727 = vunpack.c.l.b16 %v4464
    %v4728 = vunpack.c.l.b16 %v4465
    %v4729 = vunpack.c.l.b16 %v4466
    %v4730 = vunpack.c.l.b16 %v4467
    %v4731 = vunpack.c.l.b16 %v4468
    %v4732 = vunpack.c.l.b16 %v4469
    %v4733 = vunpack.c.l.b16 %v4470
    %v4734 = vunpack.c.l.b16 %v4471
    %v4735 = vunpack.c.l.b16 %v4472
    %v4736 = vunpack.c.l.b16 %v4473
    %v4737 = vunpack.c.l.b16 %v4474
    %v4738 = vunpack.c.l.b16 %v4475
    %v4739 = vunpack.c.l.b16 %v4476
    %v4740 = vunpack.c.l.b16 %v4477
    %v4741 = vunpack.c.l.b16 %v4478
    %v4742 = vunpack.c.l.b16 %v4479
    %v4743 = vunpack.c.l.b16 %v4480
    %v4744 = vunpack.c.l.b16 %v4481
    %v4745 = vunpack.c.l.b16 %v4482
    %v4746 = vunpack.c.l.b16 %v4483
    %v4747 = vunpack.c.l.b16 %v4484
    %v4748 = vunpack.c.l.b16 %v4485
    %v4749 = vunpack.c.l.b16 %v4486
    %v4750 = vunpack.c.l.b16 %v4487
    %v4751 = vunpack.c.l.b16 %v4488
    %v4752 = vunpack.c.l.b16 %v4489
    %v4753 = vunpack.c.l.b16 %v4490
    %v4754 = vunpack.c.l.b16 %v4491
    %v4755 = vunpack.c.l.b16 %v4492
    %v4756 = vunpack.c.l.b16 %v4493
    %v4757 = vunpack.c.l.b16 %v4494
    %v4758 = vunpack.c.l.b16 %v4495
    %v4759 = vunpack.c.l.b16 %v4496
    %v4760 = vunpack.c.l.b16 %v4497
    %v4761 = vunpack.c.l.b16 %v4498
    %v4762 = vpack.c.b16 %v4635, %v4634
    %v4763 = vpack.c.b16 %v4637, %v4636
    %v4764 = vpack.c.b16 %v4639, %v4638
    %v4765 = vpack.c.b16 %v4641, %v4640
    %v4766 = vpack.c.b16 %v4643, %v4642
    %v4767 = vpack.c.b16 %v4645, %v4644
    %v4768 = vpack.c.b16 %v4647, %v4646
    %v4769 = vpack.c.b16 %v4649, %v4648
    %v4770 = vpack.c.b16 %v4651, %v4650
    %v4771 = vpack.c.b16 %v4653, %v4652
    %v4772 = vpack.c.b16 %v4655, %v4654
    %v4773 = vpack.c.b16 %v4657, %v4656
    %v4774 = vpack.c.b16 %v4659, %v4658
    %v4775 = vpack.c.b16 %v4661, %v4660
    %v4776 = vpack.c.b16 %v4663, %v4662
    %v4777 = vpack.c.b16 %v4665, %v4664
    %v4778 = vpack.c.b16 %v4667, %v4666
    %v4779 = vpack.c.b16 %v4669, %v4668
    %v4780 = vpack.c.b16 %v4671, %v4670
    %v4781 = vpack.c.b16 %v4673, %v4672
    %v4782 = vpack.c.b16 %v4675, %v4674
    %v4783 = vpack.c.b16 %v4677, %v4676
    %v4784 = vpack.c.b16 %v4679, %v4678
    %v4785 = vpack.c.b16 %v4681, %v4680
    %v4786 = vpack.c.b16 %v4683, %v4682
    %v4787 = vpack.c.b16 %v4685, %v4684
    %v4788 = vpack.c.b16 %v4687, %v4686
    %v4789 = vpack.c.b16 %v4689, %v4688
    %v4790 = vpack.c.b16 %v4691, %v4690
    %v4791 = vpack.c.b16 %v4693, %v4692
    %v4792 = vpack.c.b16 %v4695, %v4694
    %v4793 = vpack.c.b16 %v4697, %v4696
    %v4794 = vpack.c.b16 %v4699, %v4698
    %v4795 = vpack.c.b16 %v4701, %v4700
    %v4796 = vpack.c.b16 %v4703, %v4702
    %v4797 = vpack.c.b16 %v4705, %v4704
    %v4798 = vpack.c.b16 %v4707, %v4706
    %v4799 = vpack.c.b16 %v4709, %v4708
    %v4800 = vpack.c.b16 %v4711, %v4710
    %v4801 = vpack.c.b16 %v4713, %v4712
    %v4802 = vpack.c.b16 %v4715, %v4714
    %v4803 = vpack.c.b16 %v4717, %v4716
    %v4804 = vpack.c.b16 %v4719, %v4718
    %v4805 = vpack.c.b16 %v4721, %v4720
    %v4806 = vpack.c.b16 %v4723, %v4722
    %v4807 = vpack.c.b16 %v4725, %v4724
    %v4808 = vpack.c.b16 %v4727, %v4726
    %v4809 = vpack.c.b16 %v4729, %v4728
    %v4810 = vpack.c.b16 %v4731, %v4730
    %v4811 = vpack.c.b16 %v4733, %v4732
    %v4812 = vpack.c.b16 %v4735, %v4734
    %v4813 = vpack.c.b16 %v4737, %v4736
    %v4814 = vpack.c.b16 %v4739, %v4738
    %v4815 = vpack.c.b16 %v4741, %v4740
    %v4816 = vpack.c.b16 %v4743, %v4742
    %v4817 = vpack.c.b16 %v4745, %v4744
    %v4818 = vpack.c.b16 %v4747, %v4746
    %v4819 = vpack.c.b16 %v4749, %v4748
    %v4820 = vpack.c.b16 %v4751, %v4750
    %v4821 = vpack.c.b16 %v4753, %v4752
    %v4822 = vpack.c.b16 %v4755, %v4754
    %v4823 = vpack.c.b16 %v4757, %v4756
    %v4824 = vpack.c.b16 %v4759, %v4758
    %v4825 = vpack.c.b16 %v4761, %v4760
    %4890 = vmatprep.subr.bf16.mxu0 0
    %4891 = vmatpush1.bf16.msra.mxu0 %v4762
    %4892 = vmatprep.subr.bf16.mxu0 0
    %4893 = vmatpush1.bf16.msra.mxu0 %v4763
    %4894 = vmatprep.subr.bf16.mxu0 0
    %4895 = vmatpush1.bf16.msra.mxu0 %v4764
    %4896 = vmatprep.subr.bf16.mxu0 0
    %4897 = vmatpush1.bf16.msra.mxu0 %v4765
    %4898 = vmatprep.subr.bf16.mxu0 0
    %4899 = vmatpush1.bf16.msra.mxu0 %v4766
    %4900 = vmatprep.subr.bf16.mxu0 0
    %4901 = vmatpush1.bf16.msra.mxu0 %v4767
    %4902 = vmatprep.subr.bf16.mxu0 0
    %4903 = vmatpush1.bf16.msra.mxu0 %v4768
    %4904 = vmatprep.subr.bf16.mxu0 0
    %4905 = vmatpush1.bf16.msra.mxu0 %v4769
    %4906 = vmatprep.subr.bf16.mxu0 0
    %4907 = vmatpush1.bf16.msra.mxu0 %v4770
    %4908 = vmatprep.subr.bf16.mxu0 0
    %4909 = vmatpush1.bf16.msra.mxu0 %v4771
    %4910 = vmatprep.subr.bf16.mxu0 0
    %4911 = vmatpush1.bf16.msra.mxu0 %v4772
    %4912 = vmatprep.subr.bf16.mxu0 0
    %4913 = vmatpush1.bf16.msra.mxu0 %v4773
    %4914 = vmatprep.subr.bf16.mxu0 0
    %4915 = vmatpush1.bf16.msra.mxu0 %v4774
    %4916 = vmatprep.subr.bf16.mxu0 0
    %4917 = vmatpush1.bf16.msra.mxu0 %v4775
    %4918 = vmatprep.subr.bf16.mxu0 0
    %4919 = vmatpush1.bf16.msra.mxu0 %v4776
    %4920 = vmatprep.subr.bf16.mxu0 0
    %4921 = vmatpush1.bf16.msra.mxu0 %v4777
    %4922 = vmatprep.mubr.bf16.mxu0 %v4364
    %4923 = vmatmul.mubr.bf16.gmra.mrb[0].mxu0 %v4363
    %v4924 = vpop.f32.mrb[0].mxu0
    %v4925 = vadd.f32 %v4504, %v4924
    %v4926 = vpop.f32.mrb[0].mxu0
    %v4927 = vpop.f32.mrb[0].mxu0
    %v4928 = vadd.f32 %v4504, %v4927
    %v4929 = vpop.f32.mrb[0].mxu0
    %4930 = vdwg.mxu0
    %4931 = vmatprep.subr.bf16.mxu0 0
    %4932 = vmatpush1.bf16.msra.mxu0 %v4778
    %4933 = vmatprep.subr.bf16.mxu0 0
    %4934 = vmatpush1.bf16.msra.mxu0 %v4779
    %4935 = vmatprep.subr.bf16.mxu0 0
    %4936 = vmatpush1.bf16.msra.mxu0 %v4780
    %4937 = vmatprep.subr.bf16.mxu0 0
    %4938 = vmatpush1.bf16.msra.mxu0 %v4781
    %4939 = vmatprep.subr.bf16.mxu0 0
    %4940 = vmatpush1.bf16.msra.mxu0 %v4782
    %4941 = vmatprep.subr.bf16.mxu0 0
    %4942 = vmatpush1.bf16.msra.mxu0 %v4783
    %4943 = vmatprep.subr.bf16.mxu0 0
    %4944 = vmatpush1.bf16.msra.mxu0 %v4784
    %4945 = vmatprep.subr.bf16.mxu0 0
    %4946 = vmatpush1.bf16.msra.mxu0 %v4785
    %4947 = vmatprep.subr.bf16.mxu0 0
    %4948 = vmatpush1.bf16.msra.mxu0 %v4786
    %4949 = vmatprep.subr.bf16.mxu0 0
    %4950 = vmatpush1.bf16.msra.mxu0 %v4787
    %4951 = vmatprep.subr.bf16.mxu0 0
    %4952 = vmatpush1.bf16.msra.mxu0 %v4788
    %4953 = vmatprep.subr.bf16.mxu0 0
    %4954 = vmatpush1.bf16.msra.mxu0 %v4789
    %4955 = vmatprep.subr.bf16.mxu0 0
    %4956 = vmatpush1.bf16.msra.mxu0 %v4790
    %4957 = vmatprep.subr.bf16.mxu0 0
    %4958 = vmatpush1.bf16.msra.mxu0 %v4791
    %4959 = vmatprep.subr.bf16.mxu0 0
    %4960 = vmatpush1.bf16.msra.mxu0 %v4792
    %4961 = vmatprep.subr.bf16.mxu0 0
    %4962 = vmatpush1.bf16.msra.mxu0 %v4793
    %4963 = vmatprep.mubr.bf16.mxu0 %v4366
    %4964 = vmatmul.mubr.bf16.gmra.mrb[0].mxu0 %v4365
    %v4965 = vpop.f32.mrb[0].mxu0
    %v4966 = vadd.f32 %v4925, %v4965
    %v4967 = vpop.f32.mrb[0].mxu0
    %v4968 = vpop.f32.mrb[0].mxu0
    %v4969 = vadd.f32 %v4928, %v4968
    %v4970 = vpop.f32.mrb[0].mxu0
    %4971 = vdwg.mxu0
    %4972 = vmatprep.subr.bf16.mxu0 0
    %4973 = vmatpush1.bf16.msra.mxu0 %v4794
    %4974 = vmatprep.subr.bf16.mxu0 0
    %4975 = vmatpush1.bf16.msra.mxu0 %v4795
    %4976 = vmatprep.subr.bf16.mxu0 0
    %4977 = vmatpush1.bf16.msra.mxu0 %v4796
    %4978 = vmatprep.subr.bf16.mxu0 0
    %4979 = vmatpush1.bf16.msra.mxu0 %v4797
    %4980 = vmatprep.subr.bf16.mxu0 0
    %4981 = vmatpush1.bf16.msra.mxu0 %v4798
    %4982 = vmatprep.subr.bf16.mxu0 0
    %4983 = vmatpush1.bf16.msra.mxu0 %v4799
    %4984 = vmatprep.subr.bf16.mxu0 0
    %4985 = vmatpush1.bf16.msra.mxu0 %v4800
    %4986 = vmatprep.subr.bf16.mxu0 0
    %4987 = vmatpush1.bf16.msra.mxu0 %v4801
    %4988 = vmatprep.subr.bf16.mxu0 0
    %4989 = vmatpush1.bf16.msra.mxu0 %v4802
    %4990 = vmatprep.subr.bf16.mxu0 0
    %4991 = vmatpush1.bf16.msra.mxu0 %v4803
    %4992 = vmatprep.subr.bf16.mxu0 0
    %4993 = vmatpush1.bf16.msra.mxu0 %v4804
    %4994 = vmatprep.subr.bf16.mxu0 0
    %4995 = vmatpush1.bf16.msra.mxu0 %v4805
    %4996 = vmatprep.subr.bf16.mxu0 0
    %4997 = vmatpush1.bf16.msra.mxu0 %v4806
    %4998 = vmatprep.subr.bf16.mxu0 0
    %4999 = vmatpush1.bf16.msra.mxu0 %v4807
    %5000 = vmatprep.subr.bf16.mxu0 0
    %5001 = vmatpush1.bf16.msra.mxu0 %v4808
    %5002 = vmatprep.subr.bf16.mxu0 0
    %5003 = vmatpush1.bf16.msra.mxu0 %v4809
    %5004 = vmatprep.mubr.bf16.mxu0 %v4368
    %5005 = vmatmul.mubr.bf16.gmra.mrb[0].mxu0 %v4367
    %v5006 = vpop.f32.mrb[0].mxu0
    %v5007 = vadd.f32 %v4966, %v5006
    %v5008 = vpop.f32.mrb[0].mxu0
    %v5009 = vpop.f32.mrb[0].mxu0
    %v5010 = vadd.f32 %v4969, %v5009
    %v5011 = vpop.f32.mrb[0].mxu0
    %5012 = vdwg.mxu0
    %5013 = vmatprep.subr.bf16.mxu0 0
    %5014 = vmatpush1.bf16.msra.mxu0 %v4810
    %5015 = vmatprep.subr.bf16.mxu0 0
    %5016 = vmatpush1.bf16.msra.mxu0 %v4811
    %5017 = vmatprep.subr.bf16.mxu0 0
    %5018 = vmatpush1.bf16.msra.mxu0 %v4812
    %5019 = vmatprep.subr.bf16.mxu0 0
    %5020 = vmatpush1.bf16.msra.mxu0 %v4813
    %5021 = vmatprep.subr.bf16.mxu0 0
    %5022 = vmatpush1.bf16.msra.mxu0 %v4814
    %5023 = vmatprep.subr.bf16.mxu0 0
    %5024 = vmatpush1.bf16.msra.mxu0 %v4815
    %5025 = vmatprep.subr.bf16.mxu0 0
    %5026 = vmatpush1.bf16.msra.mxu0 %v4816
    %5027 = vmatprep.subr.bf16.mxu0 0
    %5028 = vmatpush1.bf16.msra.mxu0 %v4817
    %5029 = vmatprep.subr.bf16.mxu0 0
    %5030 = vmatpush1.bf16.msra.mxu0 %v4818
    %5031 = vmatprep.subr.bf16.mxu0 0
    %5032 = vmatpush1.bf16.msra.mxu0 %v4819
    %5033 = vmatprep.subr.bf16.mxu0 0
    %5034 = vmatpush1.bf16.msra.mxu0 %v4820
    %5035 = vmatprep.subr.bf16.mxu0 0
    %5036 = vmatpush1.bf16.msra.mxu0 %v4821
    %5037 = vmatprep.subr.bf16.mxu0 0
    %5038 = vmatpush1.bf16.msra.mxu0 %v4822
    %5039 = vmatprep.subr.bf16.mxu0 0
    %5040 = vmatpush1.bf16.msra.mxu0 %v4823
    %5041 = vmatprep.subr.bf16.mxu0 0
    %5042 = vmatpush1.bf16.msra.mxu0 %v4824
    %5043 = vmatprep.subr.bf16.mxu0 0
    %5044 = vmatpush1.bf16.msra.mxu0 %v4825
    %5045 = vmatprep.mubr.bf16.mxu0 %v4370
    %5046 = vmatmul.mubr.bf16.gmra.mrb[0].mxu0 %v4369
    %v5047 = vpop.f32.mrb[0].mxu0
    %v5048 = vadd.f32 %v5007, %v5047
    %v5049 = vpop.f32.mrb[0].mxu0
    %v5050 = vpop.f32.mrb[0].mxu0
    %v5051 = vadd.f32 %v5010, %v5050
    %v5052 = vpop.f32.mrb[0].mxu0
    %5053 = vdwg.mxu0
    %vm5054 = vcmask 277504
    %5055 = vst.msk [vmem:[#allocation13] sm:$0xff] %vm5054, %v5048
    %5056 = vst.msk [vmem:[#allocation13 + $0x8] sm:$0xff] %vm5054, %v5051
    // Predicated region
    $region54: #{tpu_custom_call.1} parent=1 // pred_check
      _
    $region55: #{tpu_custom_call.1} parent=1 // pred_check_branch
      %5058 = sbr.rel (0) target = $region57
    $region56: #{tpu_custom_call.1} parent=1 // pred_region
      %s5060 = ssub.s32 256, 256
      %5061 = vsyncadd [#allocation4], %s5060
      %s5062 = sshll.u32 [#allocation13], 4
      %s5063 = int_to_ptr.vmem [resolvable:$true] %s5062
      %5068 = dma.vmem_to_hbm [thread:$0]  %s5063, 256, %s7, [#allocation4], 128, 128, 8
    $region57: #{tpu_custom_call.1} parent=1 // pred_fallthru
      _
    // Predicated region
    $region58: #{tpu_custom_call.1} parent=1 // pred_check
      _
    $region59: #{tpu_custom_call.1} parent=1 // pred_check_branch
      %5070 = sbr.rel (0) target = $region61
    $region60: #{tpu_custom_call.1} parent=1 // pred_region
      %5071 = dma.done [#allocation4], 256
    $region61: #{tpu_custom_call.1} parent=1 // pred_fallthru
      _
    %5072 = vsyncpa [#allocation3], 1
    %5073 = vsyncpa [#allocation6], 1
    %5074 = vsyncpa [#allocation9], 1
    %5075 = vsyncpa [#allocation12], 1
    %5076 = vsyncpa [#allocation4], 1

</llo_original>
